<compile_context>
chip_gen: v7x
topology: tpu7x:2x2x1
jax: 0.10.0
libtpu: 0.0.40
codegen_flags: <defaults>
</compile_context>

<pallas_src>
import jax
import jax.numpy as jnp
from jax.experimental import pallas as pl
from jax.experimental.pallas import tpu as pltpu

# ---------------- config (small shapes consistent with the module) ----------------
HIDDEN_SIZE = 32            # nn.LSTM hidden_size
NUM_LAYERS = 2              # nn.LSTM num_layers
RESNET_OUT = 128            # synthetic CNN feature dim (lane-dense; real resnet18 = 512)
CONV_K = 3
CONV_CIN = 3                # RGB frames
KK_PAD = 32                 # im2col depth padded 27 -> 32 (sublane multiple)

VMEM_SPEC = pl.BlockSpec(memory_space=pltpu.MemorySpace.VMEM)


# =============================== fused Pallas kernel ===============================

def _make_fused_kernel(S, B, P):
    """Build the fused forward kernel for seq length S, batch B, P = H*W pixels."""
    Hh = HIDDEN_SIZE
    F = S * B  # number of frames, laid out time-major: frame index f = t*B + b

    def kernel(patches_ref, conv_w_ref, conv_b_ref,
               wih0_ref, whh0_ref, b0_ref,
               wih1_ref, whh1_ref, b1_ref,
               fc1w_ref, fc1b_ref, fc2w_ref, fc2b_ref, fc3w_ref, fc3b_ref,
               out_ref, feat_scr):
        # ---- frozen CNN stand-in: conv3x3 (im2col matmul, bf16 in / f32 acc) + ReLU ----
        acts = jnp.dot(patches_ref[...], conv_w_ref[...],
                       preferred_element_type=jnp.float32)            # (F*P, 128)
        acts = jnp.maximum(acts + conv_b_ref[...], 0.0)

        # ---- global average pool per frame (sublane reduce; no pool matmul) ----
        for f in range(F):                                             # static unroll, F small
            feat_scr[f:f + 1, :] = jnp.mean(acts[f * P:(f + 1) * P, :],
                                            axis=0, keepdims=True)
        feats = feat_scr[...]                                          # (F, 128), time-major

        # ---- 2-layer LSTM (PyTorch gate order i,f,g,o), both layers fused per step ----
        # Hoist all weight/bias reads out of the time loop (no re-loads / re-broadcasts).
        wih0 = wih0_ref[...]; whh0 = whh0_ref[...]; b0 = b0_ref[...]
        wih1 = wih1_ref[...]; whh1 = whh1_ref[...]; b1 = b1_ref[...]

        # Layer-0 input projections for ALL timesteps in one MXU matmul (recurrence-free).
        xg0 = jnp.dot(feats, wih0, preferred_element_type=jnp.float32) + b0   # (F, 4H)

        zeros = jnp.zeros((B, Hh), jnp.float32)
        h0, c0, h1, c1 = zeros, zeros, zeros, zeros

        def lstm_cell(x_gates, h, c, whh):
            gates = x_gates + jnp.dot(h, whh, preferred_element_type=jnp.float32)  # (B, 4H)
            sg = jax.nn.sigmoid(gates)          # full 128-lane EUP pass
            th = jnp.tanh(gates)                # full 128-lane EUP pass
            i_g = sg[:, 0 * Hh:1 * Hh]
            f_g = sg[:, 1 * Hh:2 * Hh]
            g_g = th[:, 2 * Hh:3 * Hh]
            o_g = sg[:, 3 * Hh:4 * Hh]
            c_new = f_g * c + i_g * g_g
            h_new = o_g * jnp.tanh(c_new)
            return h_new, c_new

        for t in range(S):                      # fully unrolled: S is small and static
            h0, c0 = lstm_cell(xg0[t * B:(t + 1) * B, :], h0, c0, whh0)
            h1, c1 = lstm_cell(jnp.dot(h0, wih1, preferred_element_type=jnp.float32) + b1,
                               h1, c1, whh1)

        # ---- MLP head on the last timestep only (== fc3(relu(fc2(relu(fc1(out)))))[:, -1]) ----
        y = jnp.maximum(jnp.dot(h1, fc1w_ref[...], preferred_element_type=jnp.float32)
                        + fc1b_ref[...], 0.0)
        y = jnp.maximum(jnp.dot(y, fc2w_ref[...], preferred_element_type=jnp.float32)
                        + fc2b_ref[...], 0.0)
        out_ref[...] = (jnp.dot(y, fc3w_ref[...], preferred_element_type=jnp.float32)
                        + fc3b_ref[...])

    return kernel


# =============================== wrapper ===========================================

def visual_odometry_forward(x, params):
    """x: (B, S, C, H, W) float32 (PyTorch NCHW per frame).  Returns (B, 7)."""
    B, S, C, H, W = x.shape
    P = H * W
    F = S * B

    # im2col glue (pure XLA data movement on the *input* only): time-major NHWC frames,
    # "same" padding, stride 1, im2col depth zero-padded 27 -> 32, bf16 for the MXU.
    frames = jnp.transpose(x, (1, 0, 3, 4, 2)).reshape(F, H, W, C)      # frame f = t*B + b
    xp = jnp.pad(frames, ((0, 0), (1, 1), (1, 1), (0, 0)))
    cols = [xp[:, dy:dy + H, dx:dx + W, :] for dy in range(CONV_K) for dx in range(CONV_K)]
    patches = jnp.stack(cols, axis=3).reshape(F * P, CONV_K * CONV_K * C)
    patches = jnp.pad(patches, ((0, 0), (0, KK_PAD - CONV_K * CONV_K * C)))
    patches = patches.astype(jnp.bfloat16)

    kernel = _make_fused_kernel(S, B, P)

    return pl.pallas_call(
        kernel,
        out_shape=jax.ShapeDtypeStruct((B, 7), jnp.float32),
        in_specs=[VMEM_SPEC] * 15,
        out_specs=VMEM_SPEC,
        scratch_shapes=[pltpu.VMEM((F, RESNET_OUT), jnp.float32)],      # pooled frame features
    )(patches,
      params["conv_w"], params["conv_b"],
      params["lstm_wih"][0], params["lstm_whh"][0], params["lstm_b"][0],
      params["lstm_wih"][1], params["lstm_whh"][1], params["lstm_b"][1],
      params["fc1_w"], params["fc1_b"],
      params["fc2_w"], params["fc2_b"],
      params["fc3_w"], params["fc3_b"])


# =============================== parameter init ====================================

def init_params(key):
    ks = jax.random.split(key, 12)

    def dense(k, fan_in, shape):
        return jax.random.normal(k, shape, jnp.float32) / jnp.sqrt(jnp.float32(fan_in))

    params = {}
    kk = CONV_K * CONV_K * CONV_CIN                                   # 27 real im2col depth
    conv_w = dense(ks[0], kk, (kk, RESNET_OUT))
    conv_w = jnp.pad(conv_w, ((0, KK_PAD - kk), (0, 0)))              # zero-pad depth 27 -> 32
    params["conv_w"] = conv_w.astype(jnp.bfloat16)                    # bf16 MXU inputs, f32 acc
    params["conv_b"] = jnp.zeros((1, RESNET_OUT), jnp.float32)

    wih, whh, bs = [], [], []
    din = RESNET_OUT
    for l in range(NUM_LAYERS):
        wih.append(dense(ks[1 + 3 * l], din, (din, 4 * HIDDEN_SIZE)))
        whh.append(dense(ks[2 + 3 * l], HIDDEN_SIZE, (HIDDEN_SIZE, 4 * HIDDEN_SIZE)))
        bs.append(dense(ks[3 + 3 * l], HIDDEN_SIZE, (1, 4 * HIDDEN_SIZE)))  # b_ih + b_hh combined
        din = HIDDEN_SIZE
    params["lstm_wih"], params["lstm_whh"], params["lstm_b"] = wih, whh, bs

    Hd = HIDDEN_SIZE  # unidirectional -> lstm_output_size == hidden_size
    params["fc1_w"] = dense(ks[7], Hd, (Hd, Hd // 2))
    params["fc1_b"] = jnp.zeros((1, Hd // 2), jnp.float32)
    params["fc2_w"] = dense(ks[8], Hd // 2, (Hd // 2, Hd // 4))
    params["fc2_b"] = jnp.zeros((1, Hd // 4), jnp.float32)
    params["fc3_w"] = dense(ks[9], Hd // 4, (Hd // 4, 7))
    params["fc3_b"] = jnp.zeros((1, 7), jnp.float32)
    return params


# =============================== main ==============================================

if __name__ == "__main__":
    key = jax.random.PRNGKey(0)
    kx, kp = jax.random.split(key)

    B, S, C, H, W = 2, 4, CONV_CIN, 16, 16
    x = jax.random.normal(kx, (B, S, C, H, W), jnp.float32)
    params = init_params(kp)

    out = jax.jit(visual_odometry_forward)(x, params)
    out = jax.block_until_ready(out)
    assert out.shape == (B, 7) and out.dtype == jnp.float32
    assert bool(jnp.all(jnp.isfinite(out)))
    print("KERNEL_OK")
</pallas_src>

<mosaic_0001>
module attributes {stable_mosaic.version = 11 : i64} {
  func.func @kernel(%arg0: memref<2048x32xbf16, #tpu.memory_space<vmem>>, %arg1: memref<32x128xbf16, #tpu.memory_space<vmem>>, %arg2: memref<1x128xf32, #tpu.memory_space<vmem>>, %arg3: memref<128x128xf32, #tpu.memory_space<vmem>>, %arg4: memref<32x128xf32, #tpu.memory_space<vmem>>, %arg5: memref<1x128xf32, #tpu.memory_space<vmem>>, %arg6: memref<32x128xf32, #tpu.memory_space<vmem>>, %arg7: memref<32x128xf32, #tpu.memory_space<vmem>>, %arg8: memref<1x128xf32, #tpu.memory_space<vmem>>, %arg9: memref<32x16xf32, #tpu.memory_space<vmem>>, %arg10: memref<1x16xf32, #tpu.memory_space<vmem>>, %arg11: memref<16x8xf32, #tpu.memory_space<vmem>>, %arg12: memref<1x8xf32, #tpu.memory_space<vmem>>, %arg13: memref<8x7xf32, #tpu.memory_space<vmem>>, %arg14: memref<1x7xf32, #tpu.memory_space<vmem>>, %arg15: memref<2x7xf32, #tpu.memory_space<vmem>>, %arg16: memref<8x128xf32, #tpu.memory_space<vmem>>) attributes {dimension_semantics = [], scalar_prefetch = 0 : i64, scratch_operands = 1 : i64, tpu.core_type = #tpu.core_type<tc>} {
    %c0 = arith.constant 0 : index
    %c0_0 = arith.constant 0 : index
    %0 = vector.load %arg0[%c0, %c0_0] : memref<2048x32xbf16, #tpu.memory_space<vmem>>, vector<2048x32xbf16>
    %c0_1 = arith.constant 0 : index
    %c0_2 = arith.constant 0 : index
    %1 = vector.load %arg1[%c0_1, %c0_2] : memref<32x128xbf16, #tpu.memory_space<vmem>>, vector<32x128xbf16>
    %cst = arith.constant dense<0.000000e+00> : vector<2048x128xf32>
    %2 = tpu.matmul %0, %1, %cst {dimension_numbers = #tpu.dot_dimension_numbers<[1], [0], [0], [1], [0, 0, 1, 1], [], []>} : vector<2048x32xbf16>, vector<32x128xbf16>, vector<2048x128xf32> -> vector<2048x128xf32>
    %c0_3 = arith.constant 0 : index
    %c0_4 = arith.constant 0 : index
    %3 = vector.load %arg2[%c0_3, %c0_4] : memref<1x128xf32, #tpu.memory_space<vmem>>, vector<1x128xf32>
    %4 = vector.broadcast %3 : vector<1x128xf32> to vector<2048x128xf32>
    %5 = arith.addf %2, %4 : vector<2048x128xf32>
    %cst_5 = arith.constant 0.000000e+00 : f32
    %6 = vector.broadcast %cst_5 : f32 to vector<2048x128xf32>
    %7 = arith.maximumf %5, %6 : vector<2048x128xf32>
    %8 = vector.extract_strided_slice %7 {offsets = [0, 0], sizes = [256, 128], strides = [1, 1]} : vector<2048x128xf32> to vector<256x128xf32>
    %cst_6 = arith.constant dense<0.000000e+00> : vector<128xf32>
    %9 = vector.multi_reduction <add>, %8, %cst_6 [0] : vector<256x128xf32> to vector<128xf32>
    %10 = vector.shape_cast %9 : vector<128xf32> to vector<1x128xf32>
    %cst_7 = arith.constant 2.560000e+02 : f32
    %11 = vector.broadcast %cst_7 : f32 to vector<1x128xf32>
    %12 = arith.divf %10, %11 : vector<1x128xf32>
    %c0_8 = arith.constant 0 : index
    %c0_9 = arith.constant 0 : index
    %13 = vector.load %arg16[%c0_8, %c0_9] : memref<8x128xf32, #tpu.memory_space<vmem>>, vector<1x128xf32>
    tpu.vector_store %arg16[%c0_8, %c0_9], %12 {strides = array<i32>} : memref<8x128xf32, #tpu.memory_space<vmem>>, vector<1x128xf32>,
    %14 = vector.extract_strided_slice %7 {offsets = [256, 0], sizes = [256, 128], strides = [1, 1]} : vector<2048x128xf32> to vector<256x128xf32>
    %cst_10 = arith.constant dense<0.000000e+00> : vector<128xf32>
    %15 = vector.multi_reduction <add>, %14, %cst_10 [0] : vector<256x128xf32> to vector<128xf32>
    %16 = vector.shape_cast %15 : vector<128xf32> to vector<1x128xf32>
    %cst_11 = arith.constant 2.560000e+02 : f32
    %17 = vector.broadcast %cst_11 : f32 to vector<1x128xf32>
    %18 = arith.divf %16, %17 : vector<1x128xf32>
    %c1 = arith.constant 1 : index
    %c0_12 = arith.constant 0 : index
    %19 = vector.load %arg16[%c1, %c0_12] : memref<8x128xf32, #tpu.memory_space<vmem>>, vector<1x128xf32>
    tpu.vector_store %arg16[%c1, %c0_12], %18 {strides = array<i32>} : memref<8x128xf32, #tpu.memory_space<vmem>>, vector<1x128xf32>,
    %20 = vector.extract_strided_slice %7 {offsets = [512, 0], sizes = [256, 128], strides = [1, 1]} : vector<2048x128xf32> to vector<256x128xf32>
    %cst_13 = arith.constant dense<0.000000e+00> : vector<128xf32>
    %21 = vector.multi_reduction <add>, %20, %cst_13 [0] : vector<256x128xf32> to vector<128xf32>
    %22 = vector.shape_cast %21 : vector<128xf32> to vector<1x128xf32>
    %cst_14 = arith.constant 2.560000e+02 : f32
    %23 = vector.broadcast %cst_14 : f32 to vector<1x128xf32>
    %24 = arith.divf %22, %23 : vector<1x128xf32>
    %c2 = arith.constant 2 : index
    %c0_15 = arith.constant 0 : index
    %25 = vector.load %arg16[%c2, %c0_15] : memref<8x128xf32, #tpu.memory_space<vmem>>, vector<1x128xf32>
    tpu.vector_store %arg16[%c2, %c0_15], %24 {strides = array<i32>} : memref<8x128xf32, #tpu.memory_space<vmem>>, vector<1x128xf32>,
    %26 = vector.extract_strided_slice %7 {offsets = [768, 0], sizes = [256, 128], strides = [1, 1]} : vector<2048x128xf32> to vector<256x128xf32>
    %cst_16 = arith.constant dense<0.000000e+00> : vector<128xf32>
    %27 = vector.multi_reduction <add>, %26, %cst_16 [0] : vector<256x128xf32> to vector<128xf32>
    %28 = vector.shape_cast %27 : vector<128xf32> to vector<1x128xf32>
    %cst_17 = arith.constant 2.560000e+02 : f32
    %29 = vector.broadcast %cst_17 : f32 to vector<1x128xf32>
    %30 = arith.divf %28, %29 : vector<1x128xf32>
    %c3 = arith.constant 3 : index
    %c0_18 = arith.constant 0 : index
    %31 = vector.load %arg16[%c3, %c0_18] : memref<8x128xf32, #tpu.memory_space<vmem>>, vector<1x128xf32>
    tpu.vector_store %arg16[%c3, %c0_18], %30 {strides = array<i32>} : memref<8x128xf32, #tpu.memory_space<vmem>>, vector<1x128xf32>,
    %32 = vector.extract_strided_slice %7 {offsets = [1024, 0], sizes = [256, 128], strides = [1, 1]} : vector<2048x128xf32> to vector<256x128xf32>
    %cst_19 = arith.constant dense<0.000000e+00> : vector<128xf32>
    %33 = vector.multi_reduction <add>, %32, %cst_19 [0] : vector<256x128xf32> to vector<128xf32>
    %34 = vector.shape_cast %33 : vector<128xf32> to vector<1x128xf32>
    %cst_20 = arith.constant 2.560000e+02 : f32
    %35 = vector.broadcast %cst_20 : f32 to vector<1x128xf32>
    %36 = arith.divf %34, %35 : vector<1x128xf32>
    %c4 = arith.constant 4 : index
    %c0_21 = arith.constant 0 : index
    %37 = vector.load %arg16[%c4, %c0_21] : memref<8x128xf32, #tpu.memory_space<vmem>>, vector<1x128xf32>
    tpu.vector_store %arg16[%c4, %c0_21], %36 {strides = array<i32>} : memref<8x128xf32, #tpu.memory_space<vmem>>, vector<1x128xf32>,
    %38 = vector.extract_strided_slice %7 {offsets = [1280, 0], sizes = [256, 128], strides = [1, 1]} : vector<2048x128xf32> to vector<256x128xf32>
    %cst_22 = arith.constant dense<0.000000e+00> : vector<128xf32>
    %39 = vector.multi_reduction <add>, %38, %cst_22 [0] : vector<256x128xf32> to vector<128xf32>
    %40 = vector.shape_cast %39 : vector<128xf32> to vector<1x128xf32>
    %cst_23 = arith.constant 2.560000e+02 : f32
    %41 = vector.broadcast %cst_23 : f32 to vector<1x128xf32>
    %42 = arith.divf %40, %41 : vector<1x128xf32>
    %c5 = arith.constant 5 : index
    %c0_24 = arith.constant 0 : index
    %43 = vector.load %arg16[%c5, %c0_24] : memref<8x128xf32, #tpu.memory_space<vmem>>, vector<1x128xf32>
    tpu.vector_store %arg16[%c5, %c0_24], %42 {strides = array<i32>} : memref<8x128xf32, #tpu.memory_space<vmem>>, vector<1x128xf32>,
    %44 = vector.extract_strided_slice %7 {offsets = [1536, 0], sizes = [256, 128], strides = [1, 1]} : vector<2048x128xf32> to vector<256x128xf32>
    %cst_25 = arith.constant dense<0.000000e+00> : vector<128xf32>
    %45 = vector.multi_reduction <add>, %44, %cst_25 [0] : vector<256x128xf32> to vector<128xf32>
    %46 = vector.shape_cast %45 : vector<128xf32> to vector<1x128xf32>
    %cst_26 = arith.constant 2.560000e+02 : f32
    %47 = vector.broadcast %cst_26 : f32 to vector<1x128xf32>
    %48 = arith.divf %46, %47 : vector<1x128xf32>
    %c6 = arith.constant 6 : index
    %c0_27 = arith.constant 0 : index
    %49 = vector.load %arg16[%c6, %c0_27] : memref<8x128xf32, #tpu.memory_space<vmem>>, vector<1x128xf32>
    tpu.vector_store %arg16[%c6, %c0_27], %48 {strides = array<i32>} : memref<8x128xf32, #tpu.memory_space<vmem>>, vector<1x128xf32>,
    %50 = vector.extract_strided_slice %7 {offsets = [1792, 0], sizes = [256, 128], strides = [1, 1]} : vector<2048x128xf32> to vector<256x128xf32>
    %cst_28 = arith.constant dense<0.000000e+00> : vector<128xf32>
    %51 = vector.multi_reduction <add>, %50, %cst_28 [0] : vector<256x128xf32> to vector<128xf32>
    %52 = vector.shape_cast %51 : vector<128xf32> to vector<1x128xf32>
    %cst_29 = arith.constant 2.560000e+02 : f32
    %53 = vector.broadcast %cst_29 : f32 to vector<1x128xf32>
    %54 = arith.divf %52, %53 : vector<1x128xf32>
    %c7 = arith.constant 7 : index
    %c0_30 = arith.constant 0 : index
    %55 = vector.load %arg16[%c7, %c0_30] : memref<8x128xf32, #tpu.memory_space<vmem>>, vector<1x128xf32>
    tpu.vector_store %arg16[%c7, %c0_30], %54 {strides = array<i32>} : memref<8x128xf32, #tpu.memory_space<vmem>>, vector<1x128xf32>,
    %c0_31 = arith.constant 0 : index
    %c0_32 = arith.constant 0 : index
    %56 = vector.load %arg16[%c0_31, %c0_32] : memref<8x128xf32, #tpu.memory_space<vmem>>, vector<8x128xf32>
    %c0_33 = arith.constant 0 : index
    %c0_34 = arith.constant 0 : index
    %57 = vector.load %arg3[%c0_33, %c0_34] : memref<128x128xf32, #tpu.memory_space<vmem>>, vector<128x128xf32>
    %c0_35 = arith.constant 0 : index
    %c0_36 = arith.constant 0 : index
    %58 = vector.load %arg4[%c0_35, %c0_36] : memref<32x128xf32, #tpu.memory_space<vmem>>, vector<32x128xf32>
    %c0_37 = arith.constant 0 : index
    %c0_38 = arith.constant 0 : index
    %59 = vector.load %arg5[%c0_37, %c0_38] : memref<1x128xf32, #tpu.memory_space<vmem>>, vector<1x128xf32>
    %c0_39 = arith.constant 0 : index
    %c0_40 = arith.constant 0 : index
    %60 = vector.load %arg6[%c0_39, %c0_40] : memref<32x128xf32, #tpu.memory_space<vmem>>, vector<32x128xf32>
    %c0_41 = arith.constant 0 : index
    %c0_42 = arith.constant 0 : index
    %61 = vector.load %arg7[%c0_41, %c0_42] : memref<32x128xf32, #tpu.memory_space<vmem>>, vector<32x128xf32>
    %c0_43 = arith.constant 0 : index
    %c0_44 = arith.constant 0 : index
    %62 = vector.load %arg8[%c0_43, %c0_44] : memref<1x128xf32, #tpu.memory_space<vmem>>, vector<1x128xf32>
    %cst_45 = arith.constant dense<0.000000e+00> : vector<8x128xf32>
    %63 = tpu.matmul %56, %57, %cst_45 {dimension_numbers = #tpu.dot_dimension_numbers<[1], [0], [0], [1], [0, 0, 1, 1], [], []>} : vector<8x128xf32>, vector<128x128xf32>, vector<8x128xf32> -> vector<8x128xf32>
    %64 = vector.broadcast %59 : vector<1x128xf32> to vector<8x128xf32>
    %65 = arith.addf %63, %64 : vector<8x128xf32>
    %cst_46 = arith.constant 0.000000e+00 : f32
    %66 = vector.broadcast %cst_46 : f32 to vector<2x32xf32>
    %67 = vector.extract_strided_slice %65 {offsets = [0, 0], sizes = [2, 128], strides = [1, 1]} : vector<8x128xf32> to vector<2x128xf32>
    %cst_47 = arith.constant dense<0.000000e+00> : vector<2x128xf32>
    %68 = tpu.matmul %66, %58, %cst_47 {dimension_numbers = #tpu.dot_dimension_numbers<[1], [0], [0], [1], [0, 0, 1, 1], [], []>} : vector<2x32xf32>, vector<32x128xf32>, vector<2x128xf32> -> vector<2x128xf32>
    %69 = arith.addf %67, %68 : vector<2x128xf32>
    %70 = arith.negf %69 : vector<2x128xf32>
    %71 = math.exp %70 : vector<2x128xf32>
    %cst_48 = arith.constant 1.000000e+00 : f32
    %72 = vector.broadcast %cst_48 : f32 to vector<2x128xf32>
    %73 = arith.addf %72, %71 : vector<2x128xf32>
    %74 = arith.divf %72, %73 : vector<2x128xf32>
    %75 = math.tanh %69 : vector<2x128xf32>
    %76 = vector.extract_strided_slice %74 {offsets = [0, 0], sizes = [2, 32], strides = [1, 1]} : vector<2x128xf32> to vector<2x32xf32>
    %77 = vector.extract_strided_slice %74 {offsets = [0, 32], sizes = [2, 32], strides = [1, 1]} : vector<2x128xf32> to vector<2x32xf32>
    %78 = vector.extract_strided_slice %75 {offsets = [0, 64], sizes = [2, 32], strides = [1, 1]} : vector<2x128xf32> to vector<2x32xf32>
    %79 = vector.extract_strided_slice %74 {offsets = [0, 96], sizes = [2, 32], strides = [1, 1]} : vector<2x128xf32> to vector<2x32xf32>
    %80 = arith.mulf %77, %66 : vector<2x32xf32>
    %81 = arith.mulf %76, %78 : vector<2x32xf32>
    %82 = arith.addf %80, %81 : vector<2x32xf32>
    %83 = math.tanh %82 : vector<2x32xf32>
    %84 = arith.mulf %79, %83 : vector<2x32xf32>
    %cst_49 = arith.constant dense<0.000000e+00> : vector<2x128xf32>
    %85 = tpu.matmul %84, %60, %cst_49 {dimension_numbers = #tpu.dot_dimension_numbers<[1], [0], [0], [1], [0, 0, 1, 1], [], []>} : vector<2x32xf32>, vector<32x128xf32>, vector<2x128xf32> -> vector<2x128xf32>
    %86 = vector.broadcast %62 : vector<1x128xf32> to vector<2x128xf32>
    %87 = arith.addf %85, %86 : vector<2x128xf32>
    %cst_50 = arith.constant dense<0.000000e+00> : vector<2x128xf32>
    %88 = tpu.matmul %66, %61, %cst_50 {dimension_numbers = #tpu.dot_dimension_numbers<[1], [0], [0], [1], [0, 0, 1, 1], [], []>} : vector<2x32xf32>, vector<32x128xf32>, vector<2x128xf32> -> vector<2x128xf32>
    %89 = arith.addf %87, %88 : vector<2x128xf32>
    %90 = arith.negf %89 : vector<2x128xf32>
    %91 = math.exp %90 : vector<2x128xf32>
    %cst_51 = arith.constant 1.000000e+00 : f32
    %92 = vector.broadcast %cst_51 : f32 to vector<2x128xf32>
    %93 = arith.addf %92, %91 : vector<2x128xf32>
    %94 = arith.divf %92, %93 : vector<2x128xf32>
    %95 = math.tanh %89 : vector<2x128xf32>
    %96 = vector.extract_strided_slice %94 {offsets = [0, 0], sizes = [2, 32], strides = [1, 1]} : vector<2x128xf32> to vector<2x32xf32>
    %97 = vector.extract_strided_slice %94 {offsets = [0, 32], sizes = [2, 32], strides = [1, 1]} : vector<2x128xf32> to vector<2x32xf32>
    %98 = vector.extract_strided_slice %95 {offsets = [0, 64], sizes = [2, 32], strides = [1, 1]} : vector<2x128xf32> to vector<2x32xf32>
    %99 = vector.extract_strided_slice %94 {offsets = [0, 96], sizes = [2, 32], strides = [1, 1]} : vector<2x128xf32> to vector<2x32xf32>
    %100 = arith.mulf %97, %66 : vector<2x32xf32>
    %101 = arith.mulf %96, %98 : vector<2x32xf32>
    %102 = arith.addf %100, %101 : vector<2x32xf32>
    %103 = math.tanh %102 : vector<2x32xf32>
    %104 = arith.mulf %99, %103 : vector<2x32xf32>
    %105 = vector.extract_strided_slice %65 {offsets = [2, 0], sizes = [2, 128], strides = [1, 1]} : vector<8x128xf32> to vector<2x128xf32>
    %cst_52 = arith.constant dense<0.000000e+00> : vector<2x128xf32>
    %106 = tpu.matmul %84, %58, %cst_52 {dimension_numbers = #tpu.dot_dimension_numbers<[1], [0], [0], [1], [0, 0, 1, 1], [], []>} : vector<2x32xf32>, vector<32x128xf32>, vector<2x128xf32> -> vector<2x128xf32>
    %107 = arith.addf %105, %106 : vector<2x128xf32>
    %108 = arith.negf %107 : vector<2x128xf32>
    %109 = math.exp %108 : vector<2x128xf32>
    %cst_53 = arith.constant 1.000000e+00 : f32
    %110 = vector.broadcast %cst_53 : f32 to vector<2x128xf32>
    %111 = arith.addf %110, %109 : vector<2x128xf32>
    %112 = arith.divf %110, %111 : vector<2x128xf32>
    %113 = math.tanh %107 : vector<2x128xf32>
    %114 = vector.extract_strided_slice %112 {offsets = [0, 0], sizes = [2, 32], strides = [1, 1]} : vector<2x128xf32> to vector<2x32xf32>
    %115 = vector.extract_strided_slice %112 {offsets = [0, 32], sizes = [2, 32], strides = [1, 1]} : vector<2x128xf32> to vector<2x32xf32>
    %116 = vector.extract_strided_slice %113 {offsets = [0, 64], sizes = [2, 32], strides = [1, 1]} : vector<2x128xf32> to vector<2x32xf32>
    %117 = vector.extract_strided_slice %112 {offsets = [0, 96], sizes = [2, 32], strides = [1, 1]} : vector<2x128xf32> to vector<2x32xf32>
    %118 = arith.mulf %115, %82 : vector<2x32xf32>
    %119 = arith.mulf %114, %116 : vector<2x32xf32>
    %120 = arith.addf %118, %119 : vector<2x32xf32>
    %121 = math.tanh %120 : vector<2x32xf32>
    %122 = arith.mulf %117, %121 : vector<2x32xf32>
    %cst_54 = arith.constant dense<0.000000e+00> : vector<2x128xf32>
    %123 = tpu.matmul %122, %60, %cst_54 {dimension_numbers = #tpu.dot_dimension_numbers<[1], [0], [0], [1], [0, 0, 1, 1], [], []>} : vector<2x32xf32>, vector<32x128xf32>, vector<2x128xf32> -> vector<2x128xf32>
    %124 = vector.broadcast %62 : vector<1x128xf32> to vector<2x128xf32>
    %125 = arith.addf %123, %124 : vector<2x128xf32>
    %cst_55 = arith.constant dense<0.000000e+00> : vector<2x128xf32>
    %126 = tpu.matmul %104, %61, %cst_55 {dimension_numbers = #tpu.dot_dimension_numbers<[1], [0], [0], [1], [0, 0, 1, 1], [], []>} : vector<2x32xf32>, vector<32x128xf32>, vector<2x128xf32> -> vector<2x128xf32>
    %127 = arith.addf %125, %126 : vector<2x128xf32>
    %128 = arith.negf %127 : vector<2x128xf32>
    %129 = math.exp %128 : vector<2x128xf32>
    %cst_56 = arith.constant 1.000000e+00 : f32
    %130 = vector.broadcast %cst_56 : f32 to vector<2x128xf32>
    %131 = arith.addf %130, %129 : vector<2x128xf32>
    %132 = arith.divf %130, %131 : vector<2x128xf32>
    %133 = math.tanh %127 : vector<2x128xf32>
    %134 = vector.extract_strided_slice %132 {offsets = [0, 0], sizes = [2, 32], strides = [1, 1]} : vector<2x128xf32> to vector<2x32xf32>
    %135 = vector.extract_strided_slice %132 {offsets = [0, 32], sizes = [2, 32], strides = [1, 1]} : vector<2x128xf32> to vector<2x32xf32>
    %136 = vector.extract_strided_slice %133 {offsets = [0, 64], sizes = [2, 32], strides = [1, 1]} : vector<2x128xf32> to vector<2x32xf32>
    %137 = vector.extract_strided_slice %132 {offsets = [0, 96], sizes = [2, 32], strides = [1, 1]} : vector<2x128xf32> to vector<2x32xf32>
    %138 = arith.mulf %135, %102 : vector<2x32xf32>
    %139 = arith.mulf %134, %136 : vector<2x32xf32>
    %140 = arith.addf %138, %139 : vector<2x32xf32>
    %141 = math.tanh %140 : vector<2x32xf32>
    %142 = arith.mulf %137, %141 : vector<2x32xf32>
    %143 = vector.extract_strided_slice %65 {offsets = [4, 0], sizes = [2, 128], strides = [1, 1]} : vector<8x128xf32> to vector<2x128xf32>
    %cst_57 = arith.constant dense<0.000000e+00> : vector<2x128xf32>
    %144 = tpu.matmul %122, %58, %cst_57 {dimension_numbers = #tpu.dot_dimension_numbers<[1], [0], [0], [1], [0, 0, 1, 1], [], []>} : vector<2x32xf32>, vector<32x128xf32>, vector<2x128xf32> -> vector<2x128xf32>
    %145 = arith.addf %143, %144 : vector<2x128xf32>
    %146 = arith.negf %145 : vector<2x128xf32>
    %147 = math.exp %146 : vector<2x128xf32>
    %cst_58 = arith.constant 1.000000e+00 : f32
    %148 = vector.broadcast %cst_58 : f32 to vector<2x128xf32>
    %149 = arith.addf %148, %147 : vector<2x128xf32>
    %150 = arith.divf %148, %149 : vector<2x128xf32>
    %151 = math.tanh %145 : vector<2x128xf32>
    %152 = vector.extract_strided_slice %150 {offsets = [0, 0], sizes = [2, 32], strides = [1, 1]} : vector<2x128xf32> to vector<2x32xf32>
    %153 = vector.extract_strided_slice %150 {offsets = [0, 32], sizes = [2, 32], strides = [1, 1]} : vector<2x128xf32> to vector<2x32xf32>
    %154 = vector.extract_strided_slice %151 {offsets = [0, 64], sizes = [2, 32], strides = [1, 1]} : vector<2x128xf32> to vector<2x32xf32>
    %155 = vector.extract_strided_slice %150 {offsets = [0, 96], sizes = [2, 32], strides = [1, 1]} : vector<2x128xf32> to vector<2x32xf32>
    %156 = arith.mulf %153, %120 : vector<2x32xf32>
    %157 = arith.mulf %152, %154 : vector<2x32xf32>
    %158 = arith.addf %156, %157 : vector<2x32xf32>
    %159 = math.tanh %158 : vector<2x32xf32>
    %160 = arith.mulf %155, %159 : vector<2x32xf32>
    %cst_59 = arith.constant dense<0.000000e+00> : vector<2x128xf32>
    %161 = tpu.matmul %160, %60, %cst_59 {dimension_numbers = #tpu.dot_dimension_numbers<[1], [0], [0], [1], [0, 0, 1, 1], [], []>} : vector<2x32xf32>, vector<32x128xf32>, vector<2x128xf32> -> vector<2x128xf32>
    %162 = vector.broadcast %62 : vector<1x128xf32> to vector<2x128xf32>
    %163 = arith.addf %161, %162 : vector<2x128xf32>
    %cst_60 = arith.constant dense<0.000000e+00> : vector<2x128xf32>
    %164 = tpu.matmul %142, %61, %cst_60 {dimension_numbers = #tpu.dot_dimension_numbers<[1], [0], [0], [1], [0, 0, 1, 1], [], []>} : vector<2x32xf32>, vector<32x128xf32>, vector<2x128xf32> -> vector<2x128xf32>
    %165 = arith.addf %163, %164 : vector<2x128xf32>
    %166 = arith.negf %165 : vector<2x128xf32>
    %167 = math.exp %166 : vector<2x128xf32>
    %cst_61 = arith.constant 1.000000e+00 : f32
    %168 = vector.broadcast %cst_61 : f32 to vector<2x128xf32>
    %169 = arith.addf %168, %167 : vector<2x128xf32>
    %170 = arith.divf %168, %169 : vector<2x128xf32>
    %171 = math.tanh %165 : vector<2x128xf32>
    %172 = vector.extract_strided_slice %170 {offsets = [0, 0], sizes = [2, 32], strides = [1, 1]} : vector<2x128xf32> to vector<2x32xf32>
    %173 = vector.extract_strided_slice %170 {offsets = [0, 32], sizes = [2, 32], strides = [1, 1]} : vector<2x128xf32> to vector<2x32xf32>
    %174 = vector.extract_strided_slice %171 {offsets = [0, 64], sizes = [2, 32], strides = [1, 1]} : vector<2x128xf32> to vector<2x32xf32>
    %175 = vector.extract_strided_slice %170 {offsets = [0, 96], sizes = [2, 32], strides = [1, 1]} : vector<2x128xf32> to vector<2x32xf32>
    %176 = arith.mulf %173, %140 : vector<2x32xf32>
    %177 = arith.mulf %172, %174 : vector<2x32xf32>
    %178 = arith.addf %176, %177 : vector<2x32xf32>
    %179 = math.tanh %178 : vector<2x32xf32>
    %180 = arith.mulf %175, %179 : vector<2x32xf32>
    %181 = vector.extract_strided_slice %65 {offsets = [6, 0], sizes = [2, 128], strides = [1, 1]} : vector<8x128xf32> to vector<2x128xf32>
    %cst_62 = arith.constant dense<0.000000e+00> : vector<2x128xf32>
    %182 = tpu.matmul %160, %58, %cst_62 {dimension_numbers = #tpu.dot_dimension_numbers<[1], [0], [0], [1], [0, 0, 1, 1], [], []>} : vector<2x32xf32>, vector<32x128xf32>, vector<2x128xf32> -> vector<2x128xf32>
    %183 = arith.addf %181, %182 : vector<2x128xf32>
    %184 = arith.negf %183 : vector<2x128xf32>
    %185 = math.exp %184 : vector<2x128xf32>
    %cst_63 = arith.constant 1.000000e+00 : f32
    %186 = vector.broadcast %cst_63 : f32 to vector<2x128xf32>
    %187 = arith.addf %186, %185 : vector<2x128xf32>
    %188 = arith.divf %186, %187 : vector<2x128xf32>
    %189 = math.tanh %183 : vector<2x128xf32>
    %190 = vector.extract_strided_slice %188 {offsets = [0, 0], sizes = [2, 32], strides = [1, 1]} : vector<2x128xf32> to vector<2x32xf32>
    %191 = vector.extract_strided_slice %188 {offsets = [0, 32], sizes = [2, 32], strides = [1, 1]} : vector<2x128xf32> to vector<2x32xf32>
    %192 = vector.extract_strided_slice %189 {offsets = [0, 64], sizes = [2, 32], strides = [1, 1]} : vector<2x128xf32> to vector<2x32xf32>
    %193 = vector.extract_strided_slice %188 {offsets = [0, 96], sizes = [2, 32], strides = [1, 1]} : vector<2x128xf32> to vector<2x32xf32>
    %194 = arith.mulf %191, %158 : vector<2x32xf32>
    %195 = arith.mulf %190, %192 : vector<2x32xf32>
    %196 = arith.addf %194, %195 : vector<2x32xf32>
    %197 = math.tanh %196 : vector<2x32xf32>
    %198 = arith.mulf %193, %197 : vector<2x32xf32>
    %cst_64 = arith.constant dense<0.000000e+00> : vector<2x128xf32>
    %199 = tpu.matmul %198, %60, %cst_64 {dimension_numbers = #tpu.dot_dimension_numbers<[1], [0], [0], [1], [0, 0, 1, 1], [], []>} : vector<2x32xf32>, vector<32x128xf32>, vector<2x128xf32> -> vector<2x128xf32>
    %200 = vector.broadcast %62 : vector<1x128xf32> to vector<2x128xf32>
    %201 = arith.addf %199, %200 : vector<2x128xf32>
    %cst_65 = arith.constant dense<0.000000e+00> : vector<2x128xf32>
    %202 = tpu.matmul %180, %61, %cst_65 {dimension_numbers = #tpu.dot_dimension_numbers<[1], [0], [0], [1], [0, 0, 1, 1], [], []>} : vector<2x32xf32>, vector<32x128xf32>, vector<2x128xf32> -> vector<2x128xf32>
    %203 = arith.addf %201, %202 : vector<2x128xf32>
    %204 = arith.negf %203 : vector<2x128xf32>
    %205 = math.exp %204 : vector<2x128xf32>
    %cst_66 = arith.constant 1.000000e+00 : f32
    %206 = vector.broadcast %cst_66 : f32 to vector<2x128xf32>
    %207 = arith.addf %206, %205 : vector<2x128xf32>
    %208 = arith.divf %206, %207 : vector<2x128xf32>
    %209 = math.tanh %203 : vector<2x128xf32>
    %210 = vector.extract_strided_slice %208 {offsets = [0, 0], sizes = [2, 32], strides = [1, 1]} : vector<2x128xf32> to vector<2x32xf32>
    %211 = vector.extract_strided_slice %208 {offsets = [0, 32], sizes = [2, 32], strides = [1, 1]} : vector<2x128xf32> to vector<2x32xf32>
    %212 = vector.extract_strided_slice %209 {offsets = [0, 64], sizes = [2, 32], strides = [1, 1]} : vector<2x128xf32> to vector<2x32xf32>
    %213 = vector.extract_strided_slice %208 {offsets = [0, 96], sizes = [2, 32], strides = [1, 1]} : vector<2x128xf32> to vector<2x32xf32>
    %214 = arith.mulf %211, %178 : vector<2x32xf32>
    %215 = arith.mulf %210, %212 : vector<2x32xf32>
    %216 = arith.addf %214, %215 : vector<2x32xf32>
    %217 = math.tanh %216 : vector<2x32xf32>
    %218 = arith.mulf %213, %217 : vector<2x32xf32>
    %c0_67 = arith.constant 0 : index
    %c0_68 = arith.constant 0 : index
    %219 = vector.load %arg9[%c0_67, %c0_68] : memref<32x16xf32, #tpu.memory_space<vmem>>, vector<32x16xf32>
    %cst_69 = arith.constant dense<0.000000e+00> : vector<2x16xf32>
    %220 = tpu.matmul %218, %219, %cst_69 {dimension_numbers = #tpu.dot_dimension_numbers<[1], [0], [0], [1], [0, 0, 1, 1], [], []>} : vector<2x32xf32>, vector<32x16xf32>, vector<2x16xf32> -> vector<2x16xf32>
    %c0_70 = arith.constant 0 : index
    %c0_71 = arith.constant 0 : index
    %221 = vector.load %arg10[%c0_70, %c0_71] : memref<1x16xf32, #tpu.memory_space<vmem>>, vector<1x16xf32>
    %222 = vector.broadcast %221 : vector<1x16xf32> to vector<2x16xf32>
    %223 = arith.addf %220, %222 : vector<2x16xf32>
    %cst_72 = arith.constant 0.000000e+00 : f32
    %224 = vector.broadcast %cst_72 : f32 to vector<2x16xf32>
    %225 = arith.maximumf %223, %224 : vector<2x16xf32>
    %c0_73 = arith.constant 0 : index
    %c0_74 = arith.constant 0 : index
    %226 = vector.load %arg11[%c0_73, %c0_74] : memref<16x8xf32, #tpu.memory_space<vmem>>, vector<16x8xf32>
    %cst_75 = arith.constant dense<0.000000e+00> : vector<2x8xf32>
    %227 = tpu.matmul %225, %226, %cst_75 {dimension_numbers = #tpu.dot_dimension_numbers<[1], [0], [0], [1], [0, 0, 1, 1], [], []>} : vector<2x16xf32>, vector<16x8xf32>, vector<2x8xf32> -> vector<2x8xf32>
    %c0_76 = arith.constant 0 : index
    %c0_77 = arith.constant 0 : index
    %228 = vector.load %arg12[%c0_76, %c0_77] : memref<1x8xf32, #tpu.memory_space<vmem>>, vector<1x8xf32>
    %229 = vector.broadcast %228 : vector<1x8xf32> to vector<2x8xf32>
    %230 = arith.addf %227, %229 : vector<2x8xf32>
    %cst_78 = arith.constant 0.000000e+00 : f32
    %231 = vector.broadcast %cst_78 : f32 to vector<2x8xf32>
    %232 = arith.maximumf %230, %231 : vector<2x8xf32>
    %c0_79 = arith.constant 0 : index
    %c0_80 = arith.constant 0 : index
    %233 = vector.load %arg13[%c0_79, %c0_80] : memref<8x7xf32, #tpu.memory_space<vmem>>, vector<8x7xf32>
    %cst_81 = arith.constant dense<0.000000e+00> : vector<2x7xf32>
    %234 = tpu.matmul %232, %233, %cst_81 {dimension_numbers = #tpu.dot_dimension_numbers<[1], [0], [0], [1], [0, 0, 1, 1], [], []>} : vector<2x8xf32>, vector<8x7xf32>, vector<2x7xf32> -> vector<2x7xf32>
    %c0_82 = arith.constant 0 : index
    %c0_83 = arith.constant 0 : index
    %235 = vector.load %arg14[%c0_82, %c0_83] : memref<1x7xf32, #tpu.memory_space<vmem>>, vector<1x7xf32>
    %236 = vector.broadcast %235 : vector<1x7xf32> to vector<2x7xf32>
    %237 = arith.addf %234, %236 : vector<2x7xf32>
    %c0_84 = arith.constant 0 : index
    %c0_85 = arith.constant 0 : index
    %238 = vector.load %arg15[%c0_84, %c0_85] : memref<2x7xf32, #tpu.memory_space<vmem>>, vector<2x7xf32>
    tpu.vector_store %arg15[%c0_84, %c0_85], %237 {strides = array<i32>} : memref<2x7xf32, #tpu.memory_space<vmem>>, vector<2x7xf32>,
    return
  }
}

</mosaic_0001>

<llo_original>
// kernel: visual_odometry_forward.1
$region0: #{visual_odometry_forward.1}
  #allocation0 [shape = 'u32[]', space=smem, size = 0x4, offset = 0x4, fixed_abs, tag = 'smem constant byte address 0x4 - core index']
  #allocation1 [shape = 'u32[144,128]{1,0:T(1,128)}', space=vmem, size = 0x12000, scoped, tag = 'internal scratch']
  #allocation2 [shape = 'f32[8,128]{1,0:T(8,128)}', space=vmem, size = 0x1000, scoped, tag = 'scratch operand']
  %s0 = inlined_call_operand.vmem [shape: bf16[2048,32], index: 0, kind: input, shape index: {}]
  %s1 = inlined_call_operand.vmem [shape: bf16[32,128], index: 1, kind: input, shape index: {}]
  %s2 = inlined_call_operand.vmem [shape: f32[1,128], index: 2, kind: input, shape index: {}]
  %s3 = inlined_call_operand.vmem [shape: f32[128,128], index: 3, kind: input, shape index: {}]
  %s4 = inlined_call_operand.vmem [shape: f32[32,128], index: 4, kind: input, shape index: {}]
  %s5 = inlined_call_operand.vmem [shape: f32[1,128], index: 5, kind: input, shape index: {}]
  %s6 = inlined_call_operand.vmem [shape: f32[32,128], index: 6, kind: input, shape index: {}]
  %s7 = inlined_call_operand.vmem [shape: f32[32,128], index: 7, kind: input, shape index: {}]
  %s8 = inlined_call_operand.vmem [shape: f32[1,128], index: 8, kind: input, shape index: {}]
  %s9 = inlined_call_operand.vmem [shape: f32[32,16], index: 9, kind: input, shape index: {}]
  %s10 = inlined_call_operand.vmem [shape: f32[1,16], index: 10, kind: input, shape index: {}]
  %s11 = inlined_call_operand.vmem [shape: f32[16,8], index: 11, kind: input, shape index: {}]
  %s12 = inlined_call_operand.vmem [shape: f32[1,8], index: 12, kind: input, shape index: {}]
  %s13 = inlined_call_operand.vmem [shape: f32[8,7], index: 13, kind: input, shape index: {}]
  %s14 = inlined_call_operand.vmem [shape: f32[1,7], index: 14, kind: input, shape index: {}]
  %s15 = inlined_call_operand.hbm [shape: f32[2,7], index: 15, kind: output, shape index: {}]
  %s16 = sld [smem:[#allocation0]]
  $region70: #{visual_odometry_forward.1} parent=0
    _
  %s18 = ssub.s32 1, %s16
  %s19 = scalar_select 0, %s18, %s16
  $region1: #{visual_odometry_forward.1} parent=0
    #allocation3 [shape = 'u8[1024]{0}', space=vmem, size = 0x400, scoped, tag = 'output window, operand 0, single buffered']
    #allocation4 [shape = 's32[1]{0}', space=sflag, size = 0x4, scoped, tag = 'scoped memory for visual_odometry_forward.1']
    %20 = vsyncpa [#allocation4], 0
    // Predicated region
    $region2: #{visual_odometry_forward.1} parent=1 // pred_check
      _
    $region3: #{visual_odometry_forward.1} parent=1 // pred_check_branch
      %22 = sbr.rel (0) target = $region5
    $region4: #{visual_odometry_forward.1} parent=1 // pred_region
      _
    $region5: #{visual_odometry_forward.1} parent=1 // pred_fallthru
      _
    // Predicated region
    $region6: #{visual_odometry_forward.1} parent=1 // pred_check
      _
    $region7: #{visual_odometry_forward.1} parent=1 // pred_check_branch
      %24 = sbr.rel (0) target = $region9
    $region8: #{visual_odometry_forward.1} parent=1 // pred_region
      _
    $region9: #{visual_odometry_forward.1} parent=1 // pred_fallthru
      _
    // Predicated region
    $region10: #{visual_odometry_forward.1} parent=1 // pred_check
      _
    $region11: #{visual_odometry_forward.1} parent=1 // pred_check_branch
      %26 = sbr.rel (0) target = $region13
    $region12: #{visual_odometry_forward.1} parent=1 // pred_region
      _
    $region13: #{visual_odometry_forward.1} parent=1 // pred_fallthru
      _
    // Predicated region
    $region14: #{visual_odometry_forward.1} parent=1 // pred_check
      _
    $region15: #{visual_odometry_forward.1} parent=1 // pred_check_branch
      %28 = sbr.rel (0) target = $region17
    $region16: #{visual_odometry_forward.1} parent=1 // pred_region
      _
    $region17: #{visual_odometry_forward.1} parent=1 // pred_fallthru
      _
    // Predicated region
    $region18: #{visual_odometry_forward.1} parent=1 // pred_check
      _
    $region19: #{visual_odometry_forward.1} parent=1 // pred_check_branch
      %30 = sbr.rel (0) target = $region21
    $region20: #{visual_odometry_forward.1} parent=1 // pred_region
      _
    $region21: #{visual_odometry_forward.1} parent=1 // pred_fallthru
      _
    // Predicated region
    $region22: #{visual_odometry_forward.1} parent=1 // pred_check
      _
    $region23: #{visual_odometry_forward.1} parent=1 // pred_check_branch
      %32 = sbr.rel (0) target = $region25
    $region24: #{visual_odometry_forward.1} parent=1 // pred_region
      _
    $region25: #{visual_odometry_forward.1} parent=1 // pred_fallthru
      _
    // Predicated region
    $region26: #{visual_odometry_forward.1} parent=1 // pred_check
      _
    $region27: #{visual_odometry_forward.1} parent=1 // pred_check_branch
      %34 = sbr.rel (0) target = $region29
    $region28: #{visual_odometry_forward.1} parent=1 // pred_region
      _
    $region29: #{visual_odometry_forward.1} parent=1 // pred_fallthru
      _
    // Predicated region
    $region30: #{visual_odometry_forward.1} parent=1 // pred_check
      _
    $region31: #{visual_odometry_forward.1} parent=1 // pred_check_branch
      %36 = sbr.rel (0) target = $region33
    $region32: #{visual_odometry_forward.1} parent=1 // pred_region
      _
    $region33: #{visual_odometry_forward.1} parent=1 // pred_fallthru
      _
    // Predicated region
    $region34: #{visual_odometry_forward.1} parent=1 // pred_check
      _
    $region35: #{visual_odometry_forward.1} parent=1 // pred_check_branch
      %38 = sbr.rel (0) target = $region37
    $region36: #{visual_odometry_forward.1} parent=1 // pred_region
      _
    $region37: #{visual_odometry_forward.1} parent=1 // pred_fallthru
      _
    // Predicated region
    $region38: #{visual_odometry_forward.1} parent=1 // pred_check
      _
    $region39: #{visual_odometry_forward.1} parent=1 // pred_check_branch
      %40 = sbr.rel (0) target = $region41
    $region40: #{visual_odometry_forward.1} parent=1 // pred_region
      _
    $region41: #{visual_odometry_forward.1} parent=1 // pred_fallthru
      _
    // Predicated region
    $region42: #{visual_odometry_forward.1} parent=1 // pred_check
      _
    $region43: #{visual_odometry_forward.1} parent=1 // pred_check_branch
      %42 = sbr.rel (0) target = $region45
    $region44: #{visual_odometry_forward.1} parent=1 // pred_region
      _
    $region45: #{visual_odometry_forward.1} parent=1 // pred_fallthru
      _
    // Predicated region
    $region46: #{visual_odometry_forward.1} parent=1 // pred_check
      _
    $region47: #{visual_odometry_forward.1} parent=1 // pred_check_branch
      %44 = sbr.rel (0) target = $region49
    $region48: #{visual_odometry_forward.1} parent=1 // pred_region
      _
    $region49: #{visual_odometry_forward.1} parent=1 // pred_fallthru
      _
    // Predicated region
    $region50: #{visual_odometry_forward.1} parent=1 // pred_check
      _
    $region51: #{visual_odometry_forward.1} parent=1 // pred_check_branch
      %46 = sbr.rel (0) target = $region53
    $region52: #{visual_odometry_forward.1} parent=1 // pred_region
      _
    $region53: #{visual_odometry_forward.1} parent=1 // pred_fallthru
      _
    // Predicated region
    $region54: #{visual_odometry_forward.1} parent=1 // pred_check
      _
    $region55: #{visual_odometry_forward.1} parent=1 // pred_check_branch
      %48 = sbr.rel (0) target = $region57
    $region56: #{visual_odometry_forward.1} parent=1 // pred_region
      _
    $region57: #{visual_odometry_forward.1} parent=1 // pred_fallthru
      _
    // Predicated region
    $region58: #{visual_odometry_forward.1} parent=1 // pred_check
      _
    $region59: #{visual_odometry_forward.1} parent=1 // pred_check_branch
      %50 = sbr.rel (0) target = $region61
    $region60: #{visual_odometry_forward.1} parent=1 // pred_region
      _
    $region61: #{visual_odometry_forward.1} parent=1 // pred_fallthru
      _
    %v52 = vld [vmem:[%s0] sm:$0xf]
    %v53 = vld [vmem:[%s0 + $0x4] sm:$0xf]
    %v54 = vld [vmem:[%s0 + $0x8] sm:$0xf]
    %v55 = vld [vmem:[%s0 + $0xc] sm:$0xf]
    %v56 = vld [vmem:[%s0 + $0x10] sm:$0xf]
    %v57 = vld [vmem:[%s0 + $0x14] sm:$0xf]
    %v58 = vld [vmem:[%s0 + $0x18] sm:$0xf]
    %v59 = vld [vmem:[%s0 + $0x1c] sm:$0xf]
    %v60 = vld [vmem:[%s0 + $0x20] sm:$0xf]
    %v61 = vld [vmem:[%s0 + $0x24] sm:$0xf]
    %v62 = vld [vmem:[%s0 + $0x28] sm:$0xf]
    %v63 = vld [vmem:[%s0 + $0x2c] sm:$0xf]
    %v64 = vld [vmem:[%s0 + $0x30] sm:$0xf]
    %v65 = vld [vmem:[%s0 + $0x34] sm:$0xf]
    %v66 = vld [vmem:[%s0 + $0x38] sm:$0xf]
    %v67 = vld [vmem:[%s0 + $0x3c] sm:$0xf]
    %v68 = vld [vmem:[%s0 + $0x40] sm:$0xf]
    %v69 = vld [vmem:[%s0 + $0x44] sm:$0xf]
    %v70 = vld [vmem:[%s0 + $0x48] sm:$0xf]
    %v71 = vld [vmem:[%s0 + $0x4c] sm:$0xf]
    %v72 = vld [vmem:[%s0 + $0x50] sm:$0xf]
    %v73 = vld [vmem:[%s0 + $0x54] sm:$0xf]
    %v74 = vld [vmem:[%s0 + $0x58] sm:$0xf]
    %v75 = vld [vmem:[%s0 + $0x5c] sm:$0xf]
    %v76 = vld [vmem:[%s0 + $0x60] sm:$0xf]
    %v77 = vld [vmem:[%s0 + $0x64] sm:$0xf]
    %v78 = vld [vmem:[%s0 + $0x68] sm:$0xf]
    %v79 = vld [vmem:[%s0 + $0x6c] sm:$0xf]
    %v80 = vld [vmem:[%s0 + $0x70] sm:$0xf]
    %v81 = vld [vmem:[%s0 + $0x74] sm:$0xf]
    %v82 = vld [vmem:[%s0 + $0x78] sm:$0xf]
    %v83 = vld [vmem:[%s0 + $0x7c] sm:$0xf]
    %v84 = vld [vmem:[%s0 + $0x80] sm:$0xf]
    %v85 = vld [vmem:[%s0 + $0x84] sm:$0xf]
    %v86 = vld [vmem:[%s0 + $0x88] sm:$0xf]
    %v87 = vld [vmem:[%s0 + $0x8c] sm:$0xf]
    %v88 = vld [vmem:[%s0 + $0x90] sm:$0xf]
    %v89 = vld [vmem:[%s0 + $0x94] sm:$0xf]
    %v90 = vld [vmem:[%s0 + $0x98] sm:$0xf]
    %v91 = vld [vmem:[%s0 + $0x9c] sm:$0xf]
    %v92 = vld [vmem:[%s0 + $0xa0] sm:$0xf]
    %v93 = vld [vmem:[%s0 + $0xa4] sm:$0xf]
    %v94 = vld [vmem:[%s0 + $0xa8] sm:$0xf]
    %v95 = vld [vmem:[%s0 + $0xac] sm:$0xf]
    %v96 = vld [vmem:[%s0 + $0xb0] sm:$0xf]
    %v97 = vld [vmem:[%s0 + $0xb4] sm:$0xf]
    %v98 = vld [vmem:[%s0 + $0xb8] sm:$0xf]
    %v99 = vld [vmem:[%s0 + $0xbc] sm:$0xf]
    %v100 = vld [vmem:[%s0 + $0xc0] sm:$0xf]
    %v101 = vld [vmem:[%s0 + $0xc4] sm:$0xf]
    %v102 = vld [vmem:[%s0 + $0xc8] sm:$0xf]
    %v103 = vld [vmem:[%s0 + $0xcc] sm:$0xf]
    %v104 = vld [vmem:[%s0 + $0xd0] sm:$0xf]
    %v105 = vld [vmem:[%s0 + $0xd4] sm:$0xf]
    %v106 = vld [vmem:[%s0 + $0xd8] sm:$0xf]
    %v107 = vld [vmem:[%s0 + $0xdc] sm:$0xf]
    %v108 = vld [vmem:[%s0 + $0xe0] sm:$0xf]
    %v109 = vld [vmem:[%s0 + $0xe4] sm:$0xf]
    %v110 = vld [vmem:[%s0 + $0xe8] sm:$0xf]
    %v111 = vld [vmem:[%s0 + $0xec] sm:$0xf]
    %v112 = vld [vmem:[%s0 + $0xf0] sm:$0xf]
    %v113 = vld [vmem:[%s0 + $0xf4] sm:$0xf]
    %v114 = vld [vmem:[%s0 + $0xf8] sm:$0xf]
    %v115 = vld [vmem:[%s0 + $0xfc] sm:$0xf]
    %v116 = vld [vmem:[%s0 + $0x100] sm:$0xf]
    %v117 = vld [vmem:[%s0 + $0x104] sm:$0xf]
    %v118 = vld [vmem:[%s0 + $0x108] sm:$0xf]
    %v119 = vld [vmem:[%s0 + $0x10c] sm:$0xf]
    %v120 = vld [vmem:[%s0 + $0x110] sm:$0xf]
    %v121 = vld [vmem:[%s0 + $0x114] sm:$0xf]
    %v122 = vld [vmem:[%s0 + $0x118] sm:$0xf]
    %v123 = vld [vmem:[%s0 + $0x11c] sm:$0xf]
    %v124 = vld [vmem:[%s0 + $0x120] sm:$0xf]
    %v125 = vld [vmem:[%s0 + $0x124] sm:$0xf]
    %v126 = vld [vmem:[%s0 + $0x128] sm:$0xf]
    %v127 = vld [vmem:[%s0 + $0x12c] sm:$0xf]
    %v128 = vld [vmem:[%s0 + $0x130] sm:$0xf]
    %v129 = vld [vmem:[%s0 + $0x134] sm:$0xf]
    %v130 = vld [vmem:[%s0 + $0x138] sm:$0xf]
    %v131 = vld [vmem:[%s0 + $0x13c] sm:$0xf]
    %v132 = vld [vmem:[%s0 + $0x140] sm:$0xf]
    %v133 = vld [vmem:[%s0 + $0x144] sm:$0xf]
    %v134 = vld [vmem:[%s0 + $0x148] sm:$0xf]
    %v135 = vld [vmem:[%s0 + $0x14c] sm:$0xf]
    %v136 = vld [vmem:[%s0 + $0x150] sm:$0xf]
    %v137 = vld [vmem:[%s0 + $0x154] sm:$0xf]
    %v138 = vld [vmem:[%s0 + $0x158] sm:$0xf]
    %v139 = vld [vmem:[%s0 + $0x15c] sm:$0xf]
    %v140 = vld [vmem:[%s0 + $0x160] sm:$0xf]
    %v141 = vld [vmem:[%s0 + $0x164] sm:$0xf]
    %v142 = vld [vmem:[%s0 + $0x168] sm:$0xf]
    %v143 = vld [vmem:[%s0 + $0x16c] sm:$0xf]
    %v144 = vld [vmem:[%s0 + $0x170] sm:$0xf]
    %v145 = vld [vmem:[%s0 + $0x174] sm:$0xf]
    %v146 = vld [vmem:[%s0 + $0x178] sm:$0xf]
    %v147 = vld [vmem:[%s0 + $0x17c] sm:$0xf]
    %v148 = vld [vmem:[%s0 + $0x180] sm:$0xf]
    %v149 = vld [vmem:[%s0 + $0x184] sm:$0xf]
    %v150 = vld [vmem:[%s0 + $0x188] sm:$0xf]
    %v151 = vld [vmem:[%s0 + $0x18c] sm:$0xf]
    %v152 = vld [vmem:[%s0 + $0x190] sm:$0xf]
    %v153 = vld [vmem:[%s0 + $0x194] sm:$0xf]
    %v154 = vld [vmem:[%s0 + $0x198] sm:$0xf]
    %v155 = vld [vmem:[%s0 + $0x19c] sm:$0xf]
    %v156 = vld [vmem:[%s0 + $0x1a0] sm:$0xf]
    %v157 = vld [vmem:[%s0 + $0x1a4] sm:$0xf]
    %v158 = vld [vmem:[%s0 + $0x1a8] sm:$0xf]
    %v159 = vld [vmem:[%s0 + $0x1ac] sm:$0xf]
    %v160 = vld [vmem:[%s0 + $0x1b0] sm:$0xf]
    %v161 = vld [vmem:[%s0 + $0x1b4] sm:$0xf]
    %v162 = vld [vmem:[%s0 + $0x1b8] sm:$0xf]
    %v163 = vld [vmem:[%s0 + $0x1bc] sm:$0xf]
    %v164 = vld [vmem:[%s0 + $0x1c0] sm:$0xf]
    %v165 = vld [vmem:[%s0 + $0x1c4] sm:$0xf]
    %v166 = vld [vmem:[%s0 + $0x1c8] sm:$0xf]
    %v167 = vld [vmem:[%s0 + $0x1cc] sm:$0xf]
    %v168 = vld [vmem:[%s0 + $0x1d0] sm:$0xf]
    %v169 = vld [vmem:[%s0 + $0x1d4] sm:$0xf]
    %v170 = vld [vmem:[%s0 + $0x1d8] sm:$0xf]
    %v171 = vld [vmem:[%s0 + $0x1dc] sm:$0xf]
    %v172 = vld [vmem:[%s0 + $0x1e0] sm:$0xf]
    %v173 = vld [vmem:[%s0 + $0x1e4] sm:$0xf]
    %v174 = vld [vmem:[%s0 + $0x1e8] sm:$0xf]
    %v175 = vld [vmem:[%s0 + $0x1ec] sm:$0xf]
    %v176 = vld [vmem:[%s0 + $0x1f0] sm:$0xf]
    %v177 = vld [vmem:[%s0 + $0x1f4] sm:$0xf]
    %v178 = vld [vmem:[%s0 + $0x1f8] sm:$0xf]
    %v179 = vld [vmem:[%s0 + $0x1fc] sm:$0xf]
    %v180 = vld [vmem:[%s0 + $0x200] sm:$0xf]
    %v181 = vld [vmem:[%s0 + $0x204] sm:$0xf]
    %v182 = vld [vmem:[%s0 + $0x208] sm:$0xf]
    %v183 = vld [vmem:[%s0 + $0x20c] sm:$0xf]
    %v184 = vld [vmem:[%s0 + $0x210] sm:$0xf]
    %v185 = vld [vmem:[%s0 + $0x214] sm:$0xf]
    %v186 = vld [vmem:[%s0 + $0x218] sm:$0xf]
    %v187 = vld [vmem:[%s0 + $0x21c] sm:$0xf]
    %v188 = vld [vmem:[%s0 + $0x220] sm:$0xf]
    %v189 = vld [vmem:[%s0 + $0x224] sm:$0xf]
    %v190 = vld [vmem:[%s0 + $0x228] sm:$0xf]
    %v191 = vld [vmem:[%s0 + $0x22c] sm:$0xf]
    %v192 = vld [vmem:[%s0 + $0x230] sm:$0xf]
    %v193 = vld [vmem:[%s0 + $0x234] sm:$0xf]
    %v194 = vld [vmem:[%s0 + $0x238] sm:$0xf]
    %v195 = vld [vmem:[%s0 + $0x23c] sm:$0xf]
    %v196 = vld [vmem:[%s0 + $0x240] sm:$0xf]
    %v197 = vld [vmem:[%s0 + $0x244] sm:$0xf]
    %v198 = vld [vmem:[%s0 + $0x248] sm:$0xf]
    %v199 = vld [vmem:[%s0 + $0x24c] sm:$0xf]
    %v200 = vld [vmem:[%s0 + $0x250] sm:$0xf]
    %v201 = vld [vmem:[%s0 + $0x254] sm:$0xf]
    %v202 = vld [vmem:[%s0 + $0x258] sm:$0xf]
    %v203 = vld [vmem:[%s0 + $0x25c] sm:$0xf]
    %v204 = vld [vmem:[%s0 + $0x260] sm:$0xf]
    %v205 = vld [vmem:[%s0 + $0x264] sm:$0xf]
    %v206 = vld [vmem:[%s0 + $0x268] sm:$0xf]
    %v207 = vld [vmem:[%s0 + $0x26c] sm:$0xf]
    %v208 = vld [vmem:[%s0 + $0x270] sm:$0xf]
    %v209 = vld [vmem:[%s0 + $0x274] sm:$0xf]
    %v210 = vld [vmem:[%s0 + $0x278] sm:$0xf]
    %v211 = vld [vmem:[%s0 + $0x27c] sm:$0xf]
    %v212 = vld [vmem:[%s0 + $0x280] sm:$0xf]
    %v213 = vld [vmem:[%s0 + $0x284] sm:$0xf]
    %v214 = vld [vmem:[%s0 + $0x288] sm:$0xf]
    %v215 = vld [vmem:[%s0 + $0x28c] sm:$0xf]
    %v216 = vld [vmem:[%s0 + $0x290] sm:$0xf]
    %v217 = vld [vmem:[%s0 + $0x294] sm:$0xf]
    %v218 = vld [vmem:[%s0 + $0x298] sm:$0xf]
    %v219 = vld [vmem:[%s0 + $0x29c] sm:$0xf]
    %v220 = vld [vmem:[%s0 + $0x2a0] sm:$0xf]
    %v221 = vld [vmem:[%s0 + $0x2a4] sm:$0xf]
    %v222 = vld [vmem:[%s0 + $0x2a8] sm:$0xf]
    %v223 = vld [vmem:[%s0 + $0x2ac] sm:$0xf]
    %v224 = vld [vmem:[%s0 + $0x2b0] sm:$0xf]
    %v225 = vld [vmem:[%s0 + $0x2b4] sm:$0xf]
    %v226 = vld [vmem:[%s0 + $0x2b8] sm:$0xf]
    %v227 = vld [vmem:[%s0 + $0x2bc] sm:$0xf]
    %v228 = vld [vmem:[%s0 + $0x2c0] sm:$0xf]
    %v229 = vld [vmem:[%s0 + $0x2c4] sm:$0xf]
    %v230 = vld [vmem:[%s0 + $0x2c8] sm:$0xf]
    %v231 = vld [vmem:[%s0 + $0x2cc] sm:$0xf]
    %v232 = vld [vmem:[%s0 + $0x2d0] sm:$0xf]
    %v233 = vld [vmem:[%s0 + $0x2d4] sm:$0xf]
    %v234 = vld [vmem:[%s0 + $0x2d8] sm:$0xf]
    %v235 = vld [vmem:[%s0 + $0x2dc] sm:$0xf]
    %v236 = vld [vmem:[%s0 + $0x2e0] sm:$0xf]
    %v237 = vld [vmem:[%s0 + $0x2e4] sm:$0xf]
    %v238 = vld [vmem:[%s0 + $0x2e8] sm:$0xf]
    %v239 = vld [vmem:[%s0 + $0x2ec] sm:$0xf]
    %v240 = vld [vmem:[%s0 + $0x2f0] sm:$0xf]
    %v241 = vld [vmem:[%s0 + $0x2f4] sm:$0xf]
    %v242 = vld [vmem:[%s0 + $0x2f8] sm:$0xf]
    %v243 = vld [vmem:[%s0 + $0x2fc] sm:$0xf]
    %v244 = vld [vmem:[%s0 + $0x300] sm:$0xf]
    %v245 = vld [vmem:[%s0 + $0x304] sm:$0xf]
    %v246 = vld [vmem:[%s0 + $0x308] sm:$0xf]
    %v247 = vld [vmem:[%s0 + $0x30c] sm:$0xf]
    %v248 = vld [vmem:[%s0 + $0x310] sm:$0xf]
    %v249 = vld [vmem:[%s0 + $0x314] sm:$0xf]
    %v250 = vld [vmem:[%s0 + $0x318] sm:$0xf]
    %v251 = vld [vmem:[%s0 + $0x31c] sm:$0xf]
    %v252 = vld [vmem:[%s0 + $0x320] sm:$0xf]
    %v253 = vld [vmem:[%s0 + $0x324] sm:$0xf]
    %v254 = vld [vmem:[%s0 + $0x328] sm:$0xf]
    %v255 = vld [vmem:[%s0 + $0x32c] sm:$0xf]
    %v256 = vld [vmem:[%s0 + $0x330] sm:$0xf]
    %v257 = vld [vmem:[%s0 + $0x334] sm:$0xf]
    %v258 = vld [vmem:[%s0 + $0x338] sm:$0xf]
    %v259 = vld [vmem:[%s0 + $0x33c] sm:$0xf]
    %v260 = vld [vmem:[%s0 + $0x340] sm:$0xf]
    %v261 = vld [vmem:[%s0 + $0x344] sm:$0xf]
    %v262 = vld [vmem:[%s0 + $0x348] sm:$0xf]
    %v263 = vld [vmem:[%s0 + $0x34c] sm:$0xf]
    %v264 = vld [vmem:[%s0 + $0x350] sm:$0xf]
    %v265 = vld [vmem:[%s0 + $0x354] sm:$0xf]
    %v266 = vld [vmem:[%s0 + $0x358] sm:$0xf]
    %v267 = vld [vmem:[%s0 + $0x35c] sm:$0xf]
    %v268 = vld [vmem:[%s0 + $0x360] sm:$0xf]
    %v269 = vld [vmem:[%s0 + $0x364] sm:$0xf]
    %v270 = vld [vmem:[%s0 + $0x368] sm:$0xf]
    %v271 = vld [vmem:[%s0 + $0x36c] sm:$0xf]
    %v272 = vld [vmem:[%s0 + $0x370] sm:$0xf]
    %v273 = vld [vmem:[%s0 + $0x374] sm:$0xf]
    %v274 = vld [vmem:[%s0 + $0x378] sm:$0xf]
    %v275 = vld [vmem:[%s0 + $0x37c] sm:$0xf]
    %v276 = vld [vmem:[%s0 + $0x380] sm:$0xf]
    %v277 = vld [vmem:[%s0 + $0x384] sm:$0xf]
    %v278 = vld [vmem:[%s0 + $0x388] sm:$0xf]
    %v279 = vld [vmem:[%s0 + $0x38c] sm:$0xf]
    %v280 = vld [vmem:[%s0 + $0x390] sm:$0xf]
    %v281 = vld [vmem:[%s0 + $0x394] sm:$0xf]
    %v282 = vld [vmem:[%s0 + $0x398] sm:$0xf]
    %v283 = vld [vmem:[%s0 + $0x39c] sm:$0xf]
    %v284 = vld [vmem:[%s0 + $0x3a0] sm:$0xf]
    %v285 = vld [vmem:[%s0 + $0x3a4] sm:$0xf]
    %v286 = vld [vmem:[%s0 + $0x3a8] sm:$0xf]
    %v287 = vld [vmem:[%s0 + $0x3ac] sm:$0xf]
    %v288 = vld [vmem:[%s0 + $0x3b0] sm:$0xf]
    %v289 = vld [vmem:[%s0 + $0x3b4] sm:$0xf]
    %v290 = vld [vmem:[%s0 + $0x3b8] sm:$0xf]
    %v291 = vld [vmem:[%s0 + $0x3bc] sm:$0xf]
    %v292 = vld [vmem:[%s0 + $0x3c0] sm:$0xf]
    %v293 = vld [vmem:[%s0 + $0x3c4] sm:$0xf]
    %v294 = vld [vmem:[%s0 + $0x3c8] sm:$0xf]
    %v295 = vld [vmem:[%s0 + $0x3cc] sm:$0xf]
    %v296 = vld [vmem:[%s0 + $0x3d0] sm:$0xf]
    %v297 = vld [vmem:[%s0 + $0x3d4] sm:$0xf]
    %v298 = vld [vmem:[%s0 + $0x3d8] sm:$0xf]
    %v299 = vld [vmem:[%s0 + $0x3dc] sm:$0xf]
    %v300 = vld [vmem:[%s0 + $0x3e0] sm:$0xf]
    %v301 = vld [vmem:[%s0 + $0x3e4] sm:$0xf]
    %v302 = vld [vmem:[%s0 + $0x3e8] sm:$0xf]
    %v303 = vld [vmem:[%s0 + $0x3ec] sm:$0xf]
    %v304 = vld [vmem:[%s0 + $0x3f0] sm:$0xf]
    %v305 = vld [vmem:[%s0 + $0x3f4] sm:$0xf]
    %v306 = vld [vmem:[%s0 + $0x3f8] sm:$0xf]
    %v307 = vld [vmem:[%s0 + $0x3fc] sm:$0xf]
    %v308 = vld [vmem:[%s1] sm:$0xf]
    %v309 = vld [vmem:[%s1 + $0x4] sm:$0xf]
    %v310 = vld [vmem:[%s1 + $0x8] sm:$0xf]
    %v311 = vld [vmem:[%s1 + $0xc] sm:$0xf]
    %v312 = vld [vmem:[%s2] sm:$0x1]
    %v314 = vlaneseq
    %v315 = vshrl.u32 %v314, 7
    %v316 = vsub.s32 0, %v315
    %v317 = vrot.slane %v312, %v316
    %v575 = vunpack.c.l.b16 %v52
    %v576 = vunpack.c.l.b16 %v53
    %v577 = vunpack.c.l.b16 %v54
    %v578 = vunpack.c.l.b16 %v55
    %v579 = vunpack.c.l.b16 %v56
    %v580 = vunpack.c.l.b16 %v57
    %v581 = vunpack.c.l.b16 %v58
    %v582 = vunpack.c.l.b16 %v59
    %v583 = vunpack.c.l.b16 %v60
    %v584 = vunpack.c.l.b16 %v61
    %v585 = vunpack.c.l.b16 %v62
    %v586 = vunpack.c.l.b16 %v63
    %v587 = vunpack.c.l.b16 %v64
    %v588 = vunpack.c.l.b16 %v65
    %v589 = vunpack.c.l.b16 %v66
    %v590 = vunpack.c.l.b16 %v67
    %v591 = vunpack.c.l.b16 %v68
    %v592 = vunpack.c.l.b16 %v69
    %v593 = vunpack.c.l.b16 %v70
    %v594 = vunpack.c.l.b16 %v71
    %v595 = vunpack.c.l.b16 %v72
    %v596 = vunpack.c.l.b16 %v73
    %v597 = vunpack.c.l.b16 %v74
    %v598 = vunpack.c.l.b16 %v75
    %v599 = vunpack.c.l.b16 %v76
    %v600 = vunpack.c.l.b16 %v77
    %v601 = vunpack.c.l.b16 %v78
    %v602 = vunpack.c.l.b16 %v79
    %v603 = vunpack.c.l.b16 %v80
    %v604 = vunpack.c.l.b16 %v81
    %v605 = vunpack.c.l.b16 %v82
    %v606 = vunpack.c.l.b16 %v83
    %v607 = vunpack.c.l.b16 %v84
    %v608 = vunpack.c.l.b16 %v85
    %v609 = vunpack.c.l.b16 %v86
    %v610 = vunpack.c.l.b16 %v87
    %v611 = vunpack.c.l.b16 %v88
    %v612 = vunpack.c.l.b16 %v89
    %v613 = vunpack.c.l.b16 %v90
    %v614 = vunpack.c.l.b16 %v91
    %v615 = vunpack.c.l.b16 %v92
    %v616 = vunpack.c.l.b16 %v93
    %v617 = vunpack.c.l.b16 %v94
    %v618 = vunpack.c.l.b16 %v95
    %v619 = vunpack.c.l.b16 %v96
    %v620 = vunpack.c.l.b16 %v97
    %v621 = vunpack.c.l.b16 %v98
    %v622 = vunpack.c.l.b16 %v99
    %v623 = vunpack.c.l.b16 %v100
    %v624 = vunpack.c.l.b16 %v101
    %v625 = vunpack.c.l.b16 %v102
    %v626 = vunpack.c.l.b16 %v103
    %v627 = vunpack.c.l.b16 %v104
    %v628 = vunpack.c.l.b16 %v105
    %v629 = vunpack.c.l.b16 %v106
    %v630 = vunpack.c.l.b16 %v107
    %v631 = vunpack.c.l.b16 %v108
    %v632 = vunpack.c.l.b16 %v109
    %v633 = vunpack.c.l.b16 %v110
    %v634 = vunpack.c.l.b16 %v111
    %v635 = vunpack.c.l.b16 %v112
    %v636 = vunpack.c.l.b16 %v113
    %v637 = vunpack.c.l.b16 %v114
    %v638 = vunpack.c.l.b16 %v115
    %v639 = vunpack.c.l.b16 %v116
    %v640 = vunpack.c.l.b16 %v117
    %v641 = vunpack.c.l.b16 %v118
    %v642 = vunpack.c.l.b16 %v119
    %v643 = vunpack.c.l.b16 %v120
    %v644 = vunpack.c.l.b16 %v121
    %v645 = vunpack.c.l.b16 %v122
    %v646 = vunpack.c.l.b16 %v123
    %v647 = vunpack.c.l.b16 %v124
    %v648 = vunpack.c.l.b16 %v125
    %v649 = vunpack.c.l.b16 %v126
    %v650 = vunpack.c.l.b16 %v127
    %v651 = vunpack.c.l.b16 %v128
    %v652 = vunpack.c.l.b16 %v129
    %v653 = vunpack.c.l.b16 %v130
    %v654 = vunpack.c.l.b16 %v131
    %v655 = vunpack.c.l.b16 %v132
    %v656 = vunpack.c.l.b16 %v133
    %v657 = vunpack.c.l.b16 %v134
    %v658 = vunpack.c.l.b16 %v135
    %v659 = vunpack.c.l.b16 %v136
    %v660 = vunpack.c.l.b16 %v137
    %v661 = vunpack.c.l.b16 %v138
    %v662 = vunpack.c.l.b16 %v139
    %v663 = vunpack.c.l.b16 %v140
    %v664 = vunpack.c.l.b16 %v141
    %v665 = vunpack.c.l.b16 %v142
    %v666 = vunpack.c.l.b16 %v143
    %v667 = vunpack.c.l.b16 %v144
    %v668 = vunpack.c.l.b16 %v145
    %v669 = vunpack.c.l.b16 %v146
    %v670 = vunpack.c.l.b16 %v147
    %v671 = vunpack.c.l.b16 %v148
    %v672 = vunpack.c.l.b16 %v149
    %v673 = vunpack.c.l.b16 %v150
    %v674 = vunpack.c.l.b16 %v151
    %v675 = vunpack.c.l.b16 %v152
    %v676 = vunpack.c.l.b16 %v153
    %v677 = vunpack.c.l.b16 %v154
    %v678 = vunpack.c.l.b16 %v155
    %v679 = vunpack.c.l.b16 %v156
    %v680 = vunpack.c.l.b16 %v157
    %v681 = vunpack.c.l.b16 %v158
    %v682 = vunpack.c.l.b16 %v159
    %v683 = vunpack.c.l.b16 %v160
    %v684 = vunpack.c.l.b16 %v161
    %v685 = vunpack.c.l.b16 %v162
    %v686 = vunpack.c.l.b16 %v163
    %v687 = vunpack.c.l.b16 %v164
    %v688 = vunpack.c.l.b16 %v165
    %v689 = vunpack.c.l.b16 %v166
    %v690 = vunpack.c.l.b16 %v167
    %v691 = vunpack.c.l.b16 %v168
    %v692 = vunpack.c.l.b16 %v169
    %v693 = vunpack.c.l.b16 %v170
    %v694 = vunpack.c.l.b16 %v171
    %v695 = vunpack.c.l.b16 %v172
    %v696 = vunpack.c.l.b16 %v173
    %v697 = vunpack.c.l.b16 %v174
    %v698 = vunpack.c.l.b16 %v175
    %v699 = vunpack.c.l.b16 %v176
    %v700 = vunpack.c.l.b16 %v177
    %v701 = vunpack.c.l.b16 %v178
    %v702 = vunpack.c.l.b16 %v179
    %v703 = vunpack.c.l.b16 %v180
    %v704 = vunpack.c.l.b16 %v181
    %v705 = vunpack.c.l.b16 %v182
    %v706 = vunpack.c.l.b16 %v183
    %v707 = vunpack.c.l.b16 %v184
    %v708 = vunpack.c.l.b16 %v185
    %v709 = vunpack.c.l.b16 %v186
    %v710 = vunpack.c.l.b16 %v187
    %v711 = vunpack.c.l.b16 %v188
    %v712 = vunpack.c.l.b16 %v189
    %v713 = vunpack.c.l.b16 %v190
    %v714 = vunpack.c.l.b16 %v191
    %v715 = vunpack.c.l.b16 %v192
    %v716 = vunpack.c.l.b16 %v193
    %v717 = vunpack.c.l.b16 %v194
    %v718 = vunpack.c.l.b16 %v195
    %v719 = vunpack.c.l.b16 %v196
    %v720 = vunpack.c.l.b16 %v197
    %v721 = vunpack.c.l.b16 %v198
    %v722 = vunpack.c.l.b16 %v199
    %v723 = vunpack.c.l.b16 %v200
    %v724 = vunpack.c.l.b16 %v201
    %v725 = vunpack.c.l.b16 %v202
    %v726 = vunpack.c.l.b16 %v203
    %v727 = vunpack.c.l.b16 %v204
    %v728 = vunpack.c.l.b16 %v205
    %v729 = vunpack.c.l.b16 %v206
    %v730 = vunpack.c.l.b16 %v207
    %v731 = vunpack.c.l.b16 %v208
    %v732 = vunpack.c.l.b16 %v209
    %v733 = vunpack.c.l.b16 %v210
    %v734 = vunpack.c.l.b16 %v211
    %v735 = vunpack.c.l.b16 %v212
    %v736 = vunpack.c.l.b16 %v213
    %v737 = vunpack.c.l.b16 %v214
    %v738 = vunpack.c.l.b16 %v215
    %v739 = vunpack.c.l.b16 %v216
    %v740 = vunpack.c.l.b16 %v217
    %v741 = vunpack.c.l.b16 %v218
    %v742 = vunpack.c.l.b16 %v219
    %v743 = vunpack.c.l.b16 %v220
    %v744 = vunpack.c.l.b16 %v221
    %v745 = vunpack.c.l.b16 %v222
    %v746 = vunpack.c.l.b16 %v223
    %v747 = vunpack.c.l.b16 %v224
    %v748 = vunpack.c.l.b16 %v225
    %v749 = vunpack.c.l.b16 %v226
    %v750 = vunpack.c.l.b16 %v227
    %v751 = vunpack.c.l.b16 %v228
    %v752 = vunpack.c.l.b16 %v229
    %v753 = vunpack.c.l.b16 %v230
    %v754 = vunpack.c.l.b16 %v231
    %v755 = vunpack.c.l.b16 %v232
    %v756 = vunpack.c.l.b16 %v233
    %v757 = vunpack.c.l.b16 %v234
    %v758 = vunpack.c.l.b16 %v235
    %v759 = vunpack.c.l.b16 %v236
    %v760 = vunpack.c.l.b16 %v237
    %v761 = vunpack.c.l.b16 %v238
    %v762 = vunpack.c.l.b16 %v239
    %v763 = vunpack.c.l.b16 %v240
    %v764 = vunpack.c.l.b16 %v241
    %v765 = vunpack.c.l.b16 %v242
    %v766 = vunpack.c.l.b16 %v243
    %v767 = vunpack.c.l.b16 %v244
    %v768 = vunpack.c.l.b16 %v245
    %v769 = vunpack.c.l.b16 %v246
    %v770 = vunpack.c.l.b16 %v247
    %v771 = vunpack.c.l.b16 %v248
    %v772 = vunpack.c.l.b16 %v249
    %v773 = vunpack.c.l.b16 %v250
    %v774 = vunpack.c.l.b16 %v251
    %v775 = vunpack.c.l.b16 %v252
    %v776 = vunpack.c.l.b16 %v253
    %v777 = vunpack.c.l.b16 %v254
    %v778 = vunpack.c.l.b16 %v255
    %v779 = vunpack.c.l.b16 %v256
    %v780 = vunpack.c.l.b16 %v257
    %v781 = vunpack.c.l.b16 %v258
    %v782 = vunpack.c.l.b16 %v259
    %v783 = vunpack.c.l.b16 %v260
    %v784 = vunpack.c.l.b16 %v261
    %v785 = vunpack.c.l.b16 %v262
    %v786 = vunpack.c.l.b16 %v263
    %v787 = vunpack.c.l.b16 %v264
    %v788 = vunpack.c.l.b16 %v265
    %v789 = vunpack.c.l.b16 %v266
    %v790 = vunpack.c.l.b16 %v267
    %v791 = vunpack.c.l.b16 %v268
    %v792 = vunpack.c.l.b16 %v269
    %v793 = vunpack.c.l.b16 %v270
    %v794 = vunpack.c.l.b16 %v271
    %v795 = vunpack.c.l.b16 %v272
    %v796 = vunpack.c.l.b16 %v273
    %v797 = vunpack.c.l.b16 %v274
    %v798 = vunpack.c.l.b16 %v275
    %v799 = vunpack.c.l.b16 %v276
    %v800 = vunpack.c.l.b16 %v277
    %v801 = vunpack.c.l.b16 %v278
    %v802 = vunpack.c.l.b16 %v279
    %v803 = vunpack.c.l.b16 %v280
    %v804 = vunpack.c.l.b16 %v281
    %v805 = vunpack.c.l.b16 %v282
    %v806 = vunpack.c.l.b16 %v283
    %v807 = vunpack.c.l.b16 %v284
    %v808 = vunpack.c.l.b16 %v285
    %v809 = vunpack.c.l.b16 %v286
    %v810 = vunpack.c.l.b16 %v287
    %v811 = vunpack.c.l.b16 %v288
    %v812 = vunpack.c.l.b16 %v289
    %v813 = vunpack.c.l.b16 %v290
    %v814 = vunpack.c.l.b16 %v291
    %v815 = vunpack.c.l.b16 %v292
    %v816 = vunpack.c.l.b16 %v293
    %v817 = vunpack.c.l.b16 %v294
    %v818 = vunpack.c.l.b16 %v295
    %v819 = vunpack.c.l.b16 %v296
    %v820 = vunpack.c.l.b16 %v297
    %v821 = vunpack.c.l.b16 %v298
    %v822 = vunpack.c.l.b16 %v299
    %v823 = vunpack.c.l.b16 %v300
    %v824 = vunpack.c.l.b16 %v301
    %v825 = vunpack.c.l.b16 %v302
    %v826 = vunpack.c.l.b16 %v303
    %v827 = vunpack.c.l.b16 %v304
    %v828 = vunpack.c.l.b16 %v305
    %v829 = vunpack.c.l.b16 %v306
    %v830 = vunpack.c.l.b16 %v307
    %v831 = vpack.c.b16 %v576, %v575
    %v832 = vpack.c.b16 %v578, %v577
    %v833 = vpack.c.b16 %v580, %v579
    %v834 = vpack.c.b16 %v582, %v581
    %v835 = vpack.c.b16 %v584, %v583
    %v836 = vpack.c.b16 %v586, %v585
    %v837 = vpack.c.b16 %v588, %v587
    %v838 = vpack.c.b16 %v590, %v589
    %v839 = vpack.c.b16 %v592, %v591
    %v840 = vpack.c.b16 %v594, %v593
    %v841 = vpack.c.b16 %v596, %v595
    %v842 = vpack.c.b16 %v598, %v597
    %v843 = vpack.c.b16 %v600, %v599
    %v844 = vpack.c.b16 %v602, %v601
    %v845 = vpack.c.b16 %v604, %v603
    %v846 = vpack.c.b16 %v606, %v605
    %v847 = vpack.c.b16 %v608, %v607
    %v848 = vpack.c.b16 %v610, %v609
    %v849 = vpack.c.b16 %v612, %v611
    %v850 = vpack.c.b16 %v614, %v613
    %v851 = vpack.c.b16 %v616, %v615
    %v852 = vpack.c.b16 %v618, %v617
    %v853 = vpack.c.b16 %v620, %v619
    %v854 = vpack.c.b16 %v622, %v621
    %v855 = vpack.c.b16 %v624, %v623
    %v856 = vpack.c.b16 %v626, %v625
    %v857 = vpack.c.b16 %v628, %v627
    %v858 = vpack.c.b16 %v630, %v629
    %v859 = vpack.c.b16 %v632, %v631
    %v860 = vpack.c.b16 %v634, %v633
    %v861 = vpack.c.b16 %v636, %v635
    %v862 = vpack.c.b16 %v638, %v637
    %v863 = vpack.c.b16 %v640, %v639
    %v864 = vpack.c.b16 %v642, %v641
    %v865 = vpack.c.b16 %v644, %v643
    %v866 = vpack.c.b16 %v646, %v645
    %v867 = vpack.c.b16 %v648, %v647
    %v868 = vpack.c.b16 %v650, %v649
    %v869 = vpack.c.b16 %v652, %v651
    %v870 = vpack.c.b16 %v654, %v653
    %v871 = vpack.c.b16 %v656, %v655
    %v872 = vpack.c.b16 %v658, %v657
    %v873 = vpack.c.b16 %v660, %v659
    %v874 = vpack.c.b16 %v662, %v661
    %v875 = vpack.c.b16 %v664, %v663
    %v876 = vpack.c.b16 %v666, %v665
    %v877 = vpack.c.b16 %v668, %v667
    %v878 = vpack.c.b16 %v670, %v669
    %v879 = vpack.c.b16 %v672, %v671
    %v880 = vpack.c.b16 %v674, %v673
    %v881 = vpack.c.b16 %v676, %v675
    %v882 = vpack.c.b16 %v678, %v677
    %v883 = vpack.c.b16 %v680, %v679
    %v884 = vpack.c.b16 %v682, %v681
    %v885 = vpack.c.b16 %v684, %v683
    %v886 = vpack.c.b16 %v686, %v685
    %v887 = vpack.c.b16 %v688, %v687
    %v888 = vpack.c.b16 %v690, %v689
    %v889 = vpack.c.b16 %v692, %v691
    %v890 = vpack.c.b16 %v694, %v693
    %v891 = vpack.c.b16 %v696, %v695
    %v892 = vpack.c.b16 %v698, %v697
    %v893 = vpack.c.b16 %v700, %v699
    %v894 = vpack.c.b16 %v702, %v701
    %v895 = vpack.c.b16 %v704, %v703
    %v896 = vpack.c.b16 %v706, %v705
    %v897 = vpack.c.b16 %v708, %v707
    %v898 = vpack.c.b16 %v710, %v709
    %v899 = vpack.c.b16 %v712, %v711
    %v900 = vpack.c.b16 %v714, %v713
    %v901 = vpack.c.b16 %v716, %v715
    %v902 = vpack.c.b16 %v718, %v717
    %v903 = vpack.c.b16 %v720, %v719
    %v904 = vpack.c.b16 %v722, %v721
    %v905 = vpack.c.b16 %v724, %v723
    %v906 = vpack.c.b16 %v726, %v725
    %v907 = vpack.c.b16 %v728, %v727
    %v908 = vpack.c.b16 %v730, %v729
    %v909 = vpack.c.b16 %v732, %v731
    %v910 = vpack.c.b16 %v734, %v733
    %v911 = vpack.c.b16 %v736, %v735
    %v912 = vpack.c.b16 %v738, %v737
    %v913 = vpack.c.b16 %v740, %v739
    %v914 = vpack.c.b16 %v742, %v741
    %v915 = vpack.c.b16 %v744, %v743
    %v916 = vpack.c.b16 %v746, %v745
    %v917 = vpack.c.b16 %v748, %v747
    %v918 = vpack.c.b16 %v750, %v749
    %v919 = vpack.c.b16 %v752, %v751
    %v920 = vpack.c.b16 %v754, %v753
    %v921 = vpack.c.b16 %v756, %v755
    %v922 = vpack.c.b16 %v758, %v757
    %v923 = vpack.c.b16 %v760, %v759
    %v924 = vpack.c.b16 %v762, %v761
    %v925 = vpack.c.b16 %v764, %v763
    %v926 = vpack.c.b16 %v766, %v765
    %v927 = vpack.c.b16 %v768, %v767
    %v928 = vpack.c.b16 %v770, %v769
    %v929 = vpack.c.b16 %v772, %v771
    %v930 = vpack.c.b16 %v774, %v773
    %v931 = vpack.c.b16 %v776, %v775
    %v932 = vpack.c.b16 %v778, %v777
    %v933 = vpack.c.b16 %v780, %v779
    %v934 = vpack.c.b16 %v782, %v781
    %v935 = vpack.c.b16 %v784, %v783
    %v936 = vpack.c.b16 %v786, %v785
    %v937 = vpack.c.b16 %v788, %v787
    %v938 = vpack.c.b16 %v790, %v789
    %v939 = vpack.c.b16 %v792, %v791
    %v940 = vpack.c.b16 %v794, %v793
    %v941 = vpack.c.b16 %v796, %v795
    %v942 = vpack.c.b16 %v798, %v797
    %v943 = vpack.c.b16 %v800, %v799
    %v944 = vpack.c.b16 %v802, %v801
    %v945 = vpack.c.b16 %v804, %v803
    %v946 = vpack.c.b16 %v806, %v805
    %v947 = vpack.c.b16 %v808, %v807
    %v948 = vpack.c.b16 %v810, %v809
    %v949 = vpack.c.b16 %v812, %v811
    %v950 = vpack.c.b16 %v814, %v813
    %v951 = vpack.c.b16 %v816, %v815
    %v952 = vpack.c.b16 %v818, %v817
    %v953 = vpack.c.b16 %v820, %v819
    %v954 = vpack.c.b16 %v822, %v821
    %v955 = vpack.c.b16 %v824, %v823
    %v956 = vpack.c.b16 %v826, %v825
    %v957 = vpack.c.b16 %v828, %v827
    %v958 = vpack.c.b16 %v830, %v829
    %v963 = vunpack.c.l.b16 %v308
    %v964 = vunpack.c.l.b16 %v309
    %v965 = vunpack.c.l.b16 %v310
    %v966 = vunpack.c.l.b16 %v311
    %v967 = vpack.c.b16 %v964, %v963
    %v968 = vpack.c.b16 %v966, %v965
    %vm971 = vcmask 261120
    %v973 = vsel %vm971, %v831, 0
    %v976 = vsel %vm971, %v832, 0
    %v979 = vsel %vm971, %v833, 0
    %v982 = vsel %vm971, %v834, 0
    %v985 = vsel %vm971, %v835, 0
    %v988 = vsel %vm971, %v836, 0
    %v991 = vsel %vm971, %v837, 0
    %v994 = vsel %vm971, %v838, 0
    %v997 = vsel %vm971, %v839, 0
    %v1000 = vsel %vm971, %v840, 0
    %v1003 = vsel %vm971, %v841, 0
    %v1006 = vsel %vm971, %v842, 0
    %v1009 = vsel %vm971, %v843, 0
    %v1012 = vsel %vm971, %v844, 0
    %v1015 = vsel %vm971, %v845, 0
    %v1018 = vsel %vm971, %v846, 0
    %v1021 = vsel %vm971, %v847, 0
    %v1024 = vsel %vm971, %v848, 0
    %v1027 = vsel %vm971, %v849, 0
    %v1030 = vsel %vm971, %v850, 0
    %v1033 = vsel %vm971, %v851, 0
    %v1036 = vsel %vm971, %v852, 0
    %v1039 = vsel %vm971, %v853, 0
    %v1042 = vsel %vm971, %v854, 0
    %v1045 = vsel %vm971, %v855, 0
    %v1048 = vsel %vm971, %v856, 0
    %v1051 = vsel %vm971, %v857, 0
    %v1054 = vsel %vm971, %v858, 0
    %v1057 = vsel %vm971, %v859, 0
    %v1060 = vsel %vm971, %v860, 0
    %v1063 = vsel %vm971, %v861, 0
    %v1066 = vsel %vm971, %v862, 0
    %v1069 = vsel %vm971, %v863, 0
    %v1072 = vsel %vm971, %v864, 0
    %v1075 = vsel %vm971, %v865, 0
    %v1078 = vsel %vm971, %v866, 0
    %v1081 = vsel %vm971, %v867, 0
    %v1084 = vsel %vm971, %v868, 0
    %v1087 = vsel %vm971, %v869, 0
    %v1090 = vsel %vm971, %v870, 0
    %v1093 = vsel %vm971, %v871, 0
    %v1096 = vsel %vm971, %v872, 0
    %v1099 = vsel %vm971, %v873, 0
    %v1102 = vsel %vm971, %v874, 0
    %v1105 = vsel %vm971, %v875, 0
    %v1108 = vsel %vm971, %v876, 0
    %v1111 = vsel %vm971, %v877, 0
    %v1114 = vsel %vm971, %v878, 0
    %v1117 = vsel %vm971, %v879, 0
    %v1120 = vsel %vm971, %v880, 0
    %v1123 = vsel %vm971, %v881, 0
    %v1126 = vsel %vm971, %v882, 0
    %v1129 = vsel %vm971, %v883, 0
    %v1132 = vsel %vm971, %v884, 0
    %v1135 = vsel %vm971, %v885, 0
    %v1138 = vsel %vm971, %v886, 0
    %v1141 = vsel %vm971, %v887, 0
    %v1144 = vsel %vm971, %v888, 0
    %v1147 = vsel %vm971, %v889, 0
    %v1150 = vsel %vm971, %v890, 0
    %v1153 = vsel %vm971, %v891, 0
    %v1156 = vsel %vm971, %v892, 0
    %v1159 = vsel %vm971, %v893, 0
    %v1162 = vsel %vm971, %v894, 0
    %v1165 = vsel %vm971, %v895, 0
    %v1168 = vsel %vm971, %v896, 0
    %v1171 = vsel %vm971, %v897, 0
    %v1174 = vsel %vm971, %v898, 0
    %v1177 = vsel %vm971, %v899, 0
    %v1180 = vsel %vm971, %v900, 0
    %v1183 = vsel %vm971, %v901, 0
    %v1186 = vsel %vm971, %v902, 0
    %v1189 = vsel %vm971, %v903, 0
    %v1192 = vsel %vm971, %v904, 0
    %v1195 = vsel %vm971, %v905, 0
    %v1198 = vsel %vm971, %v906, 0
    %v1201 = vsel %vm971, %v907, 0
    %v1204 = vsel %vm971, %v908, 0
    %v1207 = vsel %vm971, %v909, 0
    %v1210 = vsel %vm971, %v910, 0
    %v1213 = vsel %vm971, %v911, 0
    %v1216 = vsel %vm971, %v912, 0
    %v1219 = vsel %vm971, %v913, 0
    %v1222 = vsel %vm971, %v914, 0
    %v1225 = vsel %vm971, %v915, 0
    %v1228 = vsel %vm971, %v916, 0
    %v1231 = vsel %vm971, %v917, 0
    %v1234 = vsel %vm971, %v918, 0
    %v1237 = vsel %vm971, %v919, 0
    %v1240 = vsel %vm971, %v920, 0
    %v1243 = vsel %vm971, %v921, 0
    %v1246 = vsel %vm971, %v922, 0
    %v1249 = vsel %vm971, %v923, 0
    %v1252 = vsel %vm971, %v924, 0
    %v1255 = vsel %vm971, %v925, 0
    %v1258 = vsel %vm971, %v926, 0
    %v1261 = vsel %vm971, %v927, 0
    %v1264 = vsel %vm971, %v928, 0
    %v1267 = vsel %vm971, %v929, 0
    %v1270 = vsel %vm971, %v930, 0
    %v1273 = vsel %vm971, %v931, 0
    %v1276 = vsel %vm971, %v932, 0
    %v1279 = vsel %vm971, %v933, 0
    %v1282 = vsel %vm971, %v934, 0
    %v1285 = vsel %vm971, %v935, 0
    %v1288 = vsel %vm971, %v936, 0
    %v1291 = vsel %vm971, %v937, 0
    %v1294 = vsel %vm971, %v938, 0
    %v1297 = vsel %vm971, %v939, 0
    %v1300 = vsel %vm971, %v940, 0
    %v1303 = vsel %vm971, %v941, 0
    %v1306 = vsel %vm971, %v942, 0
    %v1309 = vsel %vm971, %v943, 0
    %v1312 = vsel %vm971, %v944, 0
    %v1315 = vsel %vm971, %v945, 0
    %v1318 = vsel %vm971, %v946, 0
    %v1321 = vsel %vm971, %v947, 0
    %v1324 = vsel %vm971, %v948, 0
    %v1327 = vsel %vm971, %v949, 0
    %v1330 = vsel %vm971, %v950, 0
    %v1333 = vsel %vm971, %v951, 0
    %v1336 = vsel %vm971, %v952, 0
    %v1339 = vsel %vm971, %v953, 0
    %v1342 = vsel %vm971, %v954, 0
    %v1345 = vsel %vm971, %v955, 0
    %v1348 = vsel %vm971, %v956, 0
    %v1351 = vsel %vm971, %v957, 0
    %v1354 = vsel %vm971, %v958, 0
    %1356 = vmatprep.subr.bf16.mxu0 0
    %1357 = vmatpush1.bf16.msra.mxu0 %v967
    %1358 = vmatprep.subr.bf16.mxu0 0
    %1359 = vmatpush1.bf16.msra.mxu0 %v968
    %1360 = vmatprep.subr.bf16.mxu0 0
    %1361 = vmatpush1.bf16.msra.mxu0 0
    %1362 = vmatprep.subr.bf16.mxu0 0
    %1363 = vmatpush1.bf16.msra.mxu0 0
    %1364 = vmatprep.subr.bf16.mxu0 0
    %1365 = vmatpush1.bf16.msra.mxu0 0
    %1366 = vmatprep.subr.bf16.mxu0 0
    %1367 = vmatpush1.bf16.msra.mxu0 0
    %1368 = vmatprep.subr.bf16.mxu0 0
    %1369 = vmatpush1.bf16.msra.mxu0 0
    %1370 = vmatprep.subr.bf16.mxu0 0
    %1371 = vmatpush1.bf16.msra.mxu0 0
    %1372 = vmatprep.subr.bf16.mxu0 0
    %1373 = vmatpush1.bf16.msra.mxu0 0
    %1374 = vmatprep.subr.bf16.mxu0 0
    %1375 = vmatpush1.bf16.msra.mxu0 0
    %1376 = vmatprep.subr.bf16.mxu0 0
    %1377 = vmatpush1.bf16.msra.mxu0 0
    %1378 = vmatprep.subr.bf16.mxu0 0
    %1379 = vmatpush1.bf16.msra.mxu0 0
    %1380 = vmatprep.subr.bf16.mxu0 0
    %1381 = vmatpush1.bf16.msra.mxu0 0
    %1382 = vmatprep.subr.bf16.mxu0 0
    %1383 = vmatpush1.bf16.msra.mxu0 0
    %1384 = vmatprep.subr.bf16.mxu0 0
    %1385 = vmatpush1.bf16.msra.mxu0 0
    %1386 = vmatprep.subr.bf16.mxu0 0
    %1387 = vmatpush1.bf16.msra.mxu0 0
    %1388 = vmatprep.mubr.bf16.mxu0 0
    %1389 = vmatmul.mubr.bf16.gmra.mrb[0].mxu0 %v973
    %v1390 = vpop.f32.mrb[0].mxu0
    %v1391 = vadd.f32 %v317, %v1390
    %v1392 = vpop.f32.mrb[0].mxu0
    %v1393 = vpop.f32.mrb[0].mxu0
    %v1394 = vadd.f32 %v317, %v1393
    %v1395 = vpop.f32.mrb[0].mxu0
    %1396 = vmatprep.mubr.bf16.mxu0 0
    %1397 = vmatmul.mubr.bf16.gmra.mrb[0].mxu0 %v976
    %v1398 = vpop.f32.mrb[0].mxu0
    %v1399 = vadd.f32 %v317, %v1398
    %v1400 = vpop.f32.mrb[0].mxu0
    %v1401 = vpop.f32.mrb[0].mxu0
    %v1402 = vadd.f32 %v317, %v1401
    %v1403 = vpop.f32.mrb[0].mxu0
    %1404 = vmatprep.mubr.bf16.mxu0 0
    %1405 = vmatmul.mubr.bf16.gmra.mrb[0].mxu0 %v979
    %v1406 = vpop.f32.mrb[0].mxu0
    %v1407 = vadd.f32 %v317, %v1406
    %v1408 = vpop.f32.mrb[0].mxu0
    %v1409 = vpop.f32.mrb[0].mxu0
    %v1410 = vadd.f32 %v317, %v1409
    %v1411 = vpop.f32.mrb[0].mxu0
    %1412 = vmatprep.mubr.bf16.mxu0 0
    %1413 = vmatmul.mubr.bf16.gmra.mrb[0].mxu0 %v982
    %v1414 = vpop.f32.mrb[0].mxu0
    %v1415 = vadd.f32 %v317, %v1414
    %v1416 = vpop.f32.mrb[0].mxu0
    %v1417 = vpop.f32.mrb[0].mxu0
    %v1418 = vadd.f32 %v317, %v1417
    %v1419 = vpop.f32.mrb[0].mxu0
    %1420 = vmatprep.mubr.bf16.mxu0 0
    %1421 = vmatmul.mubr.bf16.gmra.mrb[0].mxu0 %v985
    %v1422 = vpop.f32.mrb[0].mxu0
    %v1423 = vadd.f32 %v317, %v1422
    %v1424 = vpop.f32.mrb[0].mxu0
    %v1425 = vpop.f32.mrb[0].mxu0
    %v1426 = vadd.f32 %v317, %v1425
    %v1427 = vpop.f32.mrb[0].mxu0
    %1428 = vmatprep.mubr.bf16.mxu0 0
    %1429 = vmatmul.mubr.bf16.gmra.mrb[0].mxu0 %v988
    %v1430 = vpop.f32.mrb[0].mxu0
    %v1431 = vadd.f32 %v317, %v1430
    %v1432 = vpop.f32.mrb[0].mxu0
    %v1433 = vpop.f32.mrb[0].mxu0
    %v1434 = vadd.f32 %v317, %v1433
    %v1435 = vpop.f32.mrb[0].mxu0
    %1436 = vmatprep.mubr.bf16.mxu0 0
    %1437 = vmatmul.mubr.bf16.gmra.mrb[0].mxu0 %v991
    %v1438 = vpop.f32.mrb[0].mxu0
    %v1439 = vadd.f32 %v317, %v1438
    %v1440 = vpop.f32.mrb[0].mxu0
    %v1441 = vpop.f32.mrb[0].mxu0
    %v1442 = vadd.f32 %v317, %v1441
    %v1443 = vpop.f32.mrb[0].mxu0
    %1444 = vmatprep.mubr.bf16.mxu0 0
    %1445 = vmatmul.mubr.bf16.gmra.mrb[0].mxu0 %v994
    %v1446 = vpop.f32.mrb[0].mxu0
    %v1447 = vadd.f32 %v317, %v1446
    %v1448 = vpop.f32.mrb[0].mxu0
    %v1449 = vpop.f32.mrb[0].mxu0
    %v1450 = vadd.f32 %v317, %v1449
    %v1451 = vpop.f32.mrb[0].mxu0
    %1452 = vmatprep.mubr.bf16.mxu0 0
    %1453 = vmatmul.mubr.bf16.gmra.mrb[0].mxu0 %v997
    %v1454 = vpop.f32.mrb[0].mxu0
    %v1455 = vadd.f32 %v317, %v1454
    %v1456 = vpop.f32.mrb[0].mxu0
    %v1457 = vpop.f32.mrb[0].mxu0
    %v1458 = vadd.f32 %v317, %v1457
    %v1459 = vpop.f32.mrb[0].mxu0
    %1460 = vmatprep.mubr.bf16.mxu0 0
    %1461 = vmatmul.mubr.bf16.gmra.mrb[0].mxu0 %v1000
    %v1462 = vpop.f32.mrb[0].mxu0
    %v1463 = vadd.f32 %v317, %v1462
    %v1464 = vpop.f32.mrb[0].mxu0
    %v1465 = vpop.f32.mrb[0].mxu0
    %v1466 = vadd.f32 %v317, %v1465
    %v1467 = vpop.f32.mrb[0].mxu0
    %1468 = vmatprep.mubr.bf16.mxu0 0
    %1469 = vmatmul.mubr.bf16.gmra.mrb[0].mxu0 %v1003
    %v1470 = vpop.f32.mrb[0].mxu0
    %v1471 = vadd.f32 %v317, %v1470
    %v1472 = vpop.f32.mrb[0].mxu0
    %v1473 = vpop.f32.mrb[0].mxu0
    %v1474 = vadd.f32 %v317, %v1473
    %v1475 = vpop.f32.mrb[0].mxu0
    %1476 = vmatprep.mubr.bf16.mxu0 0
    %1477 = vmatmul.mubr.bf16.gmra.mrb[0].mxu0 %v1006
    %v1478 = vpop.f32.mrb[0].mxu0
    %v1479 = vadd.f32 %v317, %v1478
    %v1480 = vpop.f32.mrb[0].mxu0
    %v1481 = vpop.f32.mrb[0].mxu0
    %v1482 = vadd.f32 %v317, %v1481
    %v1483 = vpop.f32.mrb[0].mxu0
    %1484 = vmatprep.mubr.bf16.mxu0 0
    %1485 = vmatmul.mubr.bf16.gmra.mrb[0].mxu0 %v1009
    %v1486 = vpop.f32.mrb[0].mxu0
    %v1487 = vadd.f32 %v317, %v1486
    %v1488 = vpop.f32.mrb[0].mxu0
    %v1489 = vpop.f32.mrb[0].mxu0
    %v1490 = vadd.f32 %v317, %v1489
    %v1491 = vpop.f32.mrb[0].mxu0
    %1492 = vmatprep.mubr.bf16.mxu0 0
    %1493 = vmatmul.mubr.bf16.gmra.mrb[0].mxu0 %v1012
    %v1494 = vpop.f32.mrb[0].mxu0
    %v1495 = vadd.f32 %v317, %v1494
    %v1496 = vpop.f32.mrb[0].mxu0
    %v1497 = vpop.f32.mrb[0].mxu0
    %v1498 = vadd.f32 %v317, %v1497
    %v1499 = vpop.f32.mrb[0].mxu0
    %1500 = vmatprep.mubr.bf16.mxu0 0
    %1501 = vmatmul.mubr.bf16.gmra.mrb[0].mxu0 %v1015
    %v1502 = vpop.f32.mrb[0].mxu0
    %v1503 = vadd.f32 %v317, %v1502
    %v1504 = vpop.f32.mrb[0].mxu0
    %v1505 = vpop.f32.mrb[0].mxu0
    %v1506 = vadd.f32 %v317, %v1505
    %v1507 = vpop.f32.mrb[0].mxu0
    %1508 = vmatprep.mubr.bf16.mxu0 0
    %1509 = vmatmul.mubr.bf16.gmra.mrb[0].mxu0 %v1018
    %v1510 = vpop.f32.mrb[0].mxu0
    %v1511 = vadd.f32 %v317, %v1510
    %v1512 = vpop.f32.mrb[0].mxu0
    %v1513 = vpop.f32.mrb[0].mxu0
    %v1514 = vadd.f32 %v317, %v1513
    %v1515 = vpop.f32.mrb[0].mxu0
    %1516 = vmatprep.mubr.bf16.mxu0 0
    %1517 = vmatmul.mubr.bf16.gmra.mrb[0].mxu0 %v1021
    %v1518 = vpop.f32.mrb[0].mxu0
    %v1519 = vadd.f32 %v317, %v1518
    %v1520 = vpop.f32.mrb[0].mxu0
    %v1521 = vpop.f32.mrb[0].mxu0
    %v1522 = vadd.f32 %v317, %v1521
    %v1523 = vpop.f32.mrb[0].mxu0
    %1524 = vmatprep.mubr.bf16.mxu0 0
    %1525 = vmatmul.mubr.bf16.gmra.mrb[0].mxu0 %v1024
    %v1526 = vpop.f32.mrb[0].mxu0
    %v1527 = vadd.f32 %v317, %v1526
    %v1528 = vpop.f32.mrb[0].mxu0
    %v1529 = vpop.f32.mrb[0].mxu0
    %v1530 = vadd.f32 %v317, %v1529
    %v1531 = vpop.f32.mrb[0].mxu0
    %1532 = vmatprep.mubr.bf16.mxu0 0
    %1533 = vmatmul.mubr.bf16.gmra.mrb[0].mxu0 %v1027
    %v1534 = vpop.f32.mrb[0].mxu0
    %v1535 = vadd.f32 %v317, %v1534
    %v1536 = vpop.f32.mrb[0].mxu0
    %v1537 = vpop.f32.mrb[0].mxu0
    %v1538 = vadd.f32 %v317, %v1537
    %v1539 = vpop.f32.mrb[0].mxu0
    %1540 = vmatprep.mubr.bf16.mxu0 0
    %1541 = vmatmul.mubr.bf16.gmra.mrb[0].mxu0 %v1030
    %v1542 = vpop.f32.mrb[0].mxu0
    %v1543 = vadd.f32 %v317, %v1542
    %v1544 = vpop.f32.mrb[0].mxu0
    %v1545 = vpop.f32.mrb[0].mxu0
    %v1546 = vadd.f32 %v317, %v1545
    %v1547 = vpop.f32.mrb[0].mxu0
    %1548 = vmatprep.mubr.bf16.mxu0 0
    %1549 = vmatmul.mubr.bf16.gmra.mrb[0].mxu0 %v1033
    %v1550 = vpop.f32.mrb[0].mxu0
    %v1551 = vadd.f32 %v317, %v1550
    %v1552 = vpop.f32.mrb[0].mxu0
    %v1553 = vpop.f32.mrb[0].mxu0
    %v1554 = vadd.f32 %v317, %v1553
    %v1555 = vpop.f32.mrb[0].mxu0
    %1556 = vmatprep.mubr.bf16.mxu0 0
    %1557 = vmatmul.mubr.bf16.gmra.mrb[0].mxu0 %v1036
    %v1558 = vpop.f32.mrb[0].mxu0
    %v1559 = vadd.f32 %v317, %v1558
    %v1560 = vpop.f32.mrb[0].mxu0
    %v1561 = vpop.f32.mrb[0].mxu0
    %v1562 = vadd.f32 %v317, %v1561
    %v1563 = vpop.f32.mrb[0].mxu0
    %1564 = vmatprep.mubr.bf16.mxu0 0
    %1565 = vmatmul.mubr.bf16.gmra.mrb[0].mxu0 %v1039
    %v1566 = vpop.f32.mrb[0].mxu0
    %v1567 = vadd.f32 %v317, %v1566
    %v1568 = vpop.f32.mrb[0].mxu0
    %v1569 = vpop.f32.mrb[0].mxu0
    %v1570 = vadd.f32 %v317, %v1569
    %v1571 = vpop.f32.mrb[0].mxu0
    %1572 = vmatprep.mubr.bf16.mxu0 0
    %1573 = vmatmul.mubr.bf16.gmra.mrb[0].mxu0 %v1042
    %v1574 = vpop.f32.mrb[0].mxu0
    %v1575 = vadd.f32 %v317, %v1574
    %v1576 = vpop.f32.mrb[0].mxu0
    %v1577 = vpop.f32.mrb[0].mxu0
    %v1578 = vadd.f32 %v317, %v1577
    %v1579 = vpop.f32.mrb[0].mxu0
    %1580 = vmatprep.mubr.bf16.mxu0 0
    %1581 = vmatmul.mubr.bf16.gmra.mrb[0].mxu0 %v1045
    %v1582 = vpop.f32.mrb[0].mxu0
    %v1583 = vadd.f32 %v317, %v1582
    %v1584 = vpop.f32.mrb[0].mxu0
    %v1585 = vpop.f32.mrb[0].mxu0
    %v1586 = vadd.f32 %v317, %v1585
    %v1587 = vpop.f32.mrb[0].mxu0
    %1588 = vmatprep.mubr.bf16.mxu0 0
    %1589 = vmatmul.mubr.bf16.gmra.mrb[0].mxu0 %v1048
    %v1590 = vpop.f32.mrb[0].mxu0
    %v1591 = vadd.f32 %v317, %v1590
    %v1592 = vpop.f32.mrb[0].mxu0
    %v1593 = vpop.f32.mrb[0].mxu0
    %v1594 = vadd.f32 %v317, %v1593
    %v1595 = vpop.f32.mrb[0].mxu0
    %1596 = vmatprep.mubr.bf16.mxu0 0
    %1597 = vmatmul.mubr.bf16.gmra.mrb[0].mxu0 %v1051
    %v1598 = vpop.f32.mrb[0].mxu0
    %v1599 = vadd.f32 %v317, %v1598
    %v1600 = vpop.f32.mrb[0].mxu0
    %v1601 = vpop.f32.mrb[0].mxu0
    %v1602 = vadd.f32 %v317, %v1601
    %v1603 = vpop.f32.mrb[0].mxu0
    %1604 = vmatprep.mubr.bf16.mxu0 0
    %1605 = vmatmul.mubr.bf16.gmra.mrb[0].mxu0 %v1054
    %v1606 = vpop.f32.mrb[0].mxu0
    %v1607 = vadd.f32 %v317, %v1606
    %v1608 = vpop.f32.mrb[0].mxu0
    %v1609 = vpop.f32.mrb[0].mxu0
    %v1610 = vadd.f32 %v317, %v1609
    %v1611 = vpop.f32.mrb[0].mxu0
    %1612 = vmatprep.mubr.bf16.mxu0 0
    %1613 = vmatmul.mubr.bf16.gmra.mrb[0].mxu0 %v1057
    %v1614 = vpop.f32.mrb[0].mxu0
    %v1615 = vadd.f32 %v317, %v1614
    %v1616 = vpop.f32.mrb[0].mxu0
    %v1617 = vpop.f32.mrb[0].mxu0
    %v1618 = vadd.f32 %v317, %v1617
    %v1619 = vpop.f32.mrb[0].mxu0
    %1620 = vmatprep.mubr.bf16.mxu0 0
    %1621 = vmatmul.mubr.bf16.gmra.mrb[0].mxu0 %v1060
    %v1622 = vpop.f32.mrb[0].mxu0
    %v1623 = vadd.f32 %v317, %v1622
    %v1624 = vpop.f32.mrb[0].mxu0
    %v1625 = vpop.f32.mrb[0].mxu0
    %v1626 = vadd.f32 %v317, %v1625
    %v1627 = vpop.f32.mrb[0].mxu0
    %1628 = vmatprep.mubr.bf16.mxu0 0
    %1629 = vmatmul.mubr.bf16.gmra.mrb[0].mxu0 %v1063
    %v1630 = vpop.f32.mrb[0].mxu0
    %v1631 = vadd.f32 %v317, %v1630
    %v1632 = vpop.f32.mrb[0].mxu0
    %v1633 = vpop.f32.mrb[0].mxu0
    %v1634 = vadd.f32 %v317, %v1633
    %v1635 = vpop.f32.mrb[0].mxu0
    %1636 = vmatprep.mubr.bf16.mxu0 0
    %1637 = vmatmul.mubr.bf16.gmra.mrb[0].mxu0 %v1066
    %v1638 = vpop.f32.mrb[0].mxu0
    %v1639 = vadd.f32 %v317, %v1638
    %v1640 = vpop.f32.mrb[0].mxu0
    %v1641 = vpop.f32.mrb[0].mxu0
    %v1642 = vadd.f32 %v317, %v1641
    %v1643 = vpop.f32.mrb[0].mxu0
    %1644 = vmatprep.mubr.bf16.mxu0 0
    %1645 = vmatmul.mubr.bf16.gmra.mrb[0].mxu0 %v1069
    %v1646 = vpop.f32.mrb[0].mxu0
    %v1647 = vadd.f32 %v317, %v1646
    %v1648 = vpop.f32.mrb[0].mxu0
    %v1649 = vpop.f32.mrb[0].mxu0
    %v1650 = vadd.f32 %v317, %v1649
    %v1651 = vpop.f32.mrb[0].mxu0
    %1652 = vmatprep.mubr.bf16.mxu0 0
    %1653 = vmatmul.mubr.bf16.gmra.mrb[0].mxu0 %v1072
    %v1654 = vpop.f32.mrb[0].mxu0
    %v1655 = vadd.f32 %v317, %v1654
    %v1656 = vpop.f32.mrb[0].mxu0
    %v1657 = vpop.f32.mrb[0].mxu0
    %v1658 = vadd.f32 %v317, %v1657
    %v1659 = vpop.f32.mrb[0].mxu0
    %1660 = vmatprep.mubr.bf16.mxu0 0
    %1661 = vmatmul.mubr.bf16.gmra.mrb[0].mxu0 %v1075
    %v1662 = vpop.f32.mrb[0].mxu0
    %v1663 = vadd.f32 %v317, %v1662
    %v1664 = vpop.f32.mrb[0].mxu0
    %v1665 = vpop.f32.mrb[0].mxu0
    %v1666 = vadd.f32 %v317, %v1665
    %v1667 = vpop.f32.mrb[0].mxu0
    %1668 = vmatprep.mubr.bf16.mxu0 0
    %1669 = vmatmul.mubr.bf16.gmra.mrb[0].mxu0 %v1078
    %v1670 = vpop.f32.mrb[0].mxu0
    %v1671 = vadd.f32 %v317, %v1670
    %v1672 = vpop.f32.mrb[0].mxu0
    %v1673 = vpop.f32.mrb[0].mxu0
    %v1674 = vadd.f32 %v317, %v1673
    %v1675 = vpop.f32.mrb[0].mxu0
    %1676 = vmatprep.mubr.bf16.mxu0 0
    %1677 = vmatmul.mubr.bf16.gmra.mrb[0].mxu0 %v1081
    %v1678 = vpop.f32.mrb[0].mxu0
    %v1679 = vadd.f32 %v317, %v1678
    %v1680 = vpop.f32.mrb[0].mxu0
    %v1681 = vpop.f32.mrb[0].mxu0
    %v1682 = vadd.f32 %v317, %v1681
    %v1683 = vpop.f32.mrb[0].mxu0
    %1684 = vmatprep.mubr.bf16.mxu0 0
    %1685 = vmatmul.mubr.bf16.gmra.mrb[0].mxu0 %v1084
    %v1686 = vpop.f32.mrb[0].mxu0
    %v1687 = vadd.f32 %v317, %v1686
    %v1688 = vpop.f32.mrb[0].mxu0
    %v1689 = vpop.f32.mrb[0].mxu0
    %v1690 = vadd.f32 %v317, %v1689
    %v1691 = vpop.f32.mrb[0].mxu0
    %1692 = vmatprep.mubr.bf16.mxu0 0
    %1693 = vmatmul.mubr.bf16.gmra.mrb[0].mxu0 %v1087
    %v1694 = vpop.f32.mrb[0].mxu0
    %v1695 = vadd.f32 %v317, %v1694
    %v1696 = vpop.f32.mrb[0].mxu0
    %v1697 = vpop.f32.mrb[0].mxu0
    %v1698 = vadd.f32 %v317, %v1697
    %v1699 = vpop.f32.mrb[0].mxu0
    %1700 = vmatprep.mubr.bf16.mxu0 0
    %1701 = vmatmul.mubr.bf16.gmra.mrb[0].mxu0 %v1090
    %v1702 = vpop.f32.mrb[0].mxu0
    %v1703 = vadd.f32 %v317, %v1702
    %v1704 = vpop.f32.mrb[0].mxu0
    %v1705 = vpop.f32.mrb[0].mxu0
    %v1706 = vadd.f32 %v317, %v1705
    %v1707 = vpop.f32.mrb[0].mxu0
    %1708 = vmatprep.mubr.bf16.mxu0 0
    %1709 = vmatmul.mubr.bf16.gmra.mrb[0].mxu0 %v1093
    %v1710 = vpop.f32.mrb[0].mxu0
    %v1711 = vadd.f32 %v317, %v1710
    %v1712 = vpop.f32.mrb[0].mxu0
    %v1713 = vpop.f32.mrb[0].mxu0
    %v1714 = vadd.f32 %v317, %v1713
    %v1715 = vpop.f32.mrb[0].mxu0
    %1716 = vmatprep.mubr.bf16.mxu0 0
    %1717 = vmatmul.mubr.bf16.gmra.mrb[0].mxu0 %v1096
    %v1718 = vpop.f32.mrb[0].mxu0
    %v1719 = vadd.f32 %v317, %v1718
    %v1720 = vpop.f32.mrb[0].mxu0
    %v1721 = vpop.f32.mrb[0].mxu0
    %v1722 = vadd.f32 %v317, %v1721
    %v1723 = vpop.f32.mrb[0].mxu0
    %1724 = vmatprep.mubr.bf16.mxu0 0
    %1725 = vmatmul.mubr.bf16.gmra.mrb[0].mxu0 %v1099
    %v1726 = vpop.f32.mrb[0].mxu0
    %v1727 = vadd.f32 %v317, %v1726
    %v1728 = vpop.f32.mrb[0].mxu0
    %v1729 = vpop.f32.mrb[0].mxu0
    %v1730 = vadd.f32 %v317, %v1729
    %v1731 = vpop.f32.mrb[0].mxu0
    %1732 = vmatprep.mubr.bf16.mxu0 0
    %1733 = vmatmul.mubr.bf16.gmra.mrb[0].mxu0 %v1102
    %v1734 = vpop.f32.mrb[0].mxu0
    %v1735 = vadd.f32 %v317, %v1734
    %v1736 = vpop.f32.mrb[0].mxu0
    %v1737 = vpop.f32.mrb[0].mxu0
    %v1738 = vadd.f32 %v317, %v1737
    %v1739 = vpop.f32.mrb[0].mxu0
    %1740 = vmatprep.mubr.bf16.mxu0 0
    %1741 = vmatmul.mubr.bf16.gmra.mrb[0].mxu0 %v1105
    %v1742 = vpop.f32.mrb[0].mxu0
    %v1743 = vadd.f32 %v317, %v1742
    %v1744 = vpop.f32.mrb[0].mxu0
    %v1745 = vpop.f32.mrb[0].mxu0
    %v1746 = vadd.f32 %v317, %v1745
    %v1747 = vpop.f32.mrb[0].mxu0
    %1748 = vmatprep.mubr.bf16.mxu0 0
    %1749 = vmatmul.mubr.bf16.gmra.mrb[0].mxu0 %v1108
    %v1750 = vpop.f32.mrb[0].mxu0
    %v1751 = vadd.f32 %v317, %v1750
    %v1752 = vpop.f32.mrb[0].mxu0
    %v1753 = vpop.f32.mrb[0].mxu0
    %v1754 = vadd.f32 %v317, %v1753
    %v1755 = vpop.f32.mrb[0].mxu0
    %1756 = vmatprep.mubr.bf16.mxu0 0
    %1757 = vmatmul.mubr.bf16.gmra.mrb[0].mxu0 %v1111
    %v1758 = vpop.f32.mrb[0].mxu0
    %v1759 = vadd.f32 %v317, %v1758
    %v1760 = vpop.f32.mrb[0].mxu0
    %v1761 = vpop.f32.mrb[0].mxu0
    %v1762 = vadd.f32 %v317, %v1761
    %v1763 = vpop.f32.mrb[0].mxu0
    %1764 = vmatprep.mubr.bf16.mxu0 0
    %1765 = vmatmul.mubr.bf16.gmra.mrb[0].mxu0 %v1114
    %v1766 = vpop.f32.mrb[0].mxu0
    %v1767 = vadd.f32 %v317, %v1766
    %v1768 = vpop.f32.mrb[0].mxu0
    %v1769 = vpop.f32.mrb[0].mxu0
    %v1770 = vadd.f32 %v317, %v1769
    %v1771 = vpop.f32.mrb[0].mxu0
    %1772 = vmatprep.mubr.bf16.mxu0 0
    %1773 = vmatmul.mubr.bf16.gmra.mrb[0].mxu0 %v1117
    %v1774 = vpop.f32.mrb[0].mxu0
    %v1775 = vadd.f32 %v317, %v1774
    %v1776 = vpop.f32.mrb[0].mxu0
    %v1777 = vpop.f32.mrb[0].mxu0
    %v1778 = vadd.f32 %v317, %v1777
    %v1779 = vpop.f32.mrb[0].mxu0
    %1780 = vmatprep.mubr.bf16.mxu0 0
    %1781 = vmatmul.mubr.bf16.gmra.mrb[0].mxu0 %v1120
    %v1782 = vpop.f32.mrb[0].mxu0
    %v1783 = vadd.f32 %v317, %v1782
    %v1784 = vpop.f32.mrb[0].mxu0
    %v1785 = vpop.f32.mrb[0].mxu0
    %v1786 = vadd.f32 %v317, %v1785
    %v1787 = vpop.f32.mrb[0].mxu0
    %1788 = vmatprep.mubr.bf16.mxu0 0
    %1789 = vmatmul.mubr.bf16.gmra.mrb[0].mxu0 %v1123
    %v1790 = vpop.f32.mrb[0].mxu0
    %v1791 = vadd.f32 %v317, %v1790
    %v1792 = vpop.f32.mrb[0].mxu0
    %v1793 = vpop.f32.mrb[0].mxu0
    %v1794 = vadd.f32 %v317, %v1793
    %v1795 = vpop.f32.mrb[0].mxu0
    %1796 = vmatprep.mubr.bf16.mxu0 0
    %1797 = vmatmul.mubr.bf16.gmra.mrb[0].mxu0 %v1126
    %v1798 = vpop.f32.mrb[0].mxu0
    %v1799 = vadd.f32 %v317, %v1798
    %v1800 = vpop.f32.mrb[0].mxu0
    %v1801 = vpop.f32.mrb[0].mxu0
    %v1802 = vadd.f32 %v317, %v1801
    %v1803 = vpop.f32.mrb[0].mxu0
    %1804 = vmatprep.mubr.bf16.mxu0 0
    %1805 = vmatmul.mubr.bf16.gmra.mrb[0].mxu0 %v1129
    %v1806 = vpop.f32.mrb[0].mxu0
    %v1807 = vadd.f32 %v317, %v1806
    %v1808 = vpop.f32.mrb[0].mxu0
    %v1809 = vpop.f32.mrb[0].mxu0
    %v1810 = vadd.f32 %v317, %v1809
    %v1811 = vpop.f32.mrb[0].mxu0
    %1812 = vmatprep.mubr.bf16.mxu0 0
    %1813 = vmatmul.mubr.bf16.gmra.mrb[0].mxu0 %v1132
    %v1814 = vpop.f32.mrb[0].mxu0
    %v1815 = vadd.f32 %v317, %v1814
    %v1816 = vpop.f32.mrb[0].mxu0
    %v1817 = vpop.f32.mrb[0].mxu0
    %v1818 = vadd.f32 %v317, %v1817
    %v1819 = vpop.f32.mrb[0].mxu0
    %1820 = vmatprep.mubr.bf16.mxu0 0
    %1821 = vmatmul.mubr.bf16.gmra.mrb[0].mxu0 %v1135
    %v1822 = vpop.f32.mrb[0].mxu0
    %v1823 = vadd.f32 %v317, %v1822
    %v1824 = vpop.f32.mrb[0].mxu0
    %v1825 = vpop.f32.mrb[0].mxu0
    %v1826 = vadd.f32 %v317, %v1825
    %v1827 = vpop.f32.mrb[0].mxu0
    %1828 = vmatprep.mubr.bf16.mxu0 0
    %1829 = vmatmul.mubr.bf16.gmra.mrb[0].mxu0 %v1138
    %v1830 = vpop.f32.mrb[0].mxu0
    %v1831 = vadd.f32 %v317, %v1830
    %v1832 = vpop.f32.mrb[0].mxu0
    %v1833 = vpop.f32.mrb[0].mxu0
    %v1834 = vadd.f32 %v317, %v1833
    %v1835 = vpop.f32.mrb[0].mxu0
    %1836 = vmatprep.mubr.bf16.mxu0 0
    %1837 = vmatmul.mubr.bf16.gmra.mrb[0].mxu0 %v1141
    %v1838 = vpop.f32.mrb[0].mxu0
    %v1839 = vadd.f32 %v317, %v1838
    %v1840 = vpop.f32.mrb[0].mxu0
    %v1841 = vpop.f32.mrb[0].mxu0
    %v1842 = vadd.f32 %v317, %v1841
    %v1843 = vpop.f32.mrb[0].mxu0
    %1844 = vmatprep.mubr.bf16.mxu0 0
    %1845 = vmatmul.mubr.bf16.gmra.mrb[0].mxu0 %v1144
    %v1846 = vpop.f32.mrb[0].mxu0
    %v1847 = vadd.f32 %v317, %v1846
    %v1848 = vpop.f32.mrb[0].mxu0
    %v1849 = vpop.f32.mrb[0].mxu0
    %v1850 = vadd.f32 %v317, %v1849
    %v1851 = vpop.f32.mrb[0].mxu0
    %1852 = vmatprep.mubr.bf16.mxu0 0
    %1853 = vmatmul.mubr.bf16.gmra.mrb[0].mxu0 %v1147
    %v1854 = vpop.f32.mrb[0].mxu0
    %v1855 = vadd.f32 %v317, %v1854
    %v1856 = vpop.f32.mrb[0].mxu0
    %v1857 = vpop.f32.mrb[0].mxu0
    %v1858 = vadd.f32 %v317, %v1857
    %v1859 = vpop.f32.mrb[0].mxu0
    %1860 = vmatprep.mubr.bf16.mxu0 0
    %1861 = vmatmul.mubr.bf16.gmra.mrb[0].mxu0 %v1150
    %v1862 = vpop.f32.mrb[0].mxu0
    %v1863 = vadd.f32 %v317, %v1862
    %v1864 = vpop.f32.mrb[0].mxu0
    %v1865 = vpop.f32.mrb[0].mxu0
    %v1866 = vadd.f32 %v317, %v1865
    %v1867 = vpop.f32.mrb[0].mxu0
    %1868 = vmatprep.mubr.bf16.mxu0 0
    %1869 = vmatmul.mubr.bf16.gmra.mrb[0].mxu0 %v1153
    %v1870 = vpop.f32.mrb[0].mxu0
    %v1871 = vadd.f32 %v317, %v1870
    %v1872 = vpop.f32.mrb[0].mxu0
    %v1873 = vpop.f32.mrb[0].mxu0
    %v1874 = vadd.f32 %v317, %v1873
    %v1875 = vpop.f32.mrb[0].mxu0
    %1876 = vmatprep.mubr.bf16.mxu0 0
    %1877 = vmatmul.mubr.bf16.gmra.mrb[0].mxu0 %v1156
    %v1878 = vpop.f32.mrb[0].mxu0
    %v1879 = vadd.f32 %v317, %v1878
    %v1880 = vpop.f32.mrb[0].mxu0
    %v1881 = vpop.f32.mrb[0].mxu0
    %v1882 = vadd.f32 %v317, %v1881
    %v1883 = vpop.f32.mrb[0].mxu0
    %1884 = vmatprep.mubr.bf16.mxu0 0
    %1885 = vmatmul.mubr.bf16.gmra.mrb[0].mxu0 %v1159
    %v1886 = vpop.f32.mrb[0].mxu0
    %v1887 = vadd.f32 %v317, %v1886
    %v1888 = vpop.f32.mrb[0].mxu0
    %v1889 = vpop.f32.mrb[0].mxu0
    %v1890 = vadd.f32 %v317, %v1889
    %v1891 = vpop.f32.mrb[0].mxu0
    %1892 = vmatprep.mubr.bf16.mxu0 0
    %1893 = vmatmul.mubr.bf16.gmra.mrb[0].mxu0 %v1162
    %v1894 = vpop.f32.mrb[0].mxu0
    %v1895 = vadd.f32 %v317, %v1894
    %v1896 = vpop.f32.mrb[0].mxu0
    %v1897 = vpop.f32.mrb[0].mxu0
    %v1898 = vadd.f32 %v317, %v1897
    %v1899 = vpop.f32.mrb[0].mxu0
    %1900 = vmatprep.mubr.bf16.mxu0 0
    %1901 = vmatmul.mubr.bf16.gmra.mrb[0].mxu0 %v1165
    %v1902 = vpop.f32.mrb[0].mxu0
    %v1903 = vadd.f32 %v317, %v1902
    %v1904 = vpop.f32.mrb[0].mxu0
    %v1905 = vpop.f32.mrb[0].mxu0
    %v1906 = vadd.f32 %v317, %v1905
    %v1907 = vpop.f32.mrb[0].mxu0
    %1908 = vmatprep.mubr.bf16.mxu0 0
    %1909 = vmatmul.mubr.bf16.gmra.mrb[0].mxu0 %v1168
    %v1910 = vpop.f32.mrb[0].mxu0
    %v1911 = vadd.f32 %v317, %v1910
    %v1912 = vpop.f32.mrb[0].mxu0
    %v1913 = vpop.f32.mrb[0].mxu0
    %v1914 = vadd.f32 %v317, %v1913
    %v1915 = vpop.f32.mrb[0].mxu0
    %1916 = vmatprep.mubr.bf16.mxu0 0
    %1917 = vmatmul.mubr.bf16.gmra.mrb[0].mxu0 %v1171
    %v1918 = vpop.f32.mrb[0].mxu0
    %v1919 = vadd.f32 %v317, %v1918
    %v1920 = vpop.f32.mrb[0].mxu0
    %v1921 = vpop.f32.mrb[0].mxu0
    %v1922 = vadd.f32 %v317, %v1921
    %v1923 = vpop.f32.mrb[0].mxu0
    %1924 = vmatprep.mubr.bf16.mxu0 0
    %1925 = vmatmul.mubr.bf16.gmra.mrb[0].mxu0 %v1174
    %v1926 = vpop.f32.mrb[0].mxu0
    %v1927 = vadd.f32 %v317, %v1926
    %v1928 = vpop.f32.mrb[0].mxu0
    %v1929 = vpop.f32.mrb[0].mxu0
    %v1930 = vadd.f32 %v317, %v1929
    %v1931 = vpop.f32.mrb[0].mxu0
    %1932 = vmatprep.mubr.bf16.mxu0 0
    %1933 = vmatmul.mubr.bf16.gmra.mrb[0].mxu0 %v1177
    %v1934 = vpop.f32.mrb[0].mxu0
    %v1935 = vadd.f32 %v317, %v1934
    %v1936 = vpop.f32.mrb[0].mxu0
    %v1937 = vpop.f32.mrb[0].mxu0
    %v1938 = vadd.f32 %v317, %v1937
    %v1939 = vpop.f32.mrb[0].mxu0
    %1940 = vmatprep.mubr.bf16.mxu0 0
    %1941 = vmatmul.mubr.bf16.gmra.mrb[0].mxu0 %v1180
    %v1942 = vpop.f32.mrb[0].mxu0
    %v1943 = vadd.f32 %v317, %v1942
    %v1944 = vpop.f32.mrb[0].mxu0
    %v1945 = vpop.f32.mrb[0].mxu0
    %v1946 = vadd.f32 %v317, %v1945
    %v1947 = vpop.f32.mrb[0].mxu0
    %1948 = vmatprep.mubr.bf16.mxu0 0
    %1949 = vmatmul.mubr.bf16.gmra.mrb[0].mxu0 %v1183
    %v1950 = vpop.f32.mrb[0].mxu0
    %v1951 = vadd.f32 %v317, %v1950
    %v1952 = vpop.f32.mrb[0].mxu0
    %v1953 = vpop.f32.mrb[0].mxu0
    %v1954 = vadd.f32 %v317, %v1953
    %v1955 = vpop.f32.mrb[0].mxu0
    %1956 = vmatprep.mubr.bf16.mxu0 0
    %1957 = vmatmul.mubr.bf16.gmra.mrb[0].mxu0 %v1186
    %v1958 = vpop.f32.mrb[0].mxu0
    %v1959 = vadd.f32 %v317, %v1958
    %v1960 = vpop.f32.mrb[0].mxu0
    %v1961 = vpop.f32.mrb[0].mxu0
    %v1962 = vadd.f32 %v317, %v1961
    %v1963 = vpop.f32.mrb[0].mxu0
    %1964 = vmatprep.mubr.bf16.mxu0 0
    %1965 = vmatmul.mubr.bf16.gmra.mrb[0].mxu0 %v1189
    %v1966 = vpop.f32.mrb[0].mxu0
    %v1967 = vadd.f32 %v317, %v1966
    %v1968 = vpop.f32.mrb[0].mxu0
    %v1969 = vpop.f32.mrb[0].mxu0
    %v1970 = vadd.f32 %v317, %v1969
    %v1971 = vpop.f32.mrb[0].mxu0
    %1972 = vmatprep.mubr.bf16.mxu0 0
    %1973 = vmatmul.mubr.bf16.gmra.mrb[0].mxu0 %v1192
    %v1974 = vpop.f32.mrb[0].mxu0
    %v1975 = vadd.f32 %v317, %v1974
    %v1976 = vpop.f32.mrb[0].mxu0
    %v1977 = vpop.f32.mrb[0].mxu0
    %v1978 = vadd.f32 %v317, %v1977
    %v1979 = vpop.f32.mrb[0].mxu0
    %1980 = vmatprep.mubr.bf16.mxu0 0
    %1981 = vmatmul.mubr.bf16.gmra.mrb[0].mxu0 %v1195
    %v1982 = vpop.f32.mrb[0].mxu0
    %v1983 = vadd.f32 %v317, %v1982
    %v1984 = vpop.f32.mrb[0].mxu0
    %v1985 = vpop.f32.mrb[0].mxu0
    %v1986 = vadd.f32 %v317, %v1985
    %v1987 = vpop.f32.mrb[0].mxu0
    %1988 = vmatprep.mubr.bf16.mxu0 0
    %1989 = vmatmul.mubr.bf16.gmra.mrb[0].mxu0 %v1198
    %v1990 = vpop.f32.mrb[0].mxu0
    %v1991 = vadd.f32 %v317, %v1990
    %v1992 = vpop.f32.mrb[0].mxu0
    %v1993 = vpop.f32.mrb[0].mxu0
    %v1994 = vadd.f32 %v317, %v1993
    %v1995 = vpop.f32.mrb[0].mxu0
    %1996 = vmatprep.mubr.bf16.mxu0 0
    %1997 = vmatmul.mubr.bf16.gmra.mrb[0].mxu0 %v1201
    %v1998 = vpop.f32.mrb[0].mxu0
    %v1999 = vadd.f32 %v317, %v1998
    %v2000 = vpop.f32.mrb[0].mxu0
    %v2001 = vpop.f32.mrb[0].mxu0
    %v2002 = vadd.f32 %v317, %v2001
    %v2003 = vpop.f32.mrb[0].mxu0
    %2004 = vmatprep.mubr.bf16.mxu0 0
    %2005 = vmatmul.mubr.bf16.gmra.mrb[0].mxu0 %v1204
    %v2006 = vpop.f32.mrb[0].mxu0
    %v2007 = vadd.f32 %v317, %v2006
    %v2008 = vpop.f32.mrb[0].mxu0
    %v2009 = vpop.f32.mrb[0].mxu0
    %v2010 = vadd.f32 %v317, %v2009
    %v2011 = vpop.f32.mrb[0].mxu0
    %2012 = vmatprep.mubr.bf16.mxu0 0
    %2013 = vmatmul.mubr.bf16.gmra.mrb[0].mxu0 %v1207
    %v2014 = vpop.f32.mrb[0].mxu0
    %v2015 = vadd.f32 %v317, %v2014
    %v2016 = vpop.f32.mrb[0].mxu0
    %v2017 = vpop.f32.mrb[0].mxu0
    %v2018 = vadd.f32 %v317, %v2017
    %v2019 = vpop.f32.mrb[0].mxu0
    %2020 = vmatprep.mubr.bf16.mxu0 0
    %2021 = vmatmul.mubr.bf16.gmra.mrb[0].mxu0 %v1210
    %v2022 = vpop.f32.mrb[0].mxu0
    %v2023 = vadd.f32 %v317, %v2022
    %v2024 = vpop.f32.mrb[0].mxu0
    %v2025 = vpop.f32.mrb[0].mxu0
    %v2026 = vadd.f32 %v317, %v2025
    %v2027 = vpop.f32.mrb[0].mxu0
    %2028 = vmatprep.mubr.bf16.mxu0 0
    %2029 = vmatmul.mubr.bf16.gmra.mrb[0].mxu0 %v1213
    %v2030 = vpop.f32.mrb[0].mxu0
    %v2031 = vadd.f32 %v317, %v2030
    %v2032 = vpop.f32.mrb[0].mxu0
    %v2033 = vpop.f32.mrb[0].mxu0
    %v2034 = vadd.f32 %v317, %v2033
    %v2035 = vpop.f32.mrb[0].mxu0
    %2036 = vmatprep.mubr.bf16.mxu0 0
    %2037 = vmatmul.mubr.bf16.gmra.mrb[0].mxu0 %v1216
    %v2038 = vpop.f32.mrb[0].mxu0
    %v2039 = vadd.f32 %v317, %v2038
    %v2040 = vpop.f32.mrb[0].mxu0
    %v2041 = vpop.f32.mrb[0].mxu0
    %v2042 = vadd.f32 %v317, %v2041
    %v2043 = vpop.f32.mrb[0].mxu0
    %2044 = vmatprep.mubr.bf16.mxu0 0
    %2045 = vmatmul.mubr.bf16.gmra.mrb[0].mxu0 %v1219
    %v2046 = vpop.f32.mrb[0].mxu0
    %v2047 = vadd.f32 %v317, %v2046
    %v2048 = vpop.f32.mrb[0].mxu0
    %v2049 = vpop.f32.mrb[0].mxu0
    %v2050 = vadd.f32 %v317, %v2049
    %v2051 = vpop.f32.mrb[0].mxu0
    %2052 = vmatprep.mubr.bf16.mxu0 0
    %2053 = vmatmul.mubr.bf16.gmra.mrb[0].mxu0 %v1222
    %v2054 = vpop.f32.mrb[0].mxu0
    %v2055 = vadd.f32 %v317, %v2054
    %v2056 = vpop.f32.mrb[0].mxu0
    %v2057 = vpop.f32.mrb[0].mxu0
    %v2058 = vadd.f32 %v317, %v2057
    %v2059 = vpop.f32.mrb[0].mxu0
    %2060 = vmatprep.mubr.bf16.mxu0 0
    %2061 = vmatmul.mubr.bf16.gmra.mrb[0].mxu0 %v1225
    %v2062 = vpop.f32.mrb[0].mxu0
    %v2063 = vadd.f32 %v317, %v2062
    %v2064 = vpop.f32.mrb[0].mxu0
    %v2065 = vpop.f32.mrb[0].mxu0
    %v2066 = vadd.f32 %v317, %v2065
    %v2067 = vpop.f32.mrb[0].mxu0
    %2068 = vmatprep.mubr.bf16.mxu0 0
    %2069 = vmatmul.mubr.bf16.gmra.mrb[0].mxu0 %v1228
    %v2070 = vpop.f32.mrb[0].mxu0
    %v2071 = vadd.f32 %v317, %v2070
    %v2072 = vpop.f32.mrb[0].mxu0
    %v2073 = vpop.f32.mrb[0].mxu0
    %v2074 = vadd.f32 %v317, %v2073
    %v2075 = vpop.f32.mrb[0].mxu0
    %2076 = vmatprep.mubr.bf16.mxu0 0
    %2077 = vmatmul.mubr.bf16.gmra.mrb[0].mxu0 %v1231
    %v2078 = vpop.f32.mrb[0].mxu0
    %v2079 = vadd.f32 %v317, %v2078
    %v2080 = vpop.f32.mrb[0].mxu0
    %v2081 = vpop.f32.mrb[0].mxu0
    %v2082 = vadd.f32 %v317, %v2081
    %v2083 = vpop.f32.mrb[0].mxu0
    %2084 = vmatprep.mubr.bf16.mxu0 0
    %2085 = vmatmul.mubr.bf16.gmra.mrb[0].mxu0 %v1234
    %v2086 = vpop.f32.mrb[0].mxu0
    %v2087 = vadd.f32 %v317, %v2086
    %v2088 = vpop.f32.mrb[0].mxu0
    %v2089 = vpop.f32.mrb[0].mxu0
    %v2090 = vadd.f32 %v317, %v2089
    %v2091 = vpop.f32.mrb[0].mxu0
    %2092 = vmatprep.mubr.bf16.mxu0 0
    %2093 = vmatmul.mubr.bf16.gmra.mrb[0].mxu0 %v1237
    %v2094 = vpop.f32.mrb[0].mxu0
    %v2095 = vadd.f32 %v317, %v2094
    %v2096 = vpop.f32.mrb[0].mxu0
    %v2097 = vpop.f32.mrb[0].mxu0
    %v2098 = vadd.f32 %v317, %v2097
    %v2099 = vpop.f32.mrb[0].mxu0
    %2100 = vmatprep.mubr.bf16.mxu0 0
    %2101 = vmatmul.mubr.bf16.gmra.mrb[0].mxu0 %v1240
    %v2102 = vpop.f32.mrb[0].mxu0
    %v2103 = vadd.f32 %v317, %v2102
    %v2104 = vpop.f32.mrb[0].mxu0
    %v2105 = vpop.f32.mrb[0].mxu0
    %v2106 = vadd.f32 %v317, %v2105
    %v2107 = vpop.f32.mrb[0].mxu0
    %2108 = vmatprep.mubr.bf16.mxu0 0
    %2109 = vmatmul.mubr.bf16.gmra.mrb[0].mxu0 %v1243
    %v2110 = vpop.f32.mrb[0].mxu0
    %v2111 = vadd.f32 %v317, %v2110
    %v2112 = vpop.f32.mrb[0].mxu0
    %v2113 = vpop.f32.mrb[0].mxu0
    %v2114 = vadd.f32 %v317, %v2113
    %v2115 = vpop.f32.mrb[0].mxu0
    %2116 = vmatprep.mubr.bf16.mxu0 0
    %2117 = vmatmul.mubr.bf16.gmra.mrb[0].mxu0 %v1246
    %v2118 = vpop.f32.mrb[0].mxu0
    %v2119 = vadd.f32 %v317, %v2118
    %v2120 = vpop.f32.mrb[0].mxu0
    %v2121 = vpop.f32.mrb[0].mxu0
    %v2122 = vadd.f32 %v317, %v2121
    %v2123 = vpop.f32.mrb[0].mxu0
    %2124 = vmatprep.mubr.bf16.mxu0 0
    %2125 = vmatmul.mubr.bf16.gmra.mrb[0].mxu0 %v1249
    %v2126 = vpop.f32.mrb[0].mxu0
    %v2127 = vadd.f32 %v317, %v2126
    %v2128 = vpop.f32.mrb[0].mxu0
    %v2129 = vpop.f32.mrb[0].mxu0
    %v2130 = vadd.f32 %v317, %v2129
    %v2131 = vpop.f32.mrb[0].mxu0
    %2132 = vmatprep.mubr.bf16.mxu0 0
    %2133 = vmatmul.mubr.bf16.gmra.mrb[0].mxu0 %v1252
    %v2134 = vpop.f32.mrb[0].mxu0
    %v2135 = vadd.f32 %v317, %v2134
    %v2136 = vpop.f32.mrb[0].mxu0
    %v2137 = vpop.f32.mrb[0].mxu0
    %v2138 = vadd.f32 %v317, %v2137
    %v2139 = vpop.f32.mrb[0].mxu0
    %2140 = vmatprep.mubr.bf16.mxu0 0
    %2141 = vmatmul.mubr.bf16.gmra.mrb[0].mxu0 %v1255
    %v2142 = vpop.f32.mrb[0].mxu0
    %v2143 = vadd.f32 %v317, %v2142
    %v2144 = vpop.f32.mrb[0].mxu0
    %v2145 = vpop.f32.mrb[0].mxu0
    %v2146 = vadd.f32 %v317, %v2145
    %v2147 = vpop.f32.mrb[0].mxu0
    %2148 = vmatprep.mubr.bf16.mxu0 0
    %2149 = vmatmul.mubr.bf16.gmra.mrb[0].mxu0 %v1258
    %v2150 = vpop.f32.mrb[0].mxu0
    %v2151 = vadd.f32 %v317, %v2150
    %v2152 = vpop.f32.mrb[0].mxu0
    %v2153 = vpop.f32.mrb[0].mxu0
    %v2154 = vadd.f32 %v317, %v2153
    %v2155 = vpop.f32.mrb[0].mxu0
    %2156 = vmatprep.mubr.bf16.mxu0 0
    %2157 = vmatmul.mubr.bf16.gmra.mrb[0].mxu0 %v1261
    %v2158 = vpop.f32.mrb[0].mxu0
    %v2159 = vadd.f32 %v317, %v2158
    %v2160 = vpop.f32.mrb[0].mxu0
    %v2161 = vpop.f32.mrb[0].mxu0
    %v2162 = vadd.f32 %v317, %v2161
    %v2163 = vpop.f32.mrb[0].mxu0
    %2164 = vmatprep.mubr.bf16.mxu0 0
    %2165 = vmatmul.mubr.bf16.gmra.mrb[0].mxu0 %v1264
    %v2166 = vpop.f32.mrb[0].mxu0
    %v2167 = vadd.f32 %v317, %v2166
    %v2168 = vpop.f32.mrb[0].mxu0
    %v2169 = vpop.f32.mrb[0].mxu0
    %v2170 = vadd.f32 %v317, %v2169
    %v2171 = vpop.f32.mrb[0].mxu0
    %2172 = vmatprep.mubr.bf16.mxu0 0
    %2173 = vmatmul.mubr.bf16.gmra.mrb[0].mxu0 %v1267
    %v2174 = vpop.f32.mrb[0].mxu0
    %v2175 = vadd.f32 %v317, %v2174
    %v2176 = vpop.f32.mrb[0].mxu0
    %v2177 = vpop.f32.mrb[0].mxu0
    %v2178 = vadd.f32 %v317, %v2177
    %v2179 = vpop.f32.mrb[0].mxu0
    %2180 = vmatprep.mubr.bf16.mxu0 0
    %2181 = vmatmul.mubr.bf16.gmra.mrb[0].mxu0 %v1270
    %v2182 = vpop.f32.mrb[0].mxu0
    %v2183 = vadd.f32 %v317, %v2182
    %v2184 = vpop.f32.mrb[0].mxu0
    %v2185 = vpop.f32.mrb[0].mxu0
    %v2186 = vadd.f32 %v317, %v2185
    %v2187 = vpop.f32.mrb[0].mxu0
    %2188 = vmatprep.mubr.bf16.mxu0 0
    %2189 = vmatmul.mubr.bf16.gmra.mrb[0].mxu0 %v1273
    %v2190 = vpop.f32.mrb[0].mxu0
    %v2191 = vadd.f32 %v317, %v2190
    %v2192 = vpop.f32.mrb[0].mxu0
    %v2193 = vpop.f32.mrb[0].mxu0
    %v2194 = vadd.f32 %v317, %v2193
    %v2195 = vpop.f32.mrb[0].mxu0
    %2196 = vmatprep.mubr.bf16.mxu0 0
    %2197 = vmatmul.mubr.bf16.gmra.mrb[0].mxu0 %v1276
    %v2198 = vpop.f32.mrb[0].mxu0
    %v2199 = vadd.f32 %v317, %v2198
    %v2200 = vpop.f32.mrb[0].mxu0
    %v2201 = vpop.f32.mrb[0].mxu0
    %v2202 = vadd.f32 %v317, %v2201
    %v2203 = vpop.f32.mrb[0].mxu0
    %2204 = vmatprep.mubr.bf16.mxu0 0
    %2205 = vmatmul.mubr.bf16.gmra.mrb[0].mxu0 %v1279
    %v2206 = vpop.f32.mrb[0].mxu0
    %v2207 = vadd.f32 %v317, %v2206
    %v2208 = vpop.f32.mrb[0].mxu0
    %v2209 = vpop.f32.mrb[0].mxu0
    %v2210 = vadd.f32 %v317, %v2209
    %v2211 = vpop.f32.mrb[0].mxu0
    %2212 = vmatprep.mubr.bf16.mxu0 0
    %2213 = vmatmul.mubr.bf16.gmra.mrb[0].mxu0 %v1282
    %v2214 = vpop.f32.mrb[0].mxu0
    %v2215 = vadd.f32 %v317, %v2214
    %v2216 = vpop.f32.mrb[0].mxu0
    %v2217 = vpop.f32.mrb[0].mxu0
    %v2218 = vadd.f32 %v317, %v2217
    %v2219 = vpop.f32.mrb[0].mxu0
    %2220 = vmatprep.mubr.bf16.mxu0 0
    %2221 = vmatmul.mubr.bf16.gmra.mrb[0].mxu0 %v1285
    %v2222 = vpop.f32.mrb[0].mxu0
    %v2223 = vadd.f32 %v317, %v2222
    %v2224 = vpop.f32.mrb[0].mxu0
    %v2225 = vpop.f32.mrb[0].mxu0
    %v2226 = vadd.f32 %v317, %v2225
    %v2227 = vpop.f32.mrb[0].mxu0
    %2228 = vmatprep.mubr.bf16.mxu0 0
    %2229 = vmatmul.mubr.bf16.gmra.mrb[0].mxu0 %v1288
    %v2230 = vpop.f32.mrb[0].mxu0
    %v2231 = vadd.f32 %v317, %v2230
    %v2232 = vpop.f32.mrb[0].mxu0
    %v2233 = vpop.f32.mrb[0].mxu0
    %v2234 = vadd.f32 %v317, %v2233
    %v2235 = vpop.f32.mrb[0].mxu0
    %2236 = vmatprep.mubr.bf16.mxu0 0
    %2237 = vmatmul.mubr.bf16.gmra.mrb[0].mxu0 %v1291
    %v2238 = vpop.f32.mrb[0].mxu0
    %v2239 = vadd.f32 %v317, %v2238
    %v2240 = vpop.f32.mrb[0].mxu0
    %v2241 = vpop.f32.mrb[0].mxu0
    %v2242 = vadd.f32 %v317, %v2241
    %v2243 = vpop.f32.mrb[0].mxu0
    %2244 = vmatprep.mubr.bf16.mxu0 0
    %2245 = vmatmul.mubr.bf16.gmra.mrb[0].mxu0 %v1294
    %v2246 = vpop.f32.mrb[0].mxu0
    %v2247 = vadd.f32 %v317, %v2246
    %v2248 = vpop.f32.mrb[0].mxu0
    %v2249 = vpop.f32.mrb[0].mxu0
    %v2250 = vadd.f32 %v317, %v2249
    %v2251 = vpop.f32.mrb[0].mxu0
    %2252 = vmatprep.mubr.bf16.mxu0 0
    %2253 = vmatmul.mubr.bf16.gmra.mrb[0].mxu0 %v1297
    %v2254 = vpop.f32.mrb[0].mxu0
    %v2255 = vadd.f32 %v317, %v2254
    %v2256 = vpop.f32.mrb[0].mxu0
    %v2257 = vpop.f32.mrb[0].mxu0
    %v2258 = vadd.f32 %v317, %v2257
    %v2259 = vpop.f32.mrb[0].mxu0
    %2260 = vmatprep.mubr.bf16.mxu0 0
    %2261 = vmatmul.mubr.bf16.gmra.mrb[0].mxu0 %v1300
    %v2262 = vpop.f32.mrb[0].mxu0
    %v2263 = vadd.f32 %v317, %v2262
    %v2264 = vpop.f32.mrb[0].mxu0
    %v2265 = vpop.f32.mrb[0].mxu0
    %v2266 = vadd.f32 %v317, %v2265
    %v2267 = vpop.f32.mrb[0].mxu0
    %2268 = vmatprep.mubr.bf16.mxu0 0
    %2269 = vmatmul.mubr.bf16.gmra.mrb[0].mxu0 %v1303
    %v2270 = vpop.f32.mrb[0].mxu0
    %v2271 = vadd.f32 %v317, %v2270
    %v2272 = vpop.f32.mrb[0].mxu0
    %v2273 = vpop.f32.mrb[0].mxu0
    %v2274 = vadd.f32 %v317, %v2273
    %v2275 = vpop.f32.mrb[0].mxu0
    %2276 = vmatprep.mubr.bf16.mxu0 0
    %2277 = vmatmul.mubr.bf16.gmra.mrb[0].mxu0 %v1306
    %v2278 = vpop.f32.mrb[0].mxu0
    %v2279 = vadd.f32 %v317, %v2278
    %v2280 = vpop.f32.mrb[0].mxu0
    %v2281 = vpop.f32.mrb[0].mxu0
    %v2282 = vadd.f32 %v317, %v2281
    %v2283 = vpop.f32.mrb[0].mxu0
    %2284 = vmatprep.mubr.bf16.mxu0 0
    %2285 = vmatmul.mubr.bf16.gmra.mrb[0].mxu0 %v1309
    %v2286 = vpop.f32.mrb[0].mxu0
    %v2287 = vadd.f32 %v317, %v2286
    %v2288 = vpop.f32.mrb[0].mxu0
    %v2289 = vpop.f32.mrb[0].mxu0
    %v2290 = vadd.f32 %v317, %v2289
    %v2291 = vpop.f32.mrb[0].mxu0
    %2292 = vmatprep.mubr.bf16.mxu0 0
    %2293 = vmatmul.mubr.bf16.gmra.mrb[0].mxu0 %v1312
    %v2294 = vpop.f32.mrb[0].mxu0
    %v2295 = vadd.f32 %v317, %v2294
    %v2296 = vpop.f32.mrb[0].mxu0
    %v2297 = vpop.f32.mrb[0].mxu0
    %v2298 = vadd.f32 %v317, %v2297
    %v2299 = vpop.f32.mrb[0].mxu0
    %2300 = vmatprep.mubr.bf16.mxu0 0
    %2301 = vmatmul.mubr.bf16.gmra.mrb[0].mxu0 %v1315
    %v2302 = vpop.f32.mrb[0].mxu0
    %v2303 = vadd.f32 %v317, %v2302
    %v2304 = vpop.f32.mrb[0].mxu0
    %v2305 = vpop.f32.mrb[0].mxu0
    %v2306 = vadd.f32 %v317, %v2305
    %v2307 = vpop.f32.mrb[0].mxu0
    %2308 = vmatprep.mubr.bf16.mxu0 0
    %2309 = vmatmul.mubr.bf16.gmra.mrb[0].mxu0 %v1318
    %v2310 = vpop.f32.mrb[0].mxu0
    %v2311 = vadd.f32 %v317, %v2310
    %v2312 = vpop.f32.mrb[0].mxu0
    %v2313 = vpop.f32.mrb[0].mxu0
    %v2314 = vadd.f32 %v317, %v2313
    %v2315 = vpop.f32.mrb[0].mxu0
    %2316 = vmatprep.mubr.bf16.mxu0 0
    %2317 = vmatmul.mubr.bf16.gmra.mrb[0].mxu0 %v1321
    %v2318 = vpop.f32.mrb[0].mxu0
    %v2319 = vadd.f32 %v317, %v2318
    %v2320 = vpop.f32.mrb[0].mxu0
    %v2321 = vpop.f32.mrb[0].mxu0
    %v2322 = vadd.f32 %v317, %v2321
    %v2323 = vpop.f32.mrb[0].mxu0
    %2324 = vmatprep.mubr.bf16.mxu0 0
    %2325 = vmatmul.mubr.bf16.gmra.mrb[0].mxu0 %v1324
    %v2326 = vpop.f32.mrb[0].mxu0
    %v2327 = vadd.f32 %v317, %v2326
    %v2328 = vpop.f32.mrb[0].mxu0
    %v2329 = vpop.f32.mrb[0].mxu0
    %v2330 = vadd.f32 %v317, %v2329
    %v2331 = vpop.f32.mrb[0].mxu0
    %2332 = vmatprep.mubr.bf16.mxu0 0
    %2333 = vmatmul.mubr.bf16.gmra.mrb[0].mxu0 %v1327
    %v2334 = vpop.f32.mrb[0].mxu0
    %v2335 = vadd.f32 %v317, %v2334
    %v2336 = vpop.f32.mrb[0].mxu0
    %v2337 = vpop.f32.mrb[0].mxu0
    %v2338 = vadd.f32 %v317, %v2337
    %v2339 = vpop.f32.mrb[0].mxu0
    %2340 = vmatprep.mubr.bf16.mxu0 0
    %2341 = vmatmul.mubr.bf16.gmra.mrb[0].mxu0 %v1330
    %v2342 = vpop.f32.mrb[0].mxu0
    %v2343 = vadd.f32 %v317, %v2342
    %v2344 = vpop.f32.mrb[0].mxu0
    %v2345 = vpop.f32.mrb[0].mxu0
    %v2346 = vadd.f32 %v317, %v2345
    %v2347 = vpop.f32.mrb[0].mxu0
    %2348 = vmatprep.mubr.bf16.mxu0 0
    %2349 = vmatmul.mubr.bf16.gmra.mrb[0].mxu0 %v1333
    %v2350 = vpop.f32.mrb[0].mxu0
    %v2351 = vadd.f32 %v317, %v2350
    %v2352 = vpop.f32.mrb[0].mxu0
    %v2353 = vpop.f32.mrb[0].mxu0
    %v2354 = vadd.f32 %v317, %v2353
    %v2355 = vpop.f32.mrb[0].mxu0
    %2356 = vmatprep.mubr.bf16.mxu0 0
    %2357 = vmatmul.mubr.bf16.gmra.mrb[0].mxu0 %v1336
    %v2358 = vpop.f32.mrb[0].mxu0
    %v2359 = vadd.f32 %v317, %v2358
    %v2360 = vpop.f32.mrb[0].mxu0
    %v2361 = vpop.f32.mrb[0].mxu0
    %v2362 = vadd.f32 %v317, %v2361
    %v2363 = vpop.f32.mrb[0].mxu0
    %2364 = vmatprep.mubr.bf16.mxu0 0
    %2365 = vmatmul.mubr.bf16.gmra.mrb[0].mxu0 %v1339
    %v2366 = vpop.f32.mrb[0].mxu0
    %v2367 = vadd.f32 %v317, %v2366
    %v2368 = vpop.f32.mrb[0].mxu0
    %v2369 = vpop.f32.mrb[0].mxu0
    %v2370 = vadd.f32 %v317, %v2369
    %v2371 = vpop.f32.mrb[0].mxu0
    %2372 = vmatprep.mubr.bf16.mxu0 0
    %2373 = vmatmul.mubr.bf16.gmra.mrb[0].mxu0 %v1342
    %v2374 = vpop.f32.mrb[0].mxu0
    %v2375 = vadd.f32 %v317, %v2374
    %v2376 = vpop.f32.mrb[0].mxu0
    %v2377 = vpop.f32.mrb[0].mxu0
    %v2378 = vadd.f32 %v317, %v2377
    %v2379 = vpop.f32.mrb[0].mxu0
    %2380 = vmatprep.mubr.bf16.mxu0 0
    %2381 = vmatmul.mubr.bf16.gmra.mrb[0].mxu0 %v1345
    %v2382 = vpop.f32.mrb[0].mxu0
    %v2383 = vadd.f32 %v317, %v2382
    %v2384 = vpop.f32.mrb[0].mxu0
    %v2385 = vpop.f32.mrb[0].mxu0
    %v2386 = vadd.f32 %v317, %v2385
    %v2387 = vpop.f32.mrb[0].mxu0
    %2388 = vmatprep.mubr.bf16.mxu0 0
    %2389 = vmatmul.mubr.bf16.gmra.mrb[0].mxu0 %v1348
    %v2390 = vpop.f32.mrb[0].mxu0
    %v2391 = vadd.f32 %v317, %v2390
    %v2392 = vpop.f32.mrb[0].mxu0
    %v2393 = vpop.f32.mrb[0].mxu0
    %v2394 = vadd.f32 %v317, %v2393
    %v2395 = vpop.f32.mrb[0].mxu0
    %2396 = vmatprep.mubr.bf16.mxu0 0
    %2397 = vmatmul.mubr.bf16.gmra.mrb[0].mxu0 %v1351
    %v2398 = vpop.f32.mrb[0].mxu0
    %v2399 = vadd.f32 %v317, %v2398
    %v2400 = vpop.f32.mrb[0].mxu0
    %v2401 = vpop.f32.mrb[0].mxu0
    %v2402 = vadd.f32 %v317, %v2401
    %v2403 = vpop.f32.mrb[0].mxu0
    %2404 = vmatprep.mubr.bf16.mxu0 0
    %2405 = vmatmul.mubr.bf16.gmra.mrb[0].mxu0 %v1354
    %v2406 = vpop.f32.mrb[0].mxu0
    %v2407 = vadd.f32 %v317, %v2406
    %v2408 = vpop.f32.mrb[0].mxu0
    %v2409 = vpop.f32.mrb[0].mxu0
    %v2410 = vadd.f32 %v317, %v2409
    %v2411 = vpop.f32.mrb[0].mxu0
    %2412 = vdwg.mxu0
    %v2413 = vmax.f32 %v1391, 0.0
    %v2414 = vmax.f32 %v1394, 0.0
    %v2415 = vmax.f32 %v1399, 0.0
    %v2416 = vmax.f32 %v1402, 0.0
    %v2417 = vmax.f32 %v1407, 0.0
    %v2418 = vmax.f32 %v1410, 0.0
    %v2419 = vmax.f32 %v1415, 0.0
    %v2420 = vmax.f32 %v1418, 0.0
    %v2421 = vmax.f32 %v1423, 0.0
    %v2422 = vmax.f32 %v1426, 0.0
    %v2423 = vmax.f32 %v1431, 0.0
    %v2424 = vmax.f32 %v1434, 0.0
    %v2425 = vmax.f32 %v1439, 0.0
    %v2426 = vmax.f32 %v1442, 0.0
    %v2427 = vmax.f32 %v1447, 0.0
    %v2428 = vmax.f32 %v1450, 0.0
    %v2429 = vmax.f32 %v1455, 0.0
    %v2430 = vmax.f32 %v1458, 0.0
    %v2431 = vmax.f32 %v1463, 0.0
    %v2432 = vmax.f32 %v1466, 0.0
    %v2433 = vmax.f32 %v1471, 0.0
    %v2434 = vmax.f32 %v1474, 0.0
    %v2435 = vmax.f32 %v1479, 0.0
    %v2436 = vmax.f32 %v1482, 0.0
    %v2437 = vmax.f32 %v1487, 0.0
    %v2438 = vmax.f32 %v1490, 0.0
    %v2439 = vmax.f32 %v1495, 0.0
    %v2440 = vmax.f32 %v1498, 0.0
    %v2441 = vmax.f32 %v1503, 0.0
    %v2442 = vmax.f32 %v1506, 0.0
    %v2443 = vmax.f32 %v1511, 0.0
    %v2444 = vmax.f32 %v1514, 0.0
    %v2445 = vmax.f32 %v1519, 0.0
    %v2446 = vmax.f32 %v1522, 0.0
    %v2447 = vmax.f32 %v1527, 0.0
    %v2448 = vmax.f32 %v1530, 0.0
    %v2449 = vmax.f32 %v1535, 0.0
    %v2450 = vmax.f32 %v1538, 0.0
    %v2451 = vmax.f32 %v1543, 0.0
    %v2452 = vmax.f32 %v1546, 0.0
    %v2453 = vmax.f32 %v1551, 0.0
    %v2454 = vmax.f32 %v1554, 0.0
    %v2455 = vmax.f32 %v1559, 0.0
    %v2456 = vmax.f32 %v1562, 0.0
    %v2457 = vmax.f32 %v1567, 0.0
    %v2458 = vmax.f32 %v1570, 0.0
    %v2459 = vmax.f32 %v1575, 0.0
    %v2460 = vmax.f32 %v1578, 0.0
    %v2461 = vmax.f32 %v1583, 0.0
    %v2462 = vmax.f32 %v1586, 0.0
    %v2463 = vmax.f32 %v1591, 0.0
    %v2464 = vmax.f32 %v1594, 0.0
    %v2465 = vmax.f32 %v1599, 0.0
    %v2466 = vmax.f32 %v1602, 0.0
    %v2467 = vmax.f32 %v1607, 0.0
    %v2468 = vmax.f32 %v1610, 0.0
    %v2469 = vmax.f32 %v1615, 0.0
    %v2470 = vmax.f32 %v1618, 0.0
    %v2471 = vmax.f32 %v1623, 0.0
    %v2472 = vmax.f32 %v1626, 0.0
    %v2473 = vmax.f32 %v1631, 0.0
    %v2474 = vmax.f32 %v1634, 0.0
    %v2475 = vmax.f32 %v1639, 0.0
    %v2476 = vmax.f32 %v1642, 0.0
    %v2477 = vmax.f32 %v1647, 0.0
    %v2478 = vmax.f32 %v1650, 0.0
    %v2479 = vmax.f32 %v1655, 0.0
    %v2480 = vmax.f32 %v1658, 0.0
    %v2481 = vmax.f32 %v1663, 0.0
    %v2482 = vmax.f32 %v1666, 0.0
    %v2483 = vmax.f32 %v1671, 0.0
    %v2484 = vmax.f32 %v1674, 0.0
    %v2485 = vmax.f32 %v1679, 0.0
    %v2486 = vmax.f32 %v1682, 0.0
    %v2487 = vmax.f32 %v1687, 0.0
    %v2488 = vmax.f32 %v1690, 0.0
    %v2489 = vmax.f32 %v1695, 0.0
    %v2490 = vmax.f32 %v1698, 0.0
    %v2491 = vmax.f32 %v1703, 0.0
    %v2492 = vmax.f32 %v1706, 0.0
    %v2493 = vmax.f32 %v1711, 0.0
    %v2494 = vmax.f32 %v1714, 0.0
    %v2495 = vmax.f32 %v1719, 0.0
    %v2496 = vmax.f32 %v1722, 0.0
    %v2497 = vmax.f32 %v1727, 0.0
    %v2498 = vmax.f32 %v1730, 0.0
    %v2499 = vmax.f32 %v1735, 0.0
    %v2500 = vmax.f32 %v1738, 0.0
    %v2501 = vmax.f32 %v1743, 0.0
    %v2502 = vmax.f32 %v1746, 0.0
    %v2503 = vmax.f32 %v1751, 0.0
    %v2504 = vmax.f32 %v1754, 0.0
    %v2505 = vmax.f32 %v1759, 0.0
    %v2506 = vmax.f32 %v1762, 0.0
    %v2507 = vmax.f32 %v1767, 0.0
    %v2508 = vmax.f32 %v1770, 0.0
    %v2509 = vmax.f32 %v1775, 0.0
    %v2510 = vmax.f32 %v1778, 0.0
    %v2511 = vmax.f32 %v1783, 0.0
    %v2512 = vmax.f32 %v1786, 0.0
    %v2513 = vmax.f32 %v1791, 0.0
    %v2514 = vmax.f32 %v1794, 0.0
    %v2515 = vmax.f32 %v1799, 0.0
    %v2516 = vmax.f32 %v1802, 0.0
    %v2517 = vmax.f32 %v1807, 0.0
    %v2518 = vmax.f32 %v1810, 0.0
    %v2519 = vmax.f32 %v1815, 0.0
    %v2520 = vmax.f32 %v1818, 0.0
    %v2521 = vmax.f32 %v1823, 0.0
    %v2522 = vmax.f32 %v1826, 0.0
    %v2523 = vmax.f32 %v1831, 0.0
    %v2524 = vmax.f32 %v1834, 0.0
    %v2525 = vmax.f32 %v1839, 0.0
    %v2526 = vmax.f32 %v1842, 0.0
    %v2527 = vmax.f32 %v1847, 0.0
    %v2528 = vmax.f32 %v1850, 0.0
    %v2529 = vmax.f32 %v1855, 0.0
    %v2530 = vmax.f32 %v1858, 0.0
    %v2531 = vmax.f32 %v1863, 0.0
    %v2532 = vmax.f32 %v1866, 0.0
    %v2533 = vmax.f32 %v1871, 0.0
    %v2534 = vmax.f32 %v1874, 0.0
    %v2535 = vmax.f32 %v1879, 0.0
    %v2536 = vmax.f32 %v1882, 0.0
    %v2537 = vmax.f32 %v1887, 0.0
    %v2538 = vmax.f32 %v1890, 0.0
    %v2539 = vmax.f32 %v1895, 0.0
    %v2540 = vmax.f32 %v1898, 0.0
    %v2541 = vmax.f32 %v1903, 0.0
    %v2542 = vmax.f32 %v1906, 0.0
    %v2543 = vmax.f32 %v1911, 0.0
    %v2544 = vmax.f32 %v1914, 0.0
    %v2545 = vmax.f32 %v1919, 0.0
    %v2546 = vmax.f32 %v1922, 0.0
    %v2547 = vmax.f32 %v1927, 0.0
    %v2548 = vmax.f32 %v1930, 0.0
    %v2549 = vmax.f32 %v1935, 0.0
    %v2550 = vmax.f32 %v1938, 0.0
    %v2551 = vmax.f32 %v1943, 0.0
    %v2552 = vmax.f32 %v1946, 0.0
    %v2553 = vmax.f32 %v1951, 0.0
    %v2554 = vmax.f32 %v1954, 0.0
    %v2555 = vmax.f32 %v1959, 0.0
    %v2556 = vmax.f32 %v1962, 0.0
    %v2557 = vmax.f32 %v1967, 0.0
    %v2558 = vmax.f32 %v1970, 0.0
    %v2559 = vmax.f32 %v1975, 0.0
    %v2560 = vmax.f32 %v1978, 0.0
    %v2561 = vmax.f32 %v1983, 0.0
    %v2562 = vmax.f32 %v1986, 0.0
    %v2563 = vmax.f32 %v1991, 0.0
    %v2564 = vmax.f32 %v1994, 0.0
    %v2565 = vmax.f32 %v1999, 0.0
    %v2566 = vmax.f32 %v2002, 0.0
    %v2567 = vmax.f32 %v2007, 0.0
    %v2568 = vmax.f32 %v2010, 0.0
    %v2569 = vmax.f32 %v2015, 0.0
    %v2570 = vmax.f32 %v2018, 0.0
    %v2571 = vmax.f32 %v2023, 0.0
    %v2572 = vmax.f32 %v2026, 0.0
    %v2573 = vmax.f32 %v2031, 0.0
    %v2574 = vmax.f32 %v2034, 0.0
    %v2575 = vmax.f32 %v2039, 0.0
    %v2576 = vmax.f32 %v2042, 0.0
    %v2577 = vmax.f32 %v2047, 0.0
    %v2578 = vmax.f32 %v2050, 0.0
    %v2579 = vmax.f32 %v2055, 0.0
    %v2580 = vmax.f32 %v2058, 0.0
    %v2581 = vmax.f32 %v2063, 0.0
    %v2582 = vmax.f32 %v2066, 0.0
    %v2583 = vmax.f32 %v2071, 0.0
    %v2584 = vmax.f32 %v2074, 0.0
    %v2585 = vmax.f32 %v2079, 0.0
    %v2586 = vmax.f32 %v2082, 0.0
    %v2587 = vmax.f32 %v2087, 0.0
    %v2588 = vmax.f32 %v2090, 0.0
    %v2589 = vmax.f32 %v2095, 0.0
    %v2590 = vmax.f32 %v2098, 0.0
    %v2591 = vmax.f32 %v2103, 0.0
    %v2592 = vmax.f32 %v2106, 0.0
    %v2593 = vmax.f32 %v2111, 0.0
    %v2594 = vmax.f32 %v2114, 0.0
    %v2595 = vmax.f32 %v2119, 0.0
    %v2596 = vmax.f32 %v2122, 0.0
    %v2597 = vmax.f32 %v2127, 0.0
    %v2598 = vmax.f32 %v2130, 0.0
    %v2599 = vmax.f32 %v2135, 0.0
    %v2600 = vmax.f32 %v2138, 0.0
    %v2601 = vmax.f32 %v2143, 0.0
    %v2602 = vmax.f32 %v2146, 0.0
    %v2603 = vmax.f32 %v2151, 0.0
    %v2604 = vmax.f32 %v2154, 0.0
    %v2605 = vmax.f32 %v2159, 0.0
    %v2606 = vmax.f32 %v2162, 0.0
    %v2607 = vmax.f32 %v2167, 0.0
    %v2608 = vmax.f32 %v2170, 0.0
    %v2609 = vmax.f32 %v2175, 0.0
    %v2610 = vmax.f32 %v2178, 0.0
    %v2611 = vmax.f32 %v2183, 0.0
    %v2612 = vmax.f32 %v2186, 0.0
    %v2613 = vmax.f32 %v2191, 0.0
    %v2614 = vmax.f32 %v2194, 0.0
    %v2615 = vmax.f32 %v2199, 0.0
    %v2616 = vmax.f32 %v2202, 0.0
    %v2617 = vmax.f32 %v2207, 0.0
    %v2618 = vmax.f32 %v2210, 0.0
    %v2619 = vmax.f32 %v2215, 0.0
    %v2620 = vmax.f32 %v2218, 0.0
    %v2621 = vmax.f32 %v2223, 0.0
    %v2622 = vmax.f32 %v2226, 0.0
    %v2623 = vmax.f32 %v2231, 0.0
    %v2624 = vmax.f32 %v2234, 0.0
    %v2625 = vmax.f32 %v2239, 0.0
    %v2626 = vmax.f32 %v2242, 0.0
    %v2627 = vmax.f32 %v2247, 0.0
    %v2628 = vmax.f32 %v2250, 0.0
    %v2629 = vmax.f32 %v2255, 0.0
    %v2630 = vmax.f32 %v2258, 0.0
    %v2631 = vmax.f32 %v2263, 0.0
    %v2632 = vmax.f32 %v2266, 0.0
    %v2633 = vmax.f32 %v2271, 0.0
    %v2634 = vmax.f32 %v2274, 0.0
    %v2635 = vmax.f32 %v2279, 0.0
    %v2636 = vmax.f32 %v2282, 0.0
    %v2637 = vmax.f32 %v2287, 0.0
    %v2638 = vmax.f32 %v2290, 0.0
    %v2639 = vmax.f32 %v2295, 0.0
    %v2640 = vmax.f32 %v2298, 0.0
    %v2641 = vmax.f32 %v2303, 0.0
    %v2642 = vmax.f32 %v2306, 0.0
    %v2643 = vmax.f32 %v2311, 0.0
    %v2644 = vmax.f32 %v2314, 0.0
    %v2645 = vmax.f32 %v2319, 0.0
    %v2646 = vmax.f32 %v2322, 0.0
    %v2647 = vmax.f32 %v2327, 0.0
    %v2648 = vmax.f32 %v2330, 0.0
    %v2649 = vmax.f32 %v2335, 0.0
    %v2650 = vmax.f32 %v2338, 0.0
    %v2651 = vmax.f32 %v2343, 0.0
    %v2652 = vmax.f32 %v2346, 0.0
    %v2653 = vmax.f32 %v2351, 0.0
    %v2654 = vmax.f32 %v2354, 0.0
    %v2655 = vmax.f32 %v2359, 0.0
    %v2656 = vmax.f32 %v2362, 0.0
    %v2657 = vmax.f32 %v2367, 0.0
    %v2658 = vmax.f32 %v2370, 0.0
    %v2659 = vmax.f32 %v2375, 0.0
    %v2660 = vmax.f32 %v2378, 0.0
    %v2661 = vmax.f32 %v2383, 0.0
    %v2662 = vmax.f32 %v2386, 0.0
    %v2663 = vmax.f32 %v2391, 0.0
    %v2664 = vmax.f32 %v2394, 0.0
    %v2665 = vmax.f32 %v2399, 0.0
    %v2666 = vmax.f32 %v2402, 0.0
    %v2667 = vmax.f32 %v2407, 0.0
    %v2668 = vmax.f32 %v2410, 0.0
    %v2669 = vadd.f32 %v2413, %v2414
    %v2670 = vadd.f32 %v2669, %v2415
    %v2671 = vadd.f32 %v2670, %v2416
    %v2672 = vadd.f32 %v2671, %v2417
    %v2673 = vadd.f32 %v2672, %v2418
    %v2674 = vadd.f32 %v2673, %v2419
    %v2675 = vadd.f32 %v2674, %v2420
    %v2676 = vadd.f32 %v2675, %v2421
    %v2677 = vadd.f32 %v2676, %v2422
    %v2678 = vadd.f32 %v2677, %v2423
    %v2679 = vadd.f32 %v2678, %v2424
    %v2680 = vadd.f32 %v2679, %v2425
    %v2681 = vadd.f32 %v2680, %v2426
    %v2682 = vadd.f32 %v2681, %v2427
    %v2683 = vadd.f32 %v2682, %v2428
    %v2684 = vadd.f32 %v2683, %v2429
    %v2685 = vadd.f32 %v2684, %v2430
    %v2686 = vadd.f32 %v2685, %v2431
    %v2687 = vadd.f32 %v2686, %v2432
    %v2688 = vadd.f32 %v2687, %v2433
    %v2689 = vadd.f32 %v2688, %v2434
    %v2690 = vadd.f32 %v2689, %v2435
    %v2691 = vadd.f32 %v2690, %v2436
    %v2692 = vadd.f32 %v2691, %v2437
    %v2693 = vadd.f32 %v2692, %v2438
    %v2694 = vadd.f32 %v2693, %v2439
    %v2695 = vadd.f32 %v2694, %v2440
    %v2696 = vadd.f32 %v2695, %v2441
    %v2697 = vadd.f32 %v2696, %v2442
    %v2698 = vadd.f32 %v2697, %v2443
    %v2699 = vadd.f32 %v2698, %v2444
    %v2700 = vrot.slane %v2699, 4
    %v2701 = vadd.f32 %v2699, %v2700
    %v2702 = vrot.slane %v2701, 2
    %v2703 = vadd.f32 %v2701, %v2702
    %v2704 = vrot.slane %v2703, 1
    %v2705 = vadd.f32 %v2703, %v2704
    %v2706 = vrcp.pop 256.0
    %v2707 = vmul.f32 %v2705, %v2706
    %2708 = vst [vmem:[#allocation2] sm:$0x1] %v2707
    %v2709 = vadd.f32 %v2445, %v2446
    %v2710 = vadd.f32 %v2709, %v2447
    %v2711 = vadd.f32 %v2710, %v2448
    %v2712 = vadd.f32 %v2711, %v2449
    %v2713 = vadd.f32 %v2712, %v2450
    %v2714 = vadd.f32 %v2713, %v2451
    %v2715 = vadd.f32 %v2714, %v2452
    %v2716 = vadd.f32 %v2715, %v2453
    %v2717 = vadd.f32 %v2716, %v2454
    %v2718 = vadd.f32 %v2717, %v2455
    %v2719 = vadd.f32 %v2718, %v2456
    %v2720 = vadd.f32 %v2719, %v2457
    %v2721 = vadd.f32 %v2720, %v2458
    %v2722 = vadd.f32 %v2721, %v2459
    %v2723 = vadd.f32 %v2722, %v2460
    %v2724 = vadd.f32 %v2723, %v2461
    %v2725 = vadd.f32 %v2724, %v2462
    %v2726 = vadd.f32 %v2725, %v2463
    %v2727 = vadd.f32 %v2726, %v2464
    %v2728 = vadd.f32 %v2727, %v2465
    %v2729 = vadd.f32 %v2728, %v2466
    %v2730 = vadd.f32 %v2729, %v2467
    %v2731 = vadd.f32 %v2730, %v2468
    %v2732 = vadd.f32 %v2731, %v2469
    %v2733 = vadd.f32 %v2732, %v2470
    %v2734 = vadd.f32 %v2733, %v2471
    %v2735 = vadd.f32 %v2734, %v2472
    %v2736 = vadd.f32 %v2735, %v2473
    %v2737 = vadd.f32 %v2736, %v2474
    %v2738 = vadd.f32 %v2737, %v2475
    %v2739 = vadd.f32 %v2738, %v2476
    %v2740 = vrot.slane %v2739, 4
    %v2741 = vadd.f32 %v2739, %v2740
    %v2742 = vrot.slane %v2741, 2
    %v2743 = vadd.f32 %v2741, %v2742
    %v2744 = vrot.slane %v2743, 1
    %v2745 = vadd.f32 %v2743, %v2744
    %v2746 = vmul.f32 %v2745, %v2706
    %2747 = vst [vmem:[#allocation2 + $0x1] sm:$0x1] %v2746
    %v2748 = vadd.f32 %v2477, %v2478
    %v2749 = vadd.f32 %v2748, %v2479
    %v2750 = vadd.f32 %v2749, %v2480
    %v2751 = vadd.f32 %v2750, %v2481
    %v2752 = vadd.f32 %v2751, %v2482
    %v2753 = vadd.f32 %v2752, %v2483
    %v2754 = vadd.f32 %v2753, %v2484
    %v2755 = vadd.f32 %v2754, %v2485
    %v2756 = vadd.f32 %v2755, %v2486
    %v2757 = vadd.f32 %v2756, %v2487
    %v2758 = vadd.f32 %v2757, %v2488
    %v2759 = vadd.f32 %v2758, %v2489
    %v2760 = vadd.f32 %v2759, %v2490
    %v2761 = vadd.f32 %v2760, %v2491
    %v2762 = vadd.f32 %v2761, %v2492
    %v2763 = vadd.f32 %v2762, %v2493
    %v2764 = vadd.f32 %v2763, %v2494
    %v2765 = vadd.f32 %v2764, %v2495
    %v2766 = vadd.f32 %v2765, %v2496
    %v2767 = vadd.f32 %v2766, %v2497
    %v2768 = vadd.f32 %v2767, %v2498
    %v2769 = vadd.f32 %v2768, %v2499
    %v2770 = vadd.f32 %v2769, %v2500
    %v2771 = vadd.f32 %v2770, %v2501
    %v2772 = vadd.f32 %v2771, %v2502
    %v2773 = vadd.f32 %v2772, %v2503
    %v2774 = vadd.f32 %v2773, %v2504
    %v2775 = vadd.f32 %v2774, %v2505
    %v2776 = vadd.f32 %v2775, %v2506
    %v2777 = vadd.f32 %v2776, %v2507
    %v2778 = vadd.f32 %v2777, %v2508
    %v2779 = vrot.slane %v2778, 4
    %v2780 = vadd.f32 %v2778, %v2779
    %v2781 = vrot.slane %v2780, 2
    %v2782 = vadd.f32 %v2780, %v2781
    %v2783 = vrot.slane %v2782, 1
    %v2784 = vadd.f32 %v2782, %v2783
    %v2785 = vmul.f32 %v2784, %v2706
    %2786 = vst [vmem:[#allocation2 + $0x2] sm:$0x1] %v2785
    %v2787 = vadd.f32 %v2509, %v2510
    %v2788 = vadd.f32 %v2787, %v2511
    %v2789 = vadd.f32 %v2788, %v2512
    %v2790 = vadd.f32 %v2789, %v2513
    %v2791 = vadd.f32 %v2790, %v2514
    %v2792 = vadd.f32 %v2791, %v2515
    %v2793 = vadd.f32 %v2792, %v2516
    %v2794 = vadd.f32 %v2793, %v2517
    %v2795 = vadd.f32 %v2794, %v2518
    %v2796 = vadd.f32 %v2795, %v2519
    %v2797 = vadd.f32 %v2796, %v2520
    %v2798 = vadd.f32 %v2797, %v2521
    %v2799 = vadd.f32 %v2798, %v2522
    %v2800 = vadd.f32 %v2799, %v2523
    %v2801 = vadd.f32 %v2800, %v2524
    %v2802 = vadd.f32 %v2801, %v2525
    %v2803 = vadd.f32 %v2802, %v2526
    %v2804 = vadd.f32 %v2803, %v2527
    %v2805 = vadd.f32 %v2804, %v2528
    %v2806 = vadd.f32 %v2805, %v2529
    %v2807 = vadd.f32 %v2806, %v2530
    %v2808 = vadd.f32 %v2807, %v2531
    %v2809 = vadd.f32 %v2808, %v2532
    %v2810 = vadd.f32 %v2809, %v2533
    %v2811 = vadd.f32 %v2810, %v2534
    %v2812 = vadd.f32 %v2811, %v2535
    %v2813 = vadd.f32 %v2812, %v2536
    %v2814 = vadd.f32 %v2813, %v2537
    %v2815 = vadd.f32 %v2814, %v2538
    %v2816 = vadd.f32 %v2815, %v2539
    %v2817 = vadd.f32 %v2816, %v2540
    %v2818 = vrot.slane %v2817, 4
    %v2819 = vadd.f32 %v2817, %v2818
    %v2820 = vrot.slane %v2819, 2
    %v2821 = vadd.f32 %v2819, %v2820
    %v2822 = vrot.slane %v2821, 1
    %v2823 = vadd.f32 %v2821, %v2822
    %v2824 = vmul.f32 %v2823, %v2706
    %2825 = vst [vmem:[#allocation2 + $0x3] sm:$0x1] %v2824
    %v2826 = vadd.f32 %v2541, %v2542
    %v2827 = vadd.f32 %v2826, %v2543
    %v2828 = vadd.f32 %v2827, %v2544
    %v2829 = vadd.f32 %v2828, %v2545
    %v2830 = vadd.f32 %v2829, %v2546
    %v2831 = vadd.f32 %v2830, %v2547
    %v2832 = vadd.f32 %v2831, %v2548
    %v2833 = vadd.f32 %v2832, %v2549
    %v2834 = vadd.f32 %v2833, %v2550
    %v2835 = vadd.f32 %v2834, %v2551
    %v2836 = vadd.f32 %v2835, %v2552
    %v2837 = vadd.f32 %v2836, %v2553
    %v2838 = vadd.f32 %v2837, %v2554
    %v2839 = vadd.f32 %v2838, %v2555
    %v2840 = vadd.f32 %v2839, %v2556
    %v2841 = vadd.f32 %v2840, %v2557
    %v2842 = vadd.f32 %v2841, %v2558
    %v2843 = vadd.f32 %v2842, %v2559
    %v2844 = vadd.f32 %v2843, %v2560
    %v2845 = vadd.f32 %v2844, %v2561
    %v2846 = vadd.f32 %v2845, %v2562
    %v2847 = vadd.f32 %v2846, %v2563
    %v2848 = vadd.f32 %v2847, %v2564
    %v2849 = vadd.f32 %v2848, %v2565
    %v2850 = vadd.f32 %v2849, %v2566
    %v2851 = vadd.f32 %v2850, %v2567
    %v2852 = vadd.f32 %v2851, %v2568
    %v2853 = vadd.f32 %v2852, %v2569
    %v2854 = vadd.f32 %v2853, %v2570
    %v2855 = vadd.f32 %v2854, %v2571
    %v2856 = vadd.f32 %v2855, %v2572
    %v2857 = vrot.slane %v2856, 4
    %v2858 = vadd.f32 %v2856, %v2857
    %v2859 = vrot.slane %v2858, 2
    %v2860 = vadd.f32 %v2858, %v2859
    %v2861 = vrot.slane %v2860, 1
    %v2862 = vadd.f32 %v2860, %v2861
    %v2863 = vmul.f32 %v2862, %v2706
    %2864 = vst [vmem:[#allocation2 + $0x4] sm:$0x1] %v2863
    %v2865 = vadd.f32 %v2573, %v2574
    %v2866 = vadd.f32 %v2865, %v2575
    %v2867 = vadd.f32 %v2866, %v2576
    %v2868 = vadd.f32 %v2867, %v2577
    %v2869 = vadd.f32 %v2868, %v2578
    %v2870 = vadd.f32 %v2869, %v2579
    %v2871 = vadd.f32 %v2870, %v2580
    %v2872 = vadd.f32 %v2871, %v2581
    %v2873 = vadd.f32 %v2872, %v2582
    %v2874 = vadd.f32 %v2873, %v2583
    %v2875 = vadd.f32 %v2874, %v2584
    %v2876 = vadd.f32 %v2875, %v2585
    %v2877 = vadd.f32 %v2876, %v2586
    %v2878 = vadd.f32 %v2877, %v2587
    %v2879 = vadd.f32 %v2878, %v2588
    %v2880 = vadd.f32 %v2879, %v2589
    %v2881 = vadd.f32 %v2880, %v2590
    %v2882 = vadd.f32 %v2881, %v2591
    %v2883 = vadd.f32 %v2882, %v2592
    %v2884 = vadd.f32 %v2883, %v2593
    %v2885 = vadd.f32 %v2884, %v2594
    %v2886 = vadd.f32 %v2885, %v2595
    %v2887 = vadd.f32 %v2886, %v2596
    %v2888 = vadd.f32 %v2887, %v2597
    %v2889 = vadd.f32 %v2888, %v2598
    %v2890 = vadd.f32 %v2889, %v2599
    %v2891 = vadd.f32 %v2890, %v2600
    %v2892 = vadd.f32 %v2891, %v2601
    %v2893 = vadd.f32 %v2892, %v2602
    %v2894 = vadd.f32 %v2893, %v2603
    %v2895 = vadd.f32 %v2894, %v2604
    %v2896 = vrot.slane %v2895, 4
    %v2897 = vadd.f32 %v2895, %v2896
    %v2898 = vrot.slane %v2897, 2
    %v2899 = vadd.f32 %v2897, %v2898
    %v2900 = vrot.slane %v2899, 1
    %v2901 = vadd.f32 %v2899, %v2900
    %v2902 = vmul.f32 %v2901, %v2706
    %2903 = vst [vmem:[#allocation2 + $0x5] sm:$0x1] %v2902
    %v2904 = vadd.f32 %v2605, %v2606
    %v2905 = vadd.f32 %v2904, %v2607
    %v2906 = vadd.f32 %v2905, %v2608
    %v2907 = vadd.f32 %v2906, %v2609
    %v2908 = vadd.f32 %v2907, %v2610
    %v2909 = vadd.f32 %v2908, %v2611
    %v2910 = vadd.f32 %v2909, %v2612
    %v2911 = vadd.f32 %v2910, %v2613
    %v2912 = vadd.f32 %v2911, %v2614
    %v2913 = vadd.f32 %v2912, %v2615
    %v2914 = vadd.f32 %v2913, %v2616
    %v2915 = vadd.f32 %v2914, %v2617
    %v2916 = vadd.f32 %v2915, %v2618
    %v2917 = vadd.f32 %v2916, %v2619
    %v2918 = vadd.f32 %v2917, %v2620
    %v2919 = vadd.f32 %v2918, %v2621
    %v2920 = vadd.f32 %v2919, %v2622
    %v2921 = vadd.f32 %v2920, %v2623
    %v2922 = vadd.f32 %v2921, %v2624
    %v2923 = vadd.f32 %v2922, %v2625
    %v2924 = vadd.f32 %v2923, %v2626
    %v2925 = vadd.f32 %v2924, %v2627
    %v2926 = vadd.f32 %v2925, %v2628
    %v2927 = vadd.f32 %v2926, %v2629
    %v2928 = vadd.f32 %v2927, %v2630
    %v2929 = vadd.f32 %v2928, %v2631
    %v2930 = vadd.f32 %v2929, %v2632
    %v2931 = vadd.f32 %v2930, %v2633
    %v2932 = vadd.f32 %v2931, %v2634
    %v2933 = vadd.f32 %v2932, %v2635
    %v2934 = vadd.f32 %v2933, %v2636
    %v2935 = vrot.slane %v2934, 4
    %v2936 = vadd.f32 %v2934, %v2935
    %v2937 = vrot.slane %v2936, 2
    %v2938 = vadd.f32 %v2936, %v2937
    %v2939 = vrot.slane %v2938, 1
    %v2940 = vadd.f32 %v2938, %v2939
    %v2941 = vmul.f32 %v2940, %v2706
    %2942 = vst [vmem:[#allocation2 + $0x6] sm:$0x1] %v2941
    %v2943 = vadd.f32 %v2637, %v2638
    %v2944 = vadd.f32 %v2943, %v2639
    %v2945 = vadd.f32 %v2944, %v2640
    %v2946 = vadd.f32 %v2945, %v2641
    %v2947 = vadd.f32 %v2946, %v2642
    %v2948 = vadd.f32 %v2947, %v2643
    %v2949 = vadd.f32 %v2948, %v2644
    %v2950 = vadd.f32 %v2949, %v2645
    %v2951 = vadd.f32 %v2950, %v2646
    %v2952 = vadd.f32 %v2951, %v2647
    %v2953 = vadd.f32 %v2952, %v2648
    %v2954 = vadd.f32 %v2953, %v2649
    %v2955 = vadd.f32 %v2954, %v2650
    %v2956 = vadd.f32 %v2955, %v2651
    %v2957 = vadd.f32 %v2956, %v2652
    %v2958 = vadd.f32 %v2957, %v2653
    %v2959 = vadd.f32 %v2958, %v2654
    %v2960 = vadd.f32 %v2959, %v2655
    %v2961 = vadd.f32 %v2960, %v2656
    %v2962 = vadd.f32 %v2961, %v2657
    %v2963 = vadd.f32 %v2962, %v2658
    %v2964 = vadd.f32 %v2963, %v2659
    %v2965 = vadd.f32 %v2964, %v2660
    %v2966 = vadd.f32 %v2965, %v2661
    %v2967 = vadd.f32 %v2966, %v2662
    %v2968 = vadd.f32 %v2967, %v2663
    %v2969 = vadd.f32 %v2968, %v2664
    %v2970 = vadd.f32 %v2969, %v2665
    %v2971 = vadd.f32 %v2970, %v2666
    %v2972 = vadd.f32 %v2971, %v2667
    %v2973 = vadd.f32 %v2972, %v2668
    %v2974 = vrot.slane %v2973, 4
    %v2975 = vadd.f32 %v2973, %v2974
    %v2976 = vrot.slane %v2975, 2
    %v2977 = vadd.f32 %v2975, %v2976
    %v2978 = vrot.slane %v2977, 1
    %v2979 = vadd.f32 %v2977, %v2978
    %v2980 = vmul.f32 %v2979, %v2706
    %2981 = vst [vmem:[#allocation2 + $0x7] sm:$0x1] %v2980
    %v2982 = vld [vmem:[#allocation2] sm:$0xff]
    %v2983 = vld [vmem:[%s3] sm:$0xff]
    %v2984 = vld [vmem:[%s3 + $0x8] sm:$0xff]
    %v2985 = vld [vmem:[%s3 + $0x10] sm:$0xff]
    %v2986 = vld [vmem:[%s3 + $0x18] sm:$0xff]
    %v2987 = vld [vmem:[%s3 + $0x20] sm:$0xff]
    %v2988 = vld [vmem:[%s3 + $0x28] sm:$0xff]
    %v2989 = vld [vmem:[%s3 + $0x30] sm:$0xff]
    %v2990 = vld [vmem:[%s3 + $0x38] sm:$0xff]
    %v2991 = vld [vmem:[%s3 + $0x40] sm:$0xff]
    %v2992 = vld [vmem:[%s3 + $0x48] sm:$0xff]
    %v2993 = vld [vmem:[%s3 + $0x50] sm:$0xff]
    %v2994 = vld [vmem:[%s3 + $0x58] sm:$0xff]
    %v2995 = vld [vmem:[%s3 + $0x60] sm:$0xff]
    %v2996 = vld [vmem:[%s3 + $0x68] sm:$0xff]
    %v2997 = vld [vmem:[%s3 + $0x70] sm:$0xff]
    %v2998 = vld [vmem:[%s3 + $0x78] sm:$0xff]
    %v2999 = vld [vmem:[%s4] sm:$0xff]
    %v3000 = vld [vmem:[%s4 + $0x8] sm:$0xff]
    %v3001 = vld [vmem:[%s4 + $0x10] sm:$0xff]
    %v3002 = vld [vmem:[%s4 + $0x18] sm:$0xff]
    %v3003 = vld [vmem:[%s5] sm:$0x1]
    %v3004 = vld [vmem:[%s6] sm:$0xff]
    %v3005 = vld [vmem:[%s6 + $0x8] sm:$0xff]
    %v3006 = vld [vmem:[%s6 + $0x10] sm:$0xff]
    %v3007 = vld [vmem:[%s6 + $0x18] sm:$0xff]
    %v3008 = vld [vmem:[%s7] sm:$0xff]
    %v3009 = vld [vmem:[%s7 + $0x8] sm:$0xff]
    %v3010 = vld [vmem:[%s7 + $0x10] sm:$0xff]
    %v3011 = vld [vmem:[%s7 + $0x18] sm:$0xff]
    %v3012 = vld [vmem:[%s8] sm:$0x1]
    %v3014 = vlaneseq
    %v3015 = vshrl.u32 %v3014, 7
    %v3016 = vsub.s32 0, %v3015
    %v3017 = vrot.slane %v3003, %v3016
    %3019 = vmatprep.subr.mxu0 0.0
    %3020 = vmatpush1.msra.mxu0 %v2983
    %3021 = vmatprep.subr.mxu0 0.0
    %3022 = vmatpush1.msra.mxu0 %v2984
    %3023 = vmatprep.subr.mxu0 0.0
    %3024 = vmatpush1.msra.mxu0 %v2985
    %3025 = vmatprep.subr.mxu0 0.0
    %3026 = vmatpush1.msra.mxu0 %v2986
    %3027 = vmatprep.subr.mxu0 0.0
    %3028 = vmatpush1.msra.mxu0 %v2987
    %3029 = vmatprep.subr.mxu0 0.0
    %3030 = vmatpush1.msra.mxu0 %v2988
    %3031 = vmatprep.subr.mxu0 0.0
    %3032 = vmatpush1.msra.mxu0 %v2989
    %3033 = vmatprep.subr.mxu0 0.0
    %3034 = vmatpush1.msra.mxu0 %v2990
    %3035 = vmatprep.subr.mxu0 0.0
    %3036 = vmatpush1.msra.mxu0 %v2991
    %3037 = vmatprep.subr.mxu0 0.0
    %3038 = vmatpush1.msra.mxu0 %v2992
    %3039 = vmatprep.subr.mxu0 0.0
    %3040 = vmatpush1.msra.mxu0 %v2993
    %3041 = vmatprep.subr.mxu0 0.0
    %3042 = vmatpush1.msra.mxu0 %v2994
    %3043 = vmatprep.subr.mxu0 0.0
    %3044 = vmatpush1.msra.mxu0 %v2995
    %3045 = vmatprep.subr.mxu0 0.0
    %3046 = vmatpush1.msra.mxu0 %v2996
    %3047 = vmatprep.subr.mxu0 0.0
    %3048 = vmatpush1.msra.mxu0 %v2997
    %3049 = vmatprep.subr.mxu0 0.0
    %3050 = vmatpush1.msra.mxu0 %v2998
    %3051 = vmatprep.subr.mxu0 0.0
    %3052 = vmatpush1.msra.mxu0 0.0
    %3053 = vmatprep.subr.mxu0 0.0
    %3054 = vmatpush1.msra.mxu0 0.0
    %3055 = vmatprep.subr.mxu0 0.0
    %3056 = vmatpush1.msra.mxu0 0.0
    %3057 = vmatprep.subr.mxu0 0.0
    %3058 = vmatpush1.msra.mxu0 0.0
    %3059 = vmatprep.subr.mxu0 0.0
    %3060 = vmatpush1.msra.mxu0 0.0
    %3061 = vmatprep.subr.mxu0 0.0
    %3062 = vmatpush1.msra.mxu0 0.0
    %3063 = vmatprep.subr.mxu0 0.0
    %3064 = vmatpush1.msra.mxu0 0.0
    %3065 = vmatprep.subr.mxu0 0.0
    %3066 = vmatpush1.msra.mxu0 0.0
    %3067 = vmatprep.subr.mxu0 0.0
    %3068 = vmatpush1.msra.mxu0 0.0
    %3069 = vmatprep.subr.mxu0 0.0
    %3070 = vmatpush1.msra.mxu0 0.0
    %3071 = vmatprep.subr.mxu0 0.0
    %3072 = vmatpush1.msra.mxu0 0.0
    %3073 = vmatprep.subr.mxu0 0.0
    %3074 = vmatpush1.msra.mxu0 0.0
    %3075 = vmatprep.subr.mxu0 0.0
    %3076 = vmatpush1.msra.mxu0 0.0
    %3077 = vmatprep.subr.mxu0 0.0
    %3078 = vmatpush1.msra.mxu0 0.0
    %3079 = vmatprep.subr.mxu0 0.0
    %3080 = vmatpush1.msra.mxu0 0.0
    %3081 = vmatprep.subr.mxu0 0.0
    %3082 = vmatpush1.msra.mxu0 0.0
    %3083 = vmatprep.mubr.f32.mxu0 0.0
    %3084 = vmatmul.mubr.f32.gmra.mrb[0].mxu0 %v2982
    %v3085 = vpop.f32.mrb[0].mxu0
    %v3086 = vadd.f32 %v3017, %v3085
    %v3087 = vpop.f32.mrb[0].mxu0
    %3088 = vdwg.mxu0
    %v3090 = vsel %vm971, 0.0, 0
    %3092 = vmatprep.subr.mxu0 0.0
    %3093 = vmatpush1.msra.mxu0 %v2999
    %3094 = vmatprep.subr.mxu0 0.0
    %3095 = vmatpush1.msra.mxu0 %v3000
    %3096 = vmatprep.subr.mxu0 0.0
    %3097 = vmatpush1.msra.mxu0 %v3001
    %3098 = vmatprep.subr.mxu0 0.0
    %3099 = vmatpush1.msra.mxu0 %v3002
    %3100 = vmatprep.subr.mxu0 0.0
    %3101 = vmatpush1.msra.mxu0 0.0
    %3102 = vmatprep.subr.mxu0 0.0
    %3103 = vmatpush1.msra.mxu0 0.0
    %3104 = vmatprep.subr.mxu0 0.0
    %3105 = vmatpush1.msra.mxu0 0.0
    %3106 = vmatprep.subr.mxu0 0.0
    %3107 = vmatpush1.msra.mxu0 0.0
    %3108 = vmatprep.subr.mxu0 0.0
    %3109 = vmatpush1.msra.mxu0 0.0
    %3110 = vmatprep.subr.mxu0 0.0
    %3111 = vmatpush1.msra.mxu0 0.0
    %3112 = vmatprep.subr.mxu0 0.0
    %3113 = vmatpush1.msra.mxu0 0.0
    %3114 = vmatprep.subr.mxu0 0.0
    %3115 = vmatpush1.msra.mxu0 0.0
    %3116 = vmatprep.subr.mxu0 0.0
    %3117 = vmatpush1.msra.mxu0 0.0
    %3118 = vmatprep.subr.mxu0 0.0
    %3119 = vmatpush1.msra.mxu0 0.0
    %3120 = vmatprep.subr.mxu0 0.0
    %3121 = vmatpush1.msra.mxu0 0.0
    %3122 = vmatprep.subr.mxu0 0.0
    %3123 = vmatpush1.msra.mxu0 0.0
    %3124 = vmatprep.subr.mxu0 0.0
    %3125 = vmatpush1.msra.mxu0 0.0
    %3126 = vmatprep.subr.mxu0 0.0
    %3127 = vmatpush1.msra.mxu0 0.0
    %3128 = vmatprep.subr.mxu0 0.0
    %3129 = vmatpush1.msra.mxu0 0.0
    %3130 = vmatprep.subr.mxu0 0.0
    %3131 = vmatpush1.msra.mxu0 0.0
    %3132 = vmatprep.subr.mxu0 0.0
    %3133 = vmatpush1.msra.mxu0 0.0
    %3134 = vmatprep.subr.mxu0 0.0
    %3135 = vmatpush1.msra.mxu0 0.0
    %3136 = vmatprep.subr.mxu0 0.0
    %3137 = vmatpush1.msra.mxu0 0.0
    %3138 = vmatprep.subr.mxu0 0.0
    %3139 = vmatpush1.msra.mxu0 0.0
    %3140 = vmatprep.subr.mxu0 0.0
    %3141 = vmatpush1.msra.mxu0 0.0
    %3142 = vmatprep.subr.mxu0 0.0
    %3143 = vmatpush1.msra.mxu0 0.0
    %3144 = vmatprep.subr.mxu0 0.0
    %3145 = vmatpush1.msra.mxu0 0.0
    %3146 = vmatprep.subr.mxu0 0.0
    %3147 = vmatpush1.msra.mxu0 0.0
    %3148 = vmatprep.subr.mxu0 0.0
    %3149 = vmatpush1.msra.mxu0 0.0
    %3150 = vmatprep.subr.mxu0 0.0
    %3151 = vmatpush1.msra.mxu0 0.0
    %3152 = vmatprep.subr.mxu0 0.0
    %3153 = vmatpush1.msra.mxu0 0.0
    %3154 = vmatprep.subr.mxu0 0.0
    %3155 = vmatpush1.msra.mxu0 0.0
    %3156 = vmatprep.mubr.f32.mxu0 0.0
    %3157 = vmatmul.mubr.f32.gmra.mrb[0].mxu0 %v3090
    %v3158 = vpop.f32.mrb[0].mxu0
    %v3159 = vadd.f32 0.0, %v3158
    %v3160 = vpop.f32.mrb[0].mxu0
    %3161 = vdwg.mxu0
    %v3162 = vadd.f32 %v3086, %v3159
    %v3163 = vxor.u32 %v3162, 2147483648
    %v3164 = vmul.f32 %v3163, 1.442695
    %v3165 = vpow.pop %v3164
    %v3166 = vadd.f32 %v3165, 1.0
    %v3167 = vrcp.pop %v3166
    %v3168 = vmul.f32 1.0, %v3167
    %v3169 = vtanh.pop %v3162
    %v3170 = vmul.f32 %v3168, 0.0
    %3172 = vrot.lane.b32.xlu0 %v3169, 64
    %v3173 = vpop.permute.xlu0 %3172
    %v3175 = vmul.f32 %v3168, %v3173
    %3177 = vrot.lane.b32.xlu0 %v3175, 32
    %v3178 = vpop.permute.xlu0 %3177
    %v3180 = vadd.f32 %v3170, %v3178
    %v3181 = vtanh.pop %v3180
    %3183 = vrot.lane.b32.xlu0 %v3181, 64
    %v3184 = vpop.permute.xlu0 %3183
    %v3186 = vmul.f32 %v3168, %v3184
    %v3188 = vlaneseq
    %v3189 = vshrl.u32 %v3188, 7
    %v3190 = vsub.s32 0, %v3189
    %v3191 = vrot.slane %v3012, %v3190
    %3194 = vrot.lane.b32.xlu0 %v3186, 32
    %v3195 = vpop.permute.xlu0 %3194
    %v3196 = vsel %vm971, %v3195, 0
    %3198 = vmatprep.subr.mxu0 0.0
    %3199 = vmatpush1.msra.mxu0 %v3004
    %3200 = vmatprep.subr.mxu0 0.0
    %3201 = vmatpush1.msra.mxu0 %v3005
    %3202 = vmatprep.subr.mxu0 0.0
    %3203 = vmatpush1.msra.mxu0 %v3006
    %3204 = vmatprep.subr.mxu0 0.0
    %3205 = vmatpush1.msra.mxu0 %v3007
    %3206 = vmatprep.subr.mxu0 0.0
    %3207 = vmatpush1.msra.mxu0 0.0
    %3208 = vmatprep.subr.mxu0 0.0
    %3209 = vmatpush1.msra.mxu0 0.0
    %3210 = vmatprep.subr.mxu0 0.0
    %3211 = vmatpush1.msra.mxu0 0.0
    %3212 = vmatprep.subr.mxu0 0.0
    %3213 = vmatpush1.msra.mxu0 0.0
    %3214 = vmatprep.subr.mxu0 0.0
    %3215 = vmatpush1.msra.mxu0 0.0
    %3216 = vmatprep.subr.mxu0 0.0
    %3217 = vmatpush1.msra.mxu0 0.0
    %3218 = vmatprep.subr.mxu0 0.0
    %3219 = vmatpush1.msra.mxu0 0.0
    %3220 = vmatprep.subr.mxu0 0.0
    %3221 = vmatpush1.msra.mxu0 0.0
    %3222 = vmatprep.subr.mxu0 0.0
    %3223 = vmatpush1.msra.mxu0 0.0
    %3224 = vmatprep.subr.mxu0 0.0
    %3225 = vmatpush1.msra.mxu0 0.0
    %3226 = vmatprep.subr.mxu0 0.0
    %3227 = vmatpush1.msra.mxu0 0.0
    %3228 = vmatprep.subr.mxu0 0.0
    %3229 = vmatpush1.msra.mxu0 0.0
    %3230 = vmatprep.subr.mxu0 0.0
    %3231 = vmatpush1.msra.mxu0 0.0
    %3232 = vmatprep.subr.mxu0 0.0
    %3233 = vmatpush1.msra.mxu0 0.0
    %3234 = vmatprep.subr.mxu0 0.0
    %3235 = vmatpush1.msra.mxu0 0.0
    %3236 = vmatprep.subr.mxu0 0.0
    %3237 = vmatpush1.msra.mxu0 0.0
    %3238 = vmatprep.subr.mxu0 0.0
    %3239 = vmatpush1.msra.mxu0 0.0
    %3240 = vmatprep.subr.mxu0 0.0
    %3241 = vmatpush1.msra.mxu0 0.0
    %3242 = vmatprep.subr.mxu0 0.0
    %3243 = vmatpush1.msra.mxu0 0.0
    %3244 = vmatprep.subr.mxu0 0.0
    %3245 = vmatpush1.msra.mxu0 0.0
    %3246 = vmatprep.subr.mxu0 0.0
    %3247 = vmatpush1.msra.mxu0 0.0
    %3248 = vmatprep.subr.mxu0 0.0
    %3249 = vmatpush1.msra.mxu0 0.0
    %3250 = vmatprep.subr.mxu0 0.0
    %3251 = vmatpush1.msra.mxu0 0.0
    %3252 = vmatprep.subr.mxu0 0.0
    %3253 = vmatpush1.msra.mxu0 0.0
    %3254 = vmatprep.subr.mxu0 0.0
    %3255 = vmatpush1.msra.mxu0 0.0
    %3256 = vmatprep.subr.mxu0 0.0
    %3257 = vmatpush1.msra.mxu0 0.0
    %3258 = vmatprep.subr.mxu0 0.0
    %3259 = vmatpush1.msra.mxu0 0.0
    %3260 = vmatprep.subr.mxu0 0.0
    %3261 = vmatpush1.msra.mxu0 0.0
    %3262 = vmatprep.mubr.f32.mxu0 0.0
    %3263 = vmatmul.mubr.f32.gmra.mrb[0].mxu0 %v3196
    %v3264 = vpop.f32.mrb[0].mxu0
    %v3265 = vadd.f32 %v3191, %v3264
    %v3266 = vpop.f32.mrb[0].mxu0
    %3267 = vdwg.mxu0
    %3268 = vmatprep.subr.mxu0 0.0
    %3269 = vmatpush1.msra.mxu0 %v3008
    %3270 = vmatprep.subr.mxu0 0.0
    %3271 = vmatpush1.msra.mxu0 %v3009
    %3272 = vmatprep.subr.mxu0 0.0
    %3273 = vmatpush1.msra.mxu0 %v3010
    %3274 = vmatprep.subr.mxu0 0.0
    %3275 = vmatpush1.msra.mxu0 %v3011
    %3276 = vmatprep.subr.mxu0 0.0
    %3277 = vmatpush1.msra.mxu0 0.0
    %3278 = vmatprep.subr.mxu0 0.0
    %3279 = vmatpush1.msra.mxu0 0.0
    %3280 = vmatprep.subr.mxu0 0.0
    %3281 = vmatpush1.msra.mxu0 0.0
    %3282 = vmatprep.subr.mxu0 0.0
    %3283 = vmatpush1.msra.mxu0 0.0
    %3284 = vmatprep.subr.mxu0 0.0
    %3285 = vmatpush1.msra.mxu0 0.0
    %3286 = vmatprep.subr.mxu0 0.0
    %3287 = vmatpush1.msra.mxu0 0.0
    %3288 = vmatprep.subr.mxu0 0.0
    %3289 = vmatpush1.msra.mxu0 0.0
    %3290 = vmatprep.subr.mxu0 0.0
    %3291 = vmatpush1.msra.mxu0 0.0
    %3292 = vmatprep.subr.mxu0 0.0
    %3293 = vmatpush1.msra.mxu0 0.0
    %3294 = vmatprep.subr.mxu0 0.0
    %3295 = vmatpush1.msra.mxu0 0.0
    %3296 = vmatprep.subr.mxu0 0.0
    %3297 = vmatpush1.msra.mxu0 0.0
    %3298 = vmatprep.subr.mxu0 0.0
    %3299 = vmatpush1.msra.mxu0 0.0
    %3300 = vmatprep.subr.mxu0 0.0
    %3301 = vmatpush1.msra.mxu0 0.0
    %3302 = vmatprep.subr.mxu0 0.0
    %3303 = vmatpush1.msra.mxu0 0.0
    %3304 = vmatprep.subr.mxu0 0.0
    %3305 = vmatpush1.msra.mxu0 0.0
    %3306 = vmatprep.subr.mxu0 0.0
    %3307 = vmatpush1.msra.mxu0 0.0
    %3308 = vmatprep.subr.mxu0 0.0
    %3309 = vmatpush1.msra.mxu0 0.0
    %3310 = vmatprep.subr.mxu0 0.0
    %3311 = vmatpush1.msra.mxu0 0.0
    %3312 = vmatprep.subr.mxu0 0.0
    %3313 = vmatpush1.msra.mxu0 0.0
    %3314 = vmatprep.subr.mxu0 0.0
    %3315 = vmatpush1.msra.mxu0 0.0
    %3316 = vmatprep.subr.mxu0 0.0
    %3317 = vmatpush1.msra.mxu0 0.0
    %3318 = vmatprep.subr.mxu0 0.0
    %3319 = vmatpush1.msra.mxu0 0.0
    %3320 = vmatprep.subr.mxu0 0.0
    %3321 = vmatpush1.msra.mxu0 0.0
    %3322 = vmatprep.subr.mxu0 0.0
    %3323 = vmatpush1.msra.mxu0 0.0
    %3324 = vmatprep.subr.mxu0 0.0
    %3325 = vmatpush1.msra.mxu0 0.0
    %3326 = vmatprep.subr.mxu0 0.0
    %3327 = vmatpush1.msra.mxu0 0.0
    %3328 = vmatprep.subr.mxu0 0.0
    %3329 = vmatpush1.msra.mxu0 0.0
    %3330 = vmatprep.subr.mxu0 0.0
    %3331 = vmatpush1.msra.mxu0 0.0
    %3332 = vmatprep.mubr.f32.mxu0 0.0
    %3333 = vmatmul.mubr.f32.gmra.mrb[0].mxu0 %v3090
    %v3334 = vpop.f32.mrb[0].mxu0
    %v3335 = vadd.f32 0.0, %v3334
    %v3336 = vpop.f32.mrb[0].mxu0
    %3337 = vdwg.mxu0
    %v3338 = vadd.f32 %v3265, %v3335
    %v3339 = vxor.u32 %v3338, 2147483648
    %v3340 = vmul.f32 %v3339, 1.442695
    %v3341 = vpow.pop %v3340
    %v3342 = vadd.f32 %v3341, 1.0
    %v3343 = vrcp.pop %v3342
    %v3344 = vmul.f32 1.0, %v3343
    %v3345 = vtanh.pop %v3338
    %v3346 = vmul.f32 %v3344, 0.0
    %3348 = vrot.lane.b32.xlu0 %v3345, 64
    %v3349 = vpop.permute.xlu0 %3348
    %v3351 = vmul.f32 %v3344, %v3349
    %3353 = vrot.lane.b32.xlu0 %v3351, 32
    %v3354 = vpop.permute.xlu0 %3353
    %v3356 = vadd.f32 %v3346, %v3354
    %v3357 = vtanh.pop %v3356
    %3359 = vrot.lane.b32.xlu0 %v3357, 64
    %v3360 = vpop.permute.xlu0 %3359
    %v3362 = vmul.f32 %v3344, %v3360
    %3363 = vmatprep.subr.mxu0 0.0
    %3364 = vmatpush1.msra.mxu0 %v2999
    %3365 = vmatprep.subr.mxu0 0.0
    %3366 = vmatpush1.msra.mxu0 %v3000
    %3367 = vmatprep.subr.mxu0 0.0
    %3368 = vmatpush1.msra.mxu0 %v3001
    %3369 = vmatprep.subr.mxu0 0.0
    %3370 = vmatpush1.msra.mxu0 %v3002
    %3371 = vmatprep.subr.mxu0 0.0
    %3372 = vmatpush1.msra.mxu0 0.0
    %3373 = vmatprep.subr.mxu0 0.0
    %3374 = vmatpush1.msra.mxu0 0.0
    %3375 = vmatprep.subr.mxu0 0.0
    %3376 = vmatpush1.msra.mxu0 0.0
    %3377 = vmatprep.subr.mxu0 0.0
    %3378 = vmatpush1.msra.mxu0 0.0
    %3379 = vmatprep.subr.mxu0 0.0
    %3380 = vmatpush1.msra.mxu0 0.0
    %3381 = vmatprep.subr.mxu0 0.0
    %3382 = vmatpush1.msra.mxu0 0.0
    %3383 = vmatprep.subr.mxu0 0.0
    %3384 = vmatpush1.msra.mxu0 0.0
    %3385 = vmatprep.subr.mxu0 0.0
    %3386 = vmatpush1.msra.mxu0 0.0
    %3387 = vmatprep.subr.mxu0 0.0
    %3388 = vmatpush1.msra.mxu0 0.0
    %3389 = vmatprep.subr.mxu0 0.0
    %3390 = vmatpush1.msra.mxu0 0.0
    %3391 = vmatprep.subr.mxu0 0.0
    %3392 = vmatpush1.msra.mxu0 0.0
    %3393 = vmatprep.subr.mxu0 0.0
    %3394 = vmatpush1.msra.mxu0 0.0
    %3395 = vmatprep.subr.mxu0 0.0
    %3396 = vmatpush1.msra.mxu0 0.0
    %3397 = vmatprep.subr.mxu0 0.0
    %3398 = vmatpush1.msra.mxu0 0.0
    %3399 = vmatprep.subr.mxu0 0.0
    %3400 = vmatpush1.msra.mxu0 0.0
    %3401 = vmatprep.subr.mxu0 0.0
    %3402 = vmatpush1.msra.mxu0 0.0
    %3403 = vmatprep.subr.mxu0 0.0
    %3404 = vmatpush1.msra.mxu0 0.0
    %3405 = vmatprep.subr.mxu0 0.0
    %3406 = vmatpush1.msra.mxu0 0.0
    %3407 = vmatprep.subr.mxu0 0.0
    %3408 = vmatpush1.msra.mxu0 0.0
    %3409 = vmatprep.subr.mxu0 0.0
    %3410 = vmatpush1.msra.mxu0 0.0
    %3411 = vmatprep.subr.mxu0 0.0
    %3412 = vmatpush1.msra.mxu0 0.0
    %3413 = vmatprep.subr.mxu0 0.0
    %3414 = vmatpush1.msra.mxu0 0.0
    %3415 = vmatprep.subr.mxu0 0.0
    %3416 = vmatpush1.msra.mxu0 0.0
    %3417 = vmatprep.subr.mxu0 0.0
    %3418 = vmatpush1.msra.mxu0 0.0
    %3419 = vmatprep.subr.mxu0 0.0
    %3420 = vmatpush1.msra.mxu0 0.0
    %3421 = vmatprep.subr.mxu0 0.0
    %3422 = vmatpush1.msra.mxu0 0.0
    %3423 = vmatprep.subr.mxu0 0.0
    %3424 = vmatpush1.msra.mxu0 0.0
    %3425 = vmatprep.subr.mxu0 0.0
    %3426 = vmatpush1.msra.mxu0 0.0
    %3427 = vmatprep.mubr.f32.mxu0 0.0
    %3428 = vmatmul.mubr.f32.gmra.mrb[0].mxu0 %v3196
    %v3429 = vpop.f32.mrb[0].mxu0
    %v3430 = vadd.f32 0.0, %v3429
    %v3431 = vpop.f32.mrb[0].mxu0
    %3432 = vdwg.mxu0
    %v3434 = vrot.slane %v3430, 6
    %v3436 = vadd.f32 %v3086, %v3434
    %v3437 = vxor.u32 %v3436, 2147483648
    %v3438 = vmul.f32 %v3437, 1.442695
    %v3439 = vpow.pop %v3438
    %v3440 = vadd.f32 %v3439, 1.0
    %v3441 = vrcp.pop %v3440
    %v3442 = vmul.f32 1.0, %v3441
    %v3443 = vtanh.pop %v3436
    %v3445 = vrot.slane %v3180, 6
    %v3447 = vmul.f32 %v3442, %v3445
    %3449 = vrot.lane.b32.xlu0 %v3443, 64
    %v3450 = vpop.permute.xlu0 %3449
    %v3452 = vmul.f32 %v3442, %v3450
    %3454 = vrot.lane.b32.xlu0 %v3452, 32
    %v3455 = vpop.permute.xlu0 %3454
    %v3457 = vadd.f32 %v3447, %v3455
    %v3458 = vtanh.pop %v3457
    %3460 = vrot.lane.b32.xlu0 %v3458, 64
    %v3461 = vpop.permute.xlu0 %3460
    %v3463 = vmul.f32 %v3442, %v3461
    %v3465 = vrot.slane %v3463, 2
    %3466 = vrot.lane.b32.xlu0 %v3465, 32
    %v3467 = vpop.permute.xlu0 %3466
    %v3468 = vsel %vm971, %v3467, 0
    %3470 = vmatprep.subr.mxu0 0.0
    %3471 = vmatpush1.msra.mxu0 %v3004
    %3472 = vmatprep.subr.mxu0 0.0
    %3473 = vmatpush1.msra.mxu0 %v3005
    %3474 = vmatprep.subr.mxu0 0.0
    %3475 = vmatpush1.msra.mxu0 %v3006
    %3476 = vmatprep.subr.mxu0 0.0
    %3477 = vmatpush1.msra.mxu0 %v3007
    %3478 = vmatprep.subr.mxu0 0.0
    %3479 = vmatpush1.msra.mxu0 0.0
    %3480 = vmatprep.subr.mxu0 0.0
    %3481 = vmatpush1.msra.mxu0 0.0
    %3482 = vmatprep.subr.mxu0 0.0
    %3483 = vmatpush1.msra.mxu0 0.0
    %3484 = vmatprep.subr.mxu0 0.0
    %3485 = vmatpush1.msra.mxu0 0.0
    %3486 = vmatprep.subr.mxu0 0.0
    %3487 = vmatpush1.msra.mxu0 0.0
    %3488 = vmatprep.subr.mxu0 0.0
    %3489 = vmatpush1.msra.mxu0 0.0
    %3490 = vmatprep.subr.mxu0 0.0
    %3491 = vmatpush1.msra.mxu0 0.0
    %3492 = vmatprep.subr.mxu0 0.0
    %3493 = vmatpush1.msra.mxu0 0.0
    %3494 = vmatprep.subr.mxu0 0.0
    %3495 = vmatpush1.msra.mxu0 0.0
    %3496 = vmatprep.subr.mxu0 0.0
    %3497 = vmatpush1.msra.mxu0 0.0
    %3498 = vmatprep.subr.mxu0 0.0
    %3499 = vmatpush1.msra.mxu0 0.0
    %3500 = vmatprep.subr.mxu0 0.0
    %3501 = vmatpush1.msra.mxu0 0.0
    %3502 = vmatprep.subr.mxu0 0.0
    %3503 = vmatpush1.msra.mxu0 0.0
    %3504 = vmatprep.subr.mxu0 0.0
    %3505 = vmatpush1.msra.mxu0 0.0
    %3506 = vmatprep.subr.mxu0 0.0
    %3507 = vmatpush1.msra.mxu0 0.0
    %3508 = vmatprep.subr.mxu0 0.0
    %3509 = vmatpush1.msra.mxu0 0.0
    %3510 = vmatprep.subr.mxu0 0.0
    %3511 = vmatpush1.msra.mxu0 0.0
    %3512 = vmatprep.subr.mxu0 0.0
    %3513 = vmatpush1.msra.mxu0 0.0
    %3514 = vmatprep.subr.mxu0 0.0
    %3515 = vmatpush1.msra.mxu0 0.0
    %3516 = vmatprep.subr.mxu0 0.0
    %3517 = vmatpush1.msra.mxu0 0.0
    %3518 = vmatprep.subr.mxu0 0.0
    %3519 = vmatpush1.msra.mxu0 0.0
    %3520 = vmatprep.subr.mxu0 0.0
    %3521 = vmatpush1.msra.mxu0 0.0
    %3522 = vmatprep.subr.mxu0 0.0
    %3523 = vmatpush1.msra.mxu0 0.0
    %3524 = vmatprep.subr.mxu0 0.0
    %3525 = vmatpush1.msra.mxu0 0.0
    %3526 = vmatprep.subr.mxu0 0.0
    %3527 = vmatpush1.msra.mxu0 0.0
    %3528 = vmatprep.subr.mxu0 0.0
    %3529 = vmatpush1.msra.mxu0 0.0
    %3530 = vmatprep.subr.mxu0 0.0
    %3531 = vmatpush1.msra.mxu0 0.0
    %3532 = vmatprep.subr.mxu0 0.0
    %3533 = vmatpush1.msra.mxu0 0.0
    %3534 = vmatprep.mubr.f32.mxu0 0.0
    %3535 = vmatmul.mubr.f32.gmra.mrb[0].mxu0 %v3468
    %v3536 = vpop.f32.mrb[0].mxu0
    %v3537 = vadd.f32 %v3191, %v3536
    %v3538 = vpop.f32.mrb[0].mxu0
    %3539 = vdwg.mxu0
    %3541 = vrot.lane.b32.xlu0 %v3362, 32
    %v3542 = vpop.permute.xlu0 %3541
    %v3543 = vsel %vm971, %v3542, 0
    %3545 = vmatprep.subr.mxu0 0.0
    %3546 = vmatpush1.msra.mxu0 %v3008
    %3547 = vmatprep.subr.mxu0 0.0
    %3548 = vmatpush1.msra.mxu0 %v3009
    %3549 = vmatprep.subr.mxu0 0.0
    %3550 = vmatpush1.msra.mxu0 %v3010
    %3551 = vmatprep.subr.mxu0 0.0
    %3552 = vmatpush1.msra.mxu0 %v3011
    %3553 = vmatprep.subr.mxu0 0.0
    %3554 = vmatpush1.msra.mxu0 0.0
    %3555 = vmatprep.subr.mxu0 0.0
    %3556 = vmatpush1.msra.mxu0 0.0
    %3557 = vmatprep.subr.mxu0 0.0
    %3558 = vmatpush1.msra.mxu0 0.0
    %3559 = vmatprep.subr.mxu0 0.0
    %3560 = vmatpush1.msra.mxu0 0.0
    %3561 = vmatprep.subr.mxu0 0.0
    %3562 = vmatpush1.msra.mxu0 0.0
    %3563 = vmatprep.subr.mxu0 0.0
    %3564 = vmatpush1.msra.mxu0 0.0
    %3565 = vmatprep.subr.mxu0 0.0
    %3566 = vmatpush1.msra.mxu0 0.0
    %3567 = vmatprep.subr.mxu0 0.0
    %3568 = vmatpush1.msra.mxu0 0.0
    %3569 = vmatprep.subr.mxu0 0.0
    %3570 = vmatpush1.msra.mxu0 0.0
    %3571 = vmatprep.subr.mxu0 0.0
    %3572 = vmatpush1.msra.mxu0 0.0
    %3573 = vmatprep.subr.mxu0 0.0
    %3574 = vmatpush1.msra.mxu0 0.0
    %3575 = vmatprep.subr.mxu0 0.0
    %3576 = vmatpush1.msra.mxu0 0.0
    %3577 = vmatprep.subr.mxu0 0.0
    %3578 = vmatpush1.msra.mxu0 0.0
    %3579 = vmatprep.subr.mxu0 0.0
    %3580 = vmatpush1.msra.mxu0 0.0
    %3581 = vmatprep.subr.mxu0 0.0
    %3582 = vmatpush1.msra.mxu0 0.0
    %3583 = vmatprep.subr.mxu0 0.0
    %3584 = vmatpush1.msra.mxu0 0.0
    %3585 = vmatprep.subr.mxu0 0.0
    %3586 = vmatpush1.msra.mxu0 0.0
    %3587 = vmatprep.subr.mxu0 0.0
    %3588 = vmatpush1.msra.mxu0 0.0
    %3589 = vmatprep.subr.mxu0 0.0
    %3590 = vmatpush1.msra.mxu0 0.0
    %3591 = vmatprep.subr.mxu0 0.0
    %3592 = vmatpush1.msra.mxu0 0.0
    %3593 = vmatprep.subr.mxu0 0.0
    %3594 = vmatpush1.msra.mxu0 0.0
    %3595 = vmatprep.subr.mxu0 0.0
    %3596 = vmatpush1.msra.mxu0 0.0
    %3597 = vmatprep.subr.mxu0 0.0
    %3598 = vmatpush1.msra.mxu0 0.0
    %3599 = vmatprep.subr.mxu0 0.0
    %3600 = vmatpush1.msra.mxu0 0.0
    %3601 = vmatprep.subr.mxu0 0.0
    %3602 = vmatpush1.msra.mxu0 0.0
    %3603 = vmatprep.subr.mxu0 0.0
    %3604 = vmatpush1.msra.mxu0 0.0
    %3605 = vmatprep.subr.mxu0 0.0
    %3606 = vmatpush1.msra.mxu0 0.0
    %3607 = vmatprep.subr.mxu0 0.0
    %3608 = vmatpush1.msra.mxu0 0.0
    %3609 = vmatprep.mubr.f32.mxu0 0.0
    %3610 = vmatmul.mubr.f32.gmra.mrb[0].mxu0 %v3543
    %v3611 = vpop.f32.mrb[0].mxu0
    %v3612 = vadd.f32 0.0, %v3611
    %v3613 = vpop.f32.mrb[0].mxu0
    %3614 = vdwg.mxu0
    %v3615 = vadd.f32 %v3537, %v3612
    %v3616 = vxor.u32 %v3615, 2147483648
    %v3617 = vmul.f32 %v3616, 1.442695
    %v3618 = vpow.pop %v3617
    %v3619 = vadd.f32 %v3618, 1.0
    %v3620 = vrcp.pop %v3619
    %v3621 = vmul.f32 1.0, %v3620
    %v3622 = vtanh.pop %v3615
    %v3623 = vmul.f32 %v3621, %v3356
    %3625 = vrot.lane.b32.xlu0 %v3622, 64
    %v3626 = vpop.permute.xlu0 %3625
    %v3628 = vmul.f32 %v3621, %v3626
    %3630 = vrot.lane.b32.xlu0 %v3628, 32
    %v3631 = vpop.permute.xlu0 %3630
    %v3633 = vadd.f32 %v3623, %v3631
    %v3634 = vtanh.pop %v3633
    %3636 = vrot.lane.b32.xlu0 %v3634, 64
    %v3637 = vpop.permute.xlu0 %3636
    %v3639 = vmul.f32 %v3621, %v3637
    %3640 = vmatprep.subr.mxu0 0.0
    %3641 = vmatpush1.msra.mxu0 %v2999
    %3642 = vmatprep.subr.mxu0 0.0
    %3643 = vmatpush1.msra.mxu0 %v3000
    %3644 = vmatprep.subr.mxu0 0.0
    %3645 = vmatpush1.msra.mxu0 %v3001
    %3646 = vmatprep.subr.mxu0 0.0
    %3647 = vmatpush1.msra.mxu0 %v3002
    %3648 = vmatprep.subr.mxu0 0.0
    %3649 = vmatpush1.msra.mxu0 0.0
    %3650 = vmatprep.subr.mxu0 0.0
    %3651 = vmatpush1.msra.mxu0 0.0
    %3652 = vmatprep.subr.mxu0 0.0
    %3653 = vmatpush1.msra.mxu0 0.0
    %3654 = vmatprep.subr.mxu0 0.0
    %3655 = vmatpush1.msra.mxu0 0.0
    %3656 = vmatprep.subr.mxu0 0.0
    %3657 = vmatpush1.msra.mxu0 0.0
    %3658 = vmatprep.subr.mxu0 0.0
    %3659 = vmatpush1.msra.mxu0 0.0
    %3660 = vmatprep.subr.mxu0 0.0
    %3661 = vmatpush1.msra.mxu0 0.0
    %3662 = vmatprep.subr.mxu0 0.0
    %3663 = vmatpush1.msra.mxu0 0.0
    %3664 = vmatprep.subr.mxu0 0.0
    %3665 = vmatpush1.msra.mxu0 0.0
    %3666 = vmatprep.subr.mxu0 0.0
    %3667 = vmatpush1.msra.mxu0 0.0
    %3668 = vmatprep.subr.mxu0 0.0
    %3669 = vmatpush1.msra.mxu0 0.0
    %3670 = vmatprep.subr.mxu0 0.0
    %3671 = vmatpush1.msra.mxu0 0.0
    %3672 = vmatprep.subr.mxu0 0.0
    %3673 = vmatpush1.msra.mxu0 0.0
    %3674 = vmatprep.subr.mxu0 0.0
    %3675 = vmatpush1.msra.mxu0 0.0
    %3676 = vmatprep.subr.mxu0 0.0
    %3677 = vmatpush1.msra.mxu0 0.0
    %3678 = vmatprep.subr.mxu0 0.0
    %3679 = vmatpush1.msra.mxu0 0.0
    %3680 = vmatprep.subr.mxu0 0.0
    %3681 = vmatpush1.msra.mxu0 0.0
    %3682 = vmatprep.subr.mxu0 0.0
    %3683 = vmatpush1.msra.mxu0 0.0
    %3684 = vmatprep.subr.mxu0 0.0
    %3685 = vmatpush1.msra.mxu0 0.0
    %3686 = vmatprep.subr.mxu0 0.0
    %3687 = vmatpush1.msra.mxu0 0.0
    %3688 = vmatprep.subr.mxu0 0.0
    %3689 = vmatpush1.msra.mxu0 0.0
    %3690 = vmatprep.subr.mxu0 0.0
    %3691 = vmatpush1.msra.mxu0 0.0
    %3692 = vmatprep.subr.mxu0 0.0
    %3693 = vmatpush1.msra.mxu0 0.0
    %3694 = vmatprep.subr.mxu0 0.0
    %3695 = vmatpush1.msra.mxu0 0.0
    %3696 = vmatprep.subr.mxu0 0.0
    %3697 = vmatpush1.msra.mxu0 0.0
    %3698 = vmatprep.subr.mxu0 0.0
    %3699 = vmatpush1.msra.mxu0 0.0
    %3700 = vmatprep.subr.mxu0 0.0
    %3701 = vmatpush1.msra.mxu0 0.0
    %3702 = vmatprep.subr.mxu0 0.0
    %3703 = vmatpush1.msra.mxu0 0.0
    %3704 = vmatprep.mubr.f32.mxu0 0.0
    %3705 = vmatmul.mubr.f32.gmra.mrb[0].mxu0 %v3468
    %v3706 = vpop.f32.mrb[0].mxu0
    %v3707 = vadd.f32 0.0, %v3706
    %v3708 = vpop.f32.mrb[0].mxu0
    %3709 = vdwg.mxu0
    %v3711 = vrot.slane %v3707, 4
    %v3713 = vadd.f32 %v3086, %v3711
    %v3714 = vxor.u32 %v3713, 2147483648
    %v3715 = vmul.f32 %v3714, 1.442695
    %v3716 = vpow.pop %v3715
    %v3717 = vadd.f32 %v3716, 1.0
    %v3718 = vrcp.pop %v3717
    %v3719 = vmul.f32 1.0, %v3718
    %v3720 = vtanh.pop %v3713
    %v3722 = vrot.slane %v3457, 6
    %v3724 = vmul.f32 %v3719, %v3722
    %3726 = vrot.lane.b32.xlu0 %v3720, 64
    %v3727 = vpop.permute.xlu0 %3726
    %v3729 = vmul.f32 %v3719, %v3727
    %3731 = vrot.lane.b32.xlu0 %v3729, 32
    %v3732 = vpop.permute.xlu0 %3731
    %v3734 = vadd.f32 %v3724, %v3732
    %v3735 = vtanh.pop %v3734
    %3737 = vrot.lane.b32.xlu0 %v3735, 64
    %v3738 = vpop.permute.xlu0 %3737
    %v3740 = vmul.f32 %v3719, %v3738
    %v3742 = vrot.slane %v3740, 4
    %3743 = vrot.lane.b32.xlu0 %v3742, 32
    %v3744 = vpop.permute.xlu0 %3743
    %v3745 = vsel %vm971, %v3744, 0
    %3747 = vmatprep.subr.mxu0 0.0
    %3748 = vmatpush1.msra.mxu0 %v3004
    %3749 = vmatprep.subr.mxu0 0.0
    %3750 = vmatpush1.msra.mxu0 %v3005
    %3751 = vmatprep.subr.mxu0 0.0
    %3752 = vmatpush1.msra.mxu0 %v3006
    %3753 = vmatprep.subr.mxu0 0.0
    %3754 = vmatpush1.msra.mxu0 %v3007
    %3755 = vmatprep.subr.mxu0 0.0
    %3756 = vmatpush1.msra.mxu0 0.0
    %3757 = vmatprep.subr.mxu0 0.0
    %3758 = vmatpush1.msra.mxu0 0.0
    %3759 = vmatprep.subr.mxu0 0.0
    %3760 = vmatpush1.msra.mxu0 0.0
    %3761 = vmatprep.subr.mxu0 0.0
    %3762 = vmatpush1.msra.mxu0 0.0
    %3763 = vmatprep.subr.mxu0 0.0
    %3764 = vmatpush1.msra.mxu0 0.0
    %3765 = vmatprep.subr.mxu0 0.0
    %3766 = vmatpush1.msra.mxu0 0.0
    %3767 = vmatprep.subr.mxu0 0.0
    %3768 = vmatpush1.msra.mxu0 0.0
    %3769 = vmatprep.subr.mxu0 0.0
    %3770 = vmatpush1.msra.mxu0 0.0
    %3771 = vmatprep.subr.mxu0 0.0
    %3772 = vmatpush1.msra.mxu0 0.0
    %3773 = vmatprep.subr.mxu0 0.0
    %3774 = vmatpush1.msra.mxu0 0.0
    %3775 = vmatprep.subr.mxu0 0.0
    %3776 = vmatpush1.msra.mxu0 0.0
    %3777 = vmatprep.subr.mxu0 0.0
    %3778 = vmatpush1.msra.mxu0 0.0
    %3779 = vmatprep.subr.mxu0 0.0
    %3780 = vmatpush1.msra.mxu0 0.0
    %3781 = vmatprep.subr.mxu0 0.0
    %3782 = vmatpush1.msra.mxu0 0.0
    %3783 = vmatprep.subr.mxu0 0.0
    %3784 = vmatpush1.msra.mxu0 0.0
    %3785 = vmatprep.subr.mxu0 0.0
    %3786 = vmatpush1.msra.mxu0 0.0
    %3787 = vmatprep.subr.mxu0 0.0
    %3788 = vmatpush1.msra.mxu0 0.0
    %3789 = vmatprep.subr.mxu0 0.0
    %3790 = vmatpush1.msra.mxu0 0.0
    %3791 = vmatprep.subr.mxu0 0.0
    %3792 = vmatpush1.msra.mxu0 0.0
    %3793 = vmatprep.subr.mxu0 0.0
    %3794 = vmatpush1.msra.mxu0 0.0
    %3795 = vmatprep.subr.mxu0 0.0
    %3796 = vmatpush1.msra.mxu0 0.0
    %3797 = vmatprep.subr.mxu0 0.0
    %3798 = vmatpush1.msra.mxu0 0.0
    %3799 = vmatprep.subr.mxu0 0.0
    %3800 = vmatpush1.msra.mxu0 0.0
    %3801 = vmatprep.subr.mxu0 0.0
    %3802 = vmatpush1.msra.mxu0 0.0
    %3803 = vmatprep.subr.mxu0 0.0
    %3804 = vmatpush1.msra.mxu0 0.0
    %3805 = vmatprep.subr.mxu0 0.0
    %3806 = vmatpush1.msra.mxu0 0.0
    %3807 = vmatprep.subr.mxu0 0.0
    %3808 = vmatpush1.msra.mxu0 0.0
    %3809 = vmatprep.subr.mxu0 0.0
    %3810 = vmatpush1.msra.mxu0 0.0
    %3811 = vmatprep.mubr.f32.mxu0 0.0
    %3812 = vmatmul.mubr.f32.gmra.mrb[0].mxu0 %v3745
    %v3813 = vpop.f32.mrb[0].mxu0
    %v3814 = vadd.f32 %v3191, %v3813
    %v3815 = vpop.f32.mrb[0].mxu0
    %3816 = vdwg.mxu0
    %3818 = vrot.lane.b32.xlu0 %v3639, 32
    %v3819 = vpop.permute.xlu0 %3818
    %v3820 = vsel %vm971, %v3819, 0
    %3822 = vmatprep.subr.mxu0 0.0
    %3823 = vmatpush1.msra.mxu0 %v3008
    %3824 = vmatprep.subr.mxu0 0.0
    %3825 = vmatpush1.msra.mxu0 %v3009
    %3826 = vmatprep.subr.mxu0 0.0
    %3827 = vmatpush1.msra.mxu0 %v3010
    %3828 = vmatprep.subr.mxu0 0.0
    %3829 = vmatpush1.msra.mxu0 %v3011
    %3830 = vmatprep.subr.mxu0 0.0
    %3831 = vmatpush1.msra.mxu0 0.0
    %3832 = vmatprep.subr.mxu0 0.0
    %3833 = vmatpush1.msra.mxu0 0.0
    %3834 = vmatprep.subr.mxu0 0.0
    %3835 = vmatpush1.msra.mxu0 0.0
    %3836 = vmatprep.subr.mxu0 0.0
    %3837 = vmatpush1.msra.mxu0 0.0
    %3838 = vmatprep.subr.mxu0 0.0
    %3839 = vmatpush1.msra.mxu0 0.0
    %3840 = vmatprep.subr.mxu0 0.0
    %3841 = vmatpush1.msra.mxu0 0.0
    %3842 = vmatprep.subr.mxu0 0.0
    %3843 = vmatpush1.msra.mxu0 0.0
    %3844 = vmatprep.subr.mxu0 0.0
    %3845 = vmatpush1.msra.mxu0 0.0
    %3846 = vmatprep.subr.mxu0 0.0
    %3847 = vmatpush1.msra.mxu0 0.0
    %3848 = vmatprep.subr.mxu0 0.0
    %3849 = vmatpush1.msra.mxu0 0.0
    %3850 = vmatprep.subr.mxu0 0.0
    %3851 = vmatpush1.msra.mxu0 0.0
    %3852 = vmatprep.subr.mxu0 0.0
    %3853 = vmatpush1.msra.mxu0 0.0
    %3854 = vmatprep.subr.mxu0 0.0
    %3855 = vmatpush1.msra.mxu0 0.0
    %3856 = vmatprep.subr.mxu0 0.0
    %3857 = vmatpush1.msra.mxu0 0.0
    %3858 = vmatprep.subr.mxu0 0.0
    %3859 = vmatpush1.msra.mxu0 0.0
    %3860 = vmatprep.subr.mxu0 0.0
    %3861 = vmatpush1.msra.mxu0 0.0
    %3862 = vmatprep.subr.mxu0 0.0
    %3863 = vmatpush1.msra.mxu0 0.0
    %3864 = vmatprep.subr.mxu0 0.0
    %3865 = vmatpush1.msra.mxu0 0.0
    %3866 = vmatprep.subr.mxu0 0.0
    %3867 = vmatpush1.msra.mxu0 0.0
    %3868 = vmatprep.subr.mxu0 0.0
    %3869 = vmatpush1.msra.mxu0 0.0
    %3870 = vmatprep.subr.mxu0 0.0
    %3871 = vmatpush1.msra.mxu0 0.0
    %3872 = vmatprep.subr.mxu0 0.0
    %3873 = vmatpush1.msra.mxu0 0.0
    %3874 = vmatprep.subr.mxu0 0.0
    %3875 = vmatpush1.msra.mxu0 0.0
    %3876 = vmatprep.subr.mxu0 0.0
    %3877 = vmatpush1.msra.mxu0 0.0
    %3878 = vmatprep.subr.mxu0 0.0
    %3879 = vmatpush1.msra.mxu0 0.0
    %3880 = vmatprep.subr.mxu0 0.0
    %3881 = vmatpush1.msra.mxu0 0.0
    %3882 = vmatprep.subr.mxu0 0.0
    %3883 = vmatpush1.msra.mxu0 0.0
    %3884 = vmatprep.subr.mxu0 0.0
    %3885 = vmatpush1.msra.mxu0 0.0
    %3886 = vmatprep.mubr.f32.mxu0 0.0
    %3887 = vmatmul.mubr.f32.gmra.mrb[0].mxu0 %v3820
    %v3888 = vpop.f32.mrb[0].mxu0
    %v3889 = vadd.f32 0.0, %v3888
    %v3890 = vpop.f32.mrb[0].mxu0
    %3891 = vdwg.mxu0
    %v3892 = vadd.f32 %v3814, %v3889
    %v3893 = vxor.u32 %v3892, 2147483648
    %v3894 = vmul.f32 %v3893, 1.442695
    %v3895 = vpow.pop %v3894
    %v3896 = vadd.f32 %v3895, 1.0
    %v3897 = vrcp.pop %v3896
    %v3898 = vmul.f32 1.0, %v3897
    %v3899 = vtanh.pop %v3892
    %v3900 = vmul.f32 %v3898, %v3633
    %3902 = vrot.lane.b32.xlu0 %v3899, 64
    %v3903 = vpop.permute.xlu0 %3902
    %v3905 = vmul.f32 %v3898, %v3903
    %3907 = vrot.lane.b32.xlu0 %v3905, 32
    %v3908 = vpop.permute.xlu0 %3907
    %v3910 = vadd.f32 %v3900, %v3908
    %v3911 = vtanh.pop %v3910
    %3913 = vrot.lane.b32.xlu0 %v3911, 64
    %v3914 = vpop.permute.xlu0 %3913
    %v3916 = vmul.f32 %v3898, %v3914
    %3917 = vmatprep.subr.mxu0 0.0
    %3918 = vmatpush1.msra.mxu0 %v2999
    %3919 = vmatprep.subr.mxu0 0.0
    %3920 = vmatpush1.msra.mxu0 %v3000
    %3921 = vmatprep.subr.mxu0 0.0
    %3922 = vmatpush1.msra.mxu0 %v3001
    %3923 = vmatprep.subr.mxu0 0.0
    %3924 = vmatpush1.msra.mxu0 %v3002
    %3925 = vmatprep.subr.mxu0 0.0
    %3926 = vmatpush1.msra.mxu0 0.0
    %3927 = vmatprep.subr.mxu0 0.0
    %3928 = vmatpush1.msra.mxu0 0.0
    %3929 = vmatprep.subr.mxu0 0.0
    %3930 = vmatpush1.msra.mxu0 0.0
    %3931 = vmatprep.subr.mxu0 0.0
    %3932 = vmatpush1.msra.mxu0 0.0
    %3933 = vmatprep.subr.mxu0 0.0
    %3934 = vmatpush1.msra.mxu0 0.0
    %3935 = vmatprep.subr.mxu0 0.0
    %3936 = vmatpush1.msra.mxu0 0.0
    %3937 = vmatprep.subr.mxu0 0.0
    %3938 = vmatpush1.msra.mxu0 0.0
    %3939 = vmatprep.subr.mxu0 0.0
    %3940 = vmatpush1.msra.mxu0 0.0
    %3941 = vmatprep.subr.mxu0 0.0
    %3942 = vmatpush1.msra.mxu0 0.0
    %3943 = vmatprep.subr.mxu0 0.0
    %3944 = vmatpush1.msra.mxu0 0.0
    %3945 = vmatprep.subr.mxu0 0.0
    %3946 = vmatpush1.msra.mxu0 0.0
    %3947 = vmatprep.subr.mxu0 0.0
    %3948 = vmatpush1.msra.mxu0 0.0
    %3949 = vmatprep.subr.mxu0 0.0
    %3950 = vmatpush1.msra.mxu0 0.0
    %3951 = vmatprep.subr.mxu0 0.0
    %3952 = vmatpush1.msra.mxu0 0.0
    %3953 = vmatprep.subr.mxu0 0.0
    %3954 = vmatpush1.msra.mxu0 0.0
    %3955 = vmatprep.subr.mxu0 0.0
    %3956 = vmatpush1.msra.mxu0 0.0
    %3957 = vmatprep.subr.mxu0 0.0
    %3958 = vmatpush1.msra.mxu0 0.0
    %3959 = vmatprep.subr.mxu0 0.0
    %3960 = vmatpush1.msra.mxu0 0.0
    %3961 = vmatprep.subr.mxu0 0.0
    %3962 = vmatpush1.msra.mxu0 0.0
    %3963 = vmatprep.subr.mxu0 0.0
    %3964 = vmatpush1.msra.mxu0 0.0
    %3965 = vmatprep.subr.mxu0 0.0
    %3966 = vmatpush1.msra.mxu0 0.0
    %3967 = vmatprep.subr.mxu0 0.0
    %3968 = vmatpush1.msra.mxu0 0.0
    %3969 = vmatprep.subr.mxu0 0.0
    %3970 = vmatpush1.msra.mxu0 0.0
    %3971 = vmatprep.subr.mxu0 0.0
    %3972 = vmatpush1.msra.mxu0 0.0
    %3973 = vmatprep.subr.mxu0 0.0
    %3974 = vmatpush1.msra.mxu0 0.0
    %3975 = vmatprep.subr.mxu0 0.0
    %3976 = vmatpush1.msra.mxu0 0.0
    %3977 = vmatprep.subr.mxu0 0.0
    %3978 = vmatpush1.msra.mxu0 0.0
    %3979 = vmatprep.subr.mxu0 0.0
    %3980 = vmatpush1.msra.mxu0 0.0
    %3981 = vmatprep.mubr.f32.mxu0 0.0
    %3982 = vmatmul.mubr.f32.gmra.mrb[0].mxu0 %v3745
    %v3983 = vpop.f32.mrb[0].mxu0
    %v3984 = vadd.f32 0.0, %v3983
    %v3985 = vpop.f32.mrb[0].mxu0
    %3986 = vdwg.mxu0
    %v3988 = vrot.slane %v3984, 2
    %v3990 = vadd.f32 %v3086, %v3988
    %v3991 = vxor.u32 %v3990, 2147483648
    %v3992 = vmul.f32 %v3991, 1.442695
    %v3993 = vpow.pop %v3992
    %v3994 = vadd.f32 %v3993, 1.0
    %v3995 = vrcp.pop %v3994
    %v3996 = vmul.f32 1.0, %v3995
    %v3997 = vtanh.pop %v3990
    %v3999 = vrot.slane %v3734, 6
    %v4001 = vmul.f32 %v3996, %v3999
    %4003 = vrot.lane.b32.xlu0 %v3997, 64
    %v4004 = vpop.permute.xlu0 %4003
    %v4006 = vmul.f32 %v3996, %v4004
    %4008 = vrot.lane.b32.xlu0 %v4006, 32
    %v4009 = vpop.permute.xlu0 %4008
    %v4011 = vadd.f32 %v4001, %v4009
    %v4012 = vtanh.pop %v4011
    %4014 = vrot.lane.b32.xlu0 %v4012, 64
    %v4015 = vpop.permute.xlu0 %4014
    %v4017 = vmul.f32 %v3996, %v4015
    %v4019 = vrot.slane %v4017, 6
    %4020 = vrot.lane.b32.xlu0 %v4019, 32
    %v4021 = vpop.permute.xlu0 %4020
    %v4022 = vsel %vm971, %v4021, 0
    %4024 = vmatprep.subr.mxu0 0.0
    %4025 = vmatpush1.msra.mxu0 %v3004
    %4026 = vmatprep.subr.mxu0 0.0
    %4027 = vmatpush1.msra.mxu0 %v3005
    %4028 = vmatprep.subr.mxu0 0.0
    %4029 = vmatpush1.msra.mxu0 %v3006
    %4030 = vmatprep.subr.mxu0 0.0
    %4031 = vmatpush1.msra.mxu0 %v3007
    %4032 = vmatprep.subr.mxu0 0.0
    %4033 = vmatpush1.msra.mxu0 0.0
    %4034 = vmatprep.subr.mxu0 0.0
    %4035 = vmatpush1.msra.mxu0 0.0
    %4036 = vmatprep.subr.mxu0 0.0
    %4037 = vmatpush1.msra.mxu0 0.0
    %4038 = vmatprep.subr.mxu0 0.0
    %4039 = vmatpush1.msra.mxu0 0.0
    %4040 = vmatprep.subr.mxu0 0.0
    %4041 = vmatpush1.msra.mxu0 0.0
    %4042 = vmatprep.subr.mxu0 0.0
    %4043 = vmatpush1.msra.mxu0 0.0
    %4044 = vmatprep.subr.mxu0 0.0
    %4045 = vmatpush1.msra.mxu0 0.0
    %4046 = vmatprep.subr.mxu0 0.0
    %4047 = vmatpush1.msra.mxu0 0.0
    %4048 = vmatprep.subr.mxu0 0.0
    %4049 = vmatpush1.msra.mxu0 0.0
    %4050 = vmatprep.subr.mxu0 0.0
    %4051 = vmatpush1.msra.mxu0 0.0
    %4052 = vmatprep.subr.mxu0 0.0
    %4053 = vmatpush1.msra.mxu0 0.0
    %4054 = vmatprep.subr.mxu0 0.0
    %4055 = vmatpush1.msra.mxu0 0.0
    %4056 = vmatprep.subr.mxu0 0.0
    %4057 = vmatpush1.msra.mxu0 0.0
    %4058 = vmatprep.subr.mxu0 0.0
    %4059 = vmatpush1.msra.mxu0 0.0
    %4060 = vmatprep.subr.mxu0 0.0
    %4061 = vmatpush1.msra.mxu0 0.0
    %4062 = vmatprep.subr.mxu0 0.0
    %4063 = vmatpush1.msra.mxu0 0.0
    %4064 = vmatprep.subr.mxu0 0.0
    %4065 = vmatpush1.msra.mxu0 0.0
    %4066 = vmatprep.subr.mxu0 0.0
    %4067 = vmatpush1.msra.mxu0 0.0
    %4068 = vmatprep.subr.mxu0 0.0
    %4069 = vmatpush1.msra.mxu0 0.0
    %4070 = vmatprep.subr.mxu0 0.0
    %4071 = vmatpush1.msra.mxu0 0.0
    %4072 = vmatprep.subr.mxu0 0.0
    %4073 = vmatpush1.msra.mxu0 0.0
    %4074 = vmatprep.subr.mxu0 0.0
    %4075 = vmatpush1.msra.mxu0 0.0
    %4076 = vmatprep.subr.mxu0 0.0
    %4077 = vmatpush1.msra.mxu0 0.0
    %4078 = vmatprep.subr.mxu0 0.0
    %4079 = vmatpush1.msra.mxu0 0.0
    %4080 = vmatprep.subr.mxu0 0.0
    %4081 = vmatpush1.msra.mxu0 0.0
    %4082 = vmatprep.subr.mxu0 0.0
    %4083 = vmatpush1.msra.mxu0 0.0
    %4084 = vmatprep.subr.mxu0 0.0
    %4085 = vmatpush1.msra.mxu0 0.0
    %4086 = vmatprep.subr.mxu0 0.0
    %4087 = vmatpush1.msra.mxu0 0.0
    %4088 = vmatprep.mubr.f32.mxu0 0.0
    %4089 = vmatmul.mubr.f32.gmra.mrb[0].mxu0 %v4022
    %v4090 = vpop.f32.mrb[0].mxu0
    %v4091 = vadd.f32 %v3191, %v4090
    %v4092 = vpop.f32.mrb[0].mxu0
    %4093 = vdwg.mxu0
    %4095 = vrot.lane.b32.xlu0 %v3916, 32
    %v4096 = vpop.permute.xlu0 %4095
    %v4097 = vsel %vm971, %v4096, 0
    %4099 = vmatprep.subr.mxu0 0.0
    %4100 = vmatpush1.msra.mxu0 %v3008
    %4101 = vmatprep.subr.mxu0 0.0
    %4102 = vmatpush1.msra.mxu0 %v3009
    %4103 = vmatprep.subr.mxu0 0.0
    %4104 = vmatpush1.msra.mxu0 %v3010
    %4105 = vmatprep.subr.mxu0 0.0
    %4106 = vmatpush1.msra.mxu0 %v3011
    %4107 = vmatprep.subr.mxu0 0.0
    %4108 = vmatpush1.msra.mxu0 0.0
    %4109 = vmatprep.subr.mxu0 0.0
    %4110 = vmatpush1.msra.mxu0 0.0
    %4111 = vmatprep.subr.mxu0 0.0
    %4112 = vmatpush1.msra.mxu0 0.0
    %4113 = vmatprep.subr.mxu0 0.0
    %4114 = vmatpush1.msra.mxu0 0.0
    %4115 = vmatprep.subr.mxu0 0.0
    %4116 = vmatpush1.msra.mxu0 0.0
    %4117 = vmatprep.subr.mxu0 0.0
    %4118 = vmatpush1.msra.mxu0 0.0
    %4119 = vmatprep.subr.mxu0 0.0
    %4120 = vmatpush1.msra.mxu0 0.0
    %4121 = vmatprep.subr.mxu0 0.0
    %4122 = vmatpush1.msra.mxu0 0.0
    %4123 = vmatprep.subr.mxu0 0.0
    %4124 = vmatpush1.msra.mxu0 0.0
    %4125 = vmatprep.subr.mxu0 0.0
    %4126 = vmatpush1.msra.mxu0 0.0
    %4127 = vmatprep.subr.mxu0 0.0
    %4128 = vmatpush1.msra.mxu0 0.0
    %4129 = vmatprep.subr.mxu0 0.0
    %4130 = vmatpush1.msra.mxu0 0.0
    %4131 = vmatprep.subr.mxu0 0.0
    %4132 = vmatpush1.msra.mxu0 0.0
    %4133 = vmatprep.subr.mxu0 0.0
    %4134 = vmatpush1.msra.mxu0 0.0
    %4135 = vmatprep.subr.mxu0 0.0
    %4136 = vmatpush1.msra.mxu0 0.0
    %4137 = vmatprep.subr.mxu0 0.0
    %4138 = vmatpush1.msra.mxu0 0.0
    %4139 = vmatprep.subr.mxu0 0.0
    %4140 = vmatpush1.msra.mxu0 0.0
    %4141 = vmatprep.subr.mxu0 0.0
    %4142 = vmatpush1.msra.mxu0 0.0
    %4143 = vmatprep.subr.mxu0 0.0
    %4144 = vmatpush1.msra.mxu0 0.0
    %4145 = vmatprep.subr.mxu0 0.0
    %4146 = vmatpush1.msra.mxu0 0.0
    %4147 = vmatprep.subr.mxu0 0.0
    %4148 = vmatpush1.msra.mxu0 0.0
    %4149 = vmatprep.subr.mxu0 0.0
    %4150 = vmatpush1.msra.mxu0 0.0
    %4151 = vmatprep.subr.mxu0 0.0
    %4152 = vmatpush1.msra.mxu0 0.0
    %4153 = vmatprep.subr.mxu0 0.0
    %4154 = vmatpush1.msra.mxu0 0.0
    %4155 = vmatprep.subr.mxu0 0.0
    %4156 = vmatpush1.msra.mxu0 0.0
    %4157 = vmatprep.subr.mxu0 0.0
    %4158 = vmatpush1.msra.mxu0 0.0
    %4159 = vmatprep.subr.mxu0 0.0
    %4160 = vmatpush1.msra.mxu0 0.0
    %4161 = vmatprep.subr.mxu0 0.0
    %4162 = vmatpush1.msra.mxu0 0.0
    %4163 = vmatprep.mubr.f32.mxu0 0.0
    %4164 = vmatmul.mubr.f32.gmra.mrb[0].mxu0 %v4097
    %v4165 = vpop.f32.mrb[0].mxu0
    %v4166 = vadd.f32 0.0, %v4165
    %v4167 = vpop.f32.mrb[0].mxu0
    %4168 = vdwg.mxu0
    %v4169 = vadd.f32 %v4091, %v4166
    %v4170 = vxor.u32 %v4169, 2147483648
    %v4171 = vmul.f32 %v4170, 1.442695
    %v4172 = vpow.pop %v4171
    %v4173 = vadd.f32 %v4172, 1.0
    %v4174 = vrcp.pop %v4173
    %v4175 = vmul.f32 1.0, %v4174
    %v4176 = vtanh.pop %v4169
    %v4177 = vmul.f32 %v4175, %v3910
    %4179 = vrot.lane.b32.xlu0 %v4176, 64
    %v4180 = vpop.permute.xlu0 %4179
    %v4182 = vmul.f32 %v4175, %v4180
    %4184 = vrot.lane.b32.xlu0 %v4182, 32
    %v4185 = vpop.permute.xlu0 %4184
    %v4187 = vadd.f32 %v4177, %v4185
    %v4188 = vtanh.pop %v4187
    %4190 = vrot.lane.b32.xlu0 %v4188, 64
    %v4191 = vpop.permute.xlu0 %4190
    %v4193 = vmul.f32 %v4175, %v4191
    %v4194 = vld [vmem:[%s9] sm:$0xff]
    %v4195 = vld [vmem:[%s9 + $0x8] sm:$0xff]
    %v4196 = vld [vmem:[%s9 + $0x10] sm:$0xff]
    %v4197 = vld [vmem:[%s9 + $0x18] sm:$0xff]
    %v4198 = vld [vmem:[%s10] sm:$0x1]
    %v4200 = vlaneseq
    %v4201 = vshrl.u32 %v4200, 7
    %v4202 = vsub.s32 0, %v4201
    %v4203 = vrot.slane %v4198, %v4202
    %4206 = vrot.lane.b32.xlu0 %v4193, 32
    %v4207 = vpop.permute.xlu0 %4206
    %v4208 = vsel %vm971, %v4207, 0
    %4210 = vmatprep.subr.mxu0 0.0
    %4211 = vmatpush1.msra.mxu0 %v4194
    %4212 = vmatprep.subr.mxu0 0.0
    %4213 = vmatpush1.msra.mxu0 %v4195
    %4214 = vmatprep.subr.mxu0 0.0
    %4215 = vmatpush1.msra.mxu0 %v4196
    %4216 = vmatprep.subr.mxu0 0.0
    %4217 = vmatpush1.msra.mxu0 %v4197
    %4218 = vmatprep.subr.mxu0 0.0
    %4219 = vmatpush1.msra.mxu0 0.0
    %4220 = vmatprep.subr.mxu0 0.0
    %4221 = vmatpush1.msra.mxu0 0.0
    %4222 = vmatprep.subr.mxu0 0.0
    %4223 = vmatpush1.msra.mxu0 0.0
    %4224 = vmatprep.subr.mxu0 0.0
    %4225 = vmatpush1.msra.mxu0 0.0
    %4226 = vmatprep.subr.mxu0 0.0
    %4227 = vmatpush1.msra.mxu0 0.0
    %4228 = vmatprep.subr.mxu0 0.0
    %4229 = vmatpush1.msra.mxu0 0.0
    %4230 = vmatprep.subr.mxu0 0.0
    %4231 = vmatpush1.msra.mxu0 0.0
    %4232 = vmatprep.subr.mxu0 0.0
    %4233 = vmatpush1.msra.mxu0 0.0
    %4234 = vmatprep.subr.mxu0 0.0
    %4235 = vmatpush1.msra.mxu0 0.0
    %4236 = vmatprep.subr.mxu0 0.0
    %4237 = vmatpush1.msra.mxu0 0.0
    %4238 = vmatprep.subr.mxu0 0.0
    %4239 = vmatpush1.msra.mxu0 0.0
    %4240 = vmatprep.subr.mxu0 0.0
    %4241 = vmatpush1.msra.mxu0 0.0
    %4242 = vmatprep.subr.mxu0 0.0
    %4243 = vmatpush1.msra.mxu0 0.0
    %4244 = vmatprep.subr.mxu0 0.0
    %4245 = vmatpush1.msra.mxu0 0.0
    %4246 = vmatprep.subr.mxu0 0.0
    %4247 = vmatpush1.msra.mxu0 0.0
    %4248 = vmatprep.subr.mxu0 0.0
    %4249 = vmatpush1.msra.mxu0 0.0
    %4250 = vmatprep.subr.mxu0 0.0
    %4251 = vmatpush1.msra.mxu0 0.0
    %4252 = vmatprep.subr.mxu0 0.0
    %4253 = vmatpush1.msra.mxu0 0.0
    %4254 = vmatprep.subr.mxu0 0.0
    %4255 = vmatpush1.msra.mxu0 0.0
    %4256 = vmatprep.subr.mxu0 0.0
    %4257 = vmatpush1.msra.mxu0 0.0
    %4258 = vmatprep.subr.mxu0 0.0
    %4259 = vmatpush1.msra.mxu0 0.0
    %4260 = vmatprep.subr.mxu0 0.0
    %4261 = vmatpush1.msra.mxu0 0.0
    %4262 = vmatprep.subr.mxu0 0.0
    %4263 = vmatpush1.msra.mxu0 0.0
    %4264 = vmatprep.subr.mxu0 0.0
    %4265 = vmatpush1.msra.mxu0 0.0
    %4266 = vmatprep.subr.mxu0 0.0
    %4267 = vmatpush1.msra.mxu0 0.0
    %4268 = vmatprep.subr.mxu0 0.0
    %4269 = vmatpush1.msra.mxu0 0.0
    %4270 = vmatprep.subr.mxu0 0.0
    %4271 = vmatpush1.msra.mxu0 0.0
    %4272 = vmatprep.subr.mxu0 0.0
    %4273 = vmatpush1.msra.mxu0 0.0
    %4274 = vmatprep.mubr.f32.mxu0 0.0
    %4275 = vmatmul.mubr.f32.gmra.mrb[0].mxu0 %v4208
    %v4276 = vpop.f32.mrb[0].mxu0
    %v4277 = vadd.f32 %v4203, %v4276
    %v4278 = vpop.f32.mrb[0].mxu0
    %4279 = vdwg.mxu0
    %v4280 = vmax.f32 %v4277, 0.0
    %v4281 = vld [vmem:[%s11] sm:$0xff]
    %v4282 = vld [vmem:[%s11 + $0x8] sm:$0xff]
    %v4283 = vld [vmem:[%s12] sm:$0x1]
    %v4285 = vlaneseq
    %v4286 = vshrl.u32 %v4285, 7
    %v4287 = vsub.s32 0, %v4286
    %v4288 = vrot.slane %v4283, %v4287
    %vm4290 = vcmask 130048
    %v4292 = vsel %vm4290, %v4280, 0
    %4294 = vmatprep.subr.mxu0 0.0
    %4295 = vmatpush1.msra.mxu0 %v4281
    %4296 = vmatprep.subr.mxu0 0.0
    %4297 = vmatpush1.msra.mxu0 %v4282
    %4298 = vmatprep.subr.mxu0 0.0
    %4299 = vmatpush1.msra.mxu0 0.0
    %4300 = vmatprep.subr.mxu0 0.0
    %4301 = vmatpush1.msra.mxu0 0.0
    %4302 = vmatprep.subr.mxu0 0.0
    %4303 = vmatpush1.msra.mxu0 0.0
    %4304 = vmatprep.subr.mxu0 0.0
    %4305 = vmatpush1.msra.mxu0 0.0
    %4306 = vmatprep.subr.mxu0 0.0
    %4307 = vmatpush1.msra.mxu0 0.0
    %4308 = vmatprep.subr.mxu0 0.0
    %4309 = vmatpush1.msra.mxu0 0.0
    %4310 = vmatprep.subr.mxu0 0.0
    %4311 = vmatpush1.msra.mxu0 0.0
    %4312 = vmatprep.subr.mxu0 0.0
    %4313 = vmatpush1.msra.mxu0 0.0
    %4314 = vmatprep.subr.mxu0 0.0
    %4315 = vmatpush1.msra.mxu0 0.0
    %4316 = vmatprep.subr.mxu0 0.0
    %4317 = vmatpush1.msra.mxu0 0.0
    %4318 = vmatprep.subr.mxu0 0.0
    %4319 = vmatpush1.msra.mxu0 0.0
    %4320 = vmatprep.subr.mxu0 0.0
    %4321 = vmatpush1.msra.mxu0 0.0
    %4322 = vmatprep.subr.mxu0 0.0
    %4323 = vmatpush1.msra.mxu0 0.0
    %4324 = vmatprep.subr.mxu0 0.0
    %4325 = vmatpush1.msra.mxu0 0.0
    %4326 = vmatprep.subr.mxu0 0.0
    %4327 = vmatpush1.msra.mxu0 0.0
    %4328 = vmatprep.subr.mxu0 0.0
    %4329 = vmatpush1.msra.mxu0 0.0
    %4330 = vmatprep.subr.mxu0 0.0
    %4331 = vmatpush1.msra.mxu0 0.0
    %4332 = vmatprep.subr.mxu0 0.0
    %4333 = vmatpush1.msra.mxu0 0.0
    %4334 = vmatprep.subr.mxu0 0.0
    %4335 = vmatpush1.msra.mxu0 0.0
    %4336 = vmatprep.subr.mxu0 0.0
    %4337 = vmatpush1.msra.mxu0 0.0
    %4338 = vmatprep.subr.mxu0 0.0
    %4339 = vmatpush1.msra.mxu0 0.0
    %4340 = vmatprep.subr.mxu0 0.0
    %4341 = vmatpush1.msra.mxu0 0.0
    %4342 = vmatprep.subr.mxu0 0.0
    %4343 = vmatpush1.msra.mxu0 0.0
    %4344 = vmatprep.subr.mxu0 0.0
    %4345 = vmatpush1.msra.mxu0 0.0
    %4346 = vmatprep.subr.mxu0 0.0
    %4347 = vmatpush1.msra.mxu0 0.0
    %4348 = vmatprep.subr.mxu0 0.0
    %4349 = vmatpush1.msra.mxu0 0.0
    %4350 = vmatprep.subr.mxu0 0.0
    %4351 = vmatpush1.msra.mxu0 0.0
    %4352 = vmatprep.subr.mxu0 0.0
    %4353 = vmatpush1.msra.mxu0 0.0
    %4354 = vmatprep.subr.mxu0 0.0
    %4355 = vmatpush1.msra.mxu0 0.0
    %4356 = vmatprep.subr.mxu0 0.0
    %4357 = vmatpush1.msra.mxu0 0.0
    %4358 = vmatprep.mubr.f32.mxu0 0.0
    %4359 = vmatmul.mubr.f32.gmra.mrb[0].mxu0 %v4292
    %v4360 = vpop.f32.mrb[0].mxu0
    %v4361 = vadd.f32 %v4288, %v4360
    %v4362 = vpop.f32.mrb[0].mxu0
    %4363 = vdwg.mxu0
    %v4364 = vmax.f32 %v4361, 0.0
    %v4365 = vld [vmem:[%s13] sm:$0xff]
    %v4366 = vld [vmem:[%s14] sm:$0x1]
    %v4368 = vlaneseq
    %v4369 = vshrl.u32 %v4368, 7
    %v4370 = vsub.s32 0, %v4369
    %v4371 = vrot.slane %v4366, %v4370
    %vm4373 = vcmask 64512
    %v4375 = vsel %vm4373, %v4364, 0
    %4377 = vmatprep.subr.mxu0 0.0
    %4378 = vmatpush1.msra.mxu0 %v4365
    %4379 = vmatprep.subr.mxu0 0.0
    %4380 = vmatpush1.msra.mxu0 0.0
    %4381 = vmatprep.subr.mxu0 0.0
    %4382 = vmatpush1.msra.mxu0 0.0
    %4383 = vmatprep.subr.mxu0 0.0
    %4384 = vmatpush1.msra.mxu0 0.0
    %4385 = vmatprep.subr.mxu0 0.0
    %4386 = vmatpush1.msra.mxu0 0.0
    %4387 = vmatprep.subr.mxu0 0.0
    %4388 = vmatpush1.msra.mxu0 0.0
    %4389 = vmatprep.subr.mxu0 0.0
    %4390 = vmatpush1.msra.mxu0 0.0
    %4391 = vmatprep.subr.mxu0 0.0
    %4392 = vmatpush1.msra.mxu0 0.0
    %4393 = vmatprep.subr.mxu0 0.0
    %4394 = vmatpush1.msra.mxu0 0.0
    %4395 = vmatprep.subr.mxu0 0.0
    %4396 = vmatpush1.msra.mxu0 0.0
    %4397 = vmatprep.subr.mxu0 0.0
    %4398 = vmatpush1.msra.mxu0 0.0
    %4399 = vmatprep.subr.mxu0 0.0
    %4400 = vmatpush1.msra.mxu0 0.0
    %4401 = vmatprep.subr.mxu0 0.0
    %4402 = vmatpush1.msra.mxu0 0.0
    %4403 = vmatprep.subr.mxu0 0.0
    %4404 = vmatpush1.msra.mxu0 0.0
    %4405 = vmatprep.subr.mxu0 0.0
    %4406 = vmatpush1.msra.mxu0 0.0
    %4407 = vmatprep.subr.mxu0 0.0
    %4408 = vmatpush1.msra.mxu0 0.0
    %4409 = vmatprep.subr.mxu0 0.0
    %4410 = vmatpush1.msra.mxu0 0.0
    %4411 = vmatprep.subr.mxu0 0.0
    %4412 = vmatpush1.msra.mxu0 0.0
    %4413 = vmatprep.subr.mxu0 0.0
    %4414 = vmatpush1.msra.mxu0 0.0
    %4415 = vmatprep.subr.mxu0 0.0
    %4416 = vmatpush1.msra.mxu0 0.0
    %4417 = vmatprep.subr.mxu0 0.0
    %4418 = vmatpush1.msra.mxu0 0.0
    %4419 = vmatprep.subr.mxu0 0.0
    %4420 = vmatpush1.msra.mxu0 0.0
    %4421 = vmatprep.subr.mxu0 0.0
    %4422 = vmatpush1.msra.mxu0 0.0
    %4423 = vmatprep.subr.mxu0 0.0
    %4424 = vmatpush1.msra.mxu0 0.0
    %4425 = vmatprep.subr.mxu0 0.0
    %4426 = vmatpush1.msra.mxu0 0.0
    %4427 = vmatprep.subr.mxu0 0.0
    %4428 = vmatpush1.msra.mxu0 0.0
    %4429 = vmatprep.subr.mxu0 0.0
    %4430 = vmatpush1.msra.mxu0 0.0
    %4431 = vmatprep.subr.mxu0 0.0
    %4432 = vmatpush1.msra.mxu0 0.0
    %4433 = vmatprep.subr.mxu0 0.0
    %4434 = vmatpush1.msra.mxu0 0.0
    %4435 = vmatprep.subr.mxu0 0.0
    %4436 = vmatpush1.msra.mxu0 0.0
    %4437 = vmatprep.subr.mxu0 0.0
    %4438 = vmatpush1.msra.mxu0 0.0
    %4439 = vmatprep.subr.mxu0 0.0
    %4440 = vmatpush1.msra.mxu0 0.0
    %4441 = vmatprep.mubr.f32.mxu0 0.0
    %4442 = vmatmul.mubr.f32.gmra.mrb[0].mxu0 %v4375
    %v4443 = vpop.f32.mrb[0].mxu0
    %v4444 = vadd.f32 %v4371, %v4443
    %v4445 = vpop.f32.mrb[0].mxu0
    %4446 = vdwg.mxu0
    %vm4447 = vcmask 50176
    %4448 = vst.msk [vmem:[#allocation3] sm:$0x3] %vm4447, %v4444
    // Predicated region
    $region62: #{visual_odometry_forward.1} parent=1 // pred_check
      _
    $region63: #{visual_odometry_forward.1} parent=1 // pred_check_branch
      %4450 = sbr.rel (0) target = $region65
    $region64: #{visual_odometry_forward.1} parent=1 // pred_region
      %s4452 = ssub.s32 32, 32
      %4453 = vsyncadd [#allocation4], %s4452
      %s4455 = sshll.u32 [#allocation3], 4
      %s4456 = int_to_ptr.vmem [resolvable:$true] %s4455
      %4458 = dma.vmem_to_hbm [thread:$0]  %s4456, 32, %s15, [#allocation4]
    $region65: #{visual_odometry_forward.1} parent=1 // pred_fallthru
      _
    // Predicated region
    $region66: #{visual_odometry_forward.1} parent=1 // pred_check
      _
    $region67: #{visual_odometry_forward.1} parent=1 // pred_check_branch
      %4460 = sbr.rel (0) target = $region69
    $region68: #{visual_odometry_forward.1} parent=1 // pred_region
      %4461 = dma.done [#allocation4], 32
    $region69: #{visual_odometry_forward.1} parent=1 // pred_fallthru
      _
    %4462 = vsyncpa [#allocation4], 1

</llo_original>
